<compile_context>
chip_gen: v7x
topology: tpu7x:2x2x1
jax: 0.10.0
libtpu: 0.0.40
codegen_flags: <defaults>
</compile_context>

<pallas_src>
import functools

import jax
import jax.numpy as jnp
from jax.experimental import pallas as pl
from jax.experimental.pallas import tpu as pltpu


# ----------------------------------------------------------------------------
# Fused kernel: all LSTM layers x all timesteps + final Linear in one call.
# ----------------------------------------------------------------------------
def _fused_lstm_fc_kernel(x_ref, *refs, num_layers, hidden_size, seq_len, batch):
    """refs layout: [w_ih_0, w_hh_0, b_0, ..., w_ih_{L-1}, w_hh_{L-1}, b_{L-1},
                     fc_w, fc_b, out_ref]

    Lane layout: gates are (B, 4H) in PyTorch gate order [i | f | g | o].
    h and c are carried full-width (B, 4H); the useful payload sits in the
    f-gate lane block [H, 2H).  W_hh, inter-layer W_ih and fc_w are zero-padded
    to 4H rows so the non-payload lanes contribute exactly 0 to every matmul.
    The g-gate columns of W_ih / W_hh / bias are pre-scaled by 2 host-side so
    a single sigmoid pass yields both sigmoid(i,f,o) and tanh(g)=2*sig(2g)-1.
    """
    H, B, S, L = hidden_size, batch, seq_len, num_layers
    layer_refs = refs[:3 * L]
    fc_w_ref = refs[3 * L]
    fc_b_ref = refs[3 * L + 1]
    out_ref = refs[3 * L + 2]

    # ---- hoisted constants (computed once, outside all loops) --------------
    lane = jax.lax.broadcasted_iota(jnp.int32, (B, 4 * H), 1)
    g_mask = jnp.logical_and(lane >= 2 * H, lane < 3 * H)
    act_mul = jnp.where(g_mask, 2.0, 1.0).astype(jnp.float32)   # [1|1|2|1]
    act_add = jnp.where(g_mask, -1.0, 0.0).astype(jnp.float32)  # [0|0|-1|0]

    # ---- load every operand once; everything stays VMEM / vreg resident ----
    x_all = x_ref[...]                                   # (B, S, D_in)
    w_ih = [layer_refs[3 * l][...] for l in range(L)]    # (D_in,4H) / (4H,4H)
    w_hh = [layer_refs[3 * l + 1][...] for l in range(L)]  # (4H,4H), rows [H,2H) live
    bias = [layer_refs[3 * l + 2][...] for l in range(L)]  # (1,4H) = b_ih+b_hh (g-scaled)

    h = [jnp.zeros((B, 4 * H), jnp.float32) for _ in range(L)]
    c = [jnp.zeros((B, 4 * H), jnp.float32) for _ in range(L)]

    def cell(l, gx):
        """One LSTM cell step for layer l, full (B, 4H) lane-dense math."""
        gates = gx + jnp.dot(h[l], w_hh[l], preferred_element_type=jnp.float32)
        # Single EUP pass: g lanes were pre-scaled by 2 host-side, so
        #   i,f,o lanes -> sigmoid(x);  g lanes -> 2*sigmoid(2g)-1 = tanh(g).
        sig = jax.nn.sigmoid(gates)
        act = act_mul * sig + act_add                    # [ i | f | g | o ]
        act_r = pltpu.roll(act, shift=2 * H, axis=1)     # [ g | o | i | f ]
        prod = act * act_r                               # lanes [0,H): i*g
        # c payload (lanes [H,2H)):  f * c_prev + i * g
        c_new = act * c[l] + pltpu.roll(prod, shift=H, axis=1)
        # h payload (lanes [H,2H)):  o * tanh(c)
        h_new = act_r * jnp.tanh(c_new)
        h[l] = h_new
        c[l] = c_new

    # ---- wavefront over (layer, time): layer l handles t = wave - l ---------
    # Inner loop runs layers high->low so layer l reads h[l-1] at time t
    # (layer l-1 only advances to t+1 later in the same wave).  Statically
    # unrolled: S and L are small & static, giving the scheduler full dataflow
    # visibility with no layer barrier.
    for wave in range(S + L - 1):
        for l in reversed(range(L)):
            t = wave - l
            if not (0 <= t < S):
                continue
            if l == 0:
                # batch_first x indexed per timestep inside the kernel.
                gx = jnp.dot(x_all[:, t, :], w_ih[0],
                             preferred_element_type=jnp.float32) + bias[0]
            else:
                # Per-timestep inter-layer projection (padded W_ih reads only
                # lanes [H, 2H) of the full-width h carrier).
                gx = jnp.dot(h[l - 1], w_ih[l],
                             preferred_element_type=jnp.float32) + bias[l]
            cell(l, gx)

    # Final Linear on last timestep of top layer (dropout = identity in eval).
    out_ref[...] = (
        jnp.dot(h[L - 1], fc_w_ref[...], preferred_element_type=jnp.float32)
        + fc_b_ref[...]
    )


# ----------------------------------------------------------------------------
# Model wrapper.
# ----------------------------------------------------------------------------
@jax.jit
def lstm_model_forward(kernel_params, x_bsd):
    """x_bsd: (B, S, input_size) batch_first, as in the PyTorch module."""
    B, S, D = x_bsd.shape
    layers = kernel_params["layers"]
    num_layers = len(layers)
    H = layers[0]["w_hh"].shape[0] // 4
    O = kernel_params["fc_w"].shape[1]

    args = [x_bsd.astype(jnp.float32)]
    for lp in layers:
        args += [lp["w_ih"], lp["w_hh"], lp["bias"]]
    args += [kernel_params["fc_w"], kernel_params["fc_b"]]

    # Grid-less whole-array-VMEM design: guard the resident footprint so a
    # larger S*B*H configuration fails loudly instead of OOM-ing v7x VMEM.
    footprint_bytes = sum(a.size * 4 for a in args) + B * O * 4
    assert footprint_bytes < 8 * 1024 * 1024, (
        "LSTM kernel operands no longer fit comfortably in VMEM "
        f"({footprint_bytes} bytes); add a grid + BlockSpecs over S or B.")

    kernel = functools.partial(
        _fused_lstm_fc_kernel,
        num_layers=num_layers, hidden_size=H, seq_len=S, batch=B)

    # No grid / no BlockSpecs: every operand is a whole-array VMEM block;
    # single (B, O) store to HBM.
    return pl.pallas_call(
        kernel,
        out_shape=jax.ShapeDtypeStruct((B, O), jnp.float32),
    )(*args)


# ----------------------------------------------------------------------------
# Parameters: PyTorch-layout init + kernel-layout preparation.
# ----------------------------------------------------------------------------
def init_lstm_model_params(key, input_size, hidden_size, num_layers, output_size):
    """Deterministic init mirroring PyTorch's U(-1/sqrt(H), 1/sqrt(H))."""
    params = {"layers": []}
    k = 1.0 / jnp.sqrt(hidden_size)
    for layer in range(num_layers):
        d_in = input_size if layer == 0 else hidden_size
        key, k1, k2, k3, k4 = jax.random.split(key, 5)
        params["layers"].append(dict(
            w_ih=jax.random.uniform(k1, (4 * hidden_size, d_in), jnp.float32, -k, k),
            w_hh=jax.random.uniform(k2, (4 * hidden_size, hidden_size), jnp.float32, -k, k),
            b_ih=jax.random.uniform(k3, (4 * hidden_size,), jnp.float32, -k, k),
            b_hh=jax.random.uniform(k4, (4 * hidden_size,), jnp.float32, -k, k)))
    key, k5, k6 = jax.random.split(key, 3)
    params["fc_w"] = jax.random.uniform(k5, (output_size, hidden_size), jnp.float32, -k, k)
    params["fc_b"] = jax.random.uniform(k6, (output_size,), jnp.float32, -k, k)
    return params


def prepare_kernel_params(params):
    """PyTorch-layout params -> kernel layout (transposed + padded + g-scaled).

    Done once, outside the jit hot path.
      * h/c payload lives in lanes [H, 2H) of the (B, 4H) carriers, so W_hh,
        inter-layer W_ih and fc_w are zero-padded to 4H rows with the live
        rows at [H, 2H).  INVARIANT: the padding rows MUST remain zero — they
        absorb the bounded "garbage" lanes of the full-width h carrier.
      * g-gate columns [2H, 3H) of W_ih / W_hh / bias are pre-scaled by 2 so
        the kernel computes tanh(g) = 2*sigmoid(2g) - 1 with ONE sigmoid pass.
    """
    H = params["layers"][0]["w_hh"].shape[1]
    g_scale = jnp.ones((4 * H,), jnp.float32).at[2 * H:3 * H].set(2.0)
    layers = []
    for i, lp in enumerate(params["layers"]):
        w_ih_t = lp["w_ih"].T.astype(jnp.float32) * g_scale[None, :]   # (D_in, 4H)
        if i > 0:
            w_ih_t = jnp.zeros((4 * H, 4 * H), jnp.float32).at[H:2 * H, :].set(w_ih_t)
        w_hh_t = jnp.zeros((4 * H, 4 * H), jnp.float32).at[H:2 * H, :].set(
            lp["w_hh"].T.astype(jnp.float32) * g_scale[None, :])
        bias = ((lp["b_ih"] + lp["b_hh"]).astype(jnp.float32) * g_scale)[None, :]
        layers.append(dict(w_ih=w_ih_t, w_hh=w_hh_t, bias=bias))
    O = params["fc_w"].shape[0]
    fc_w = jnp.zeros((4 * H, O), jnp.float32).at[H:2 * H, :].set(
        params["fc_w"].T.astype(jnp.float32))
    fc_b = params["fc_b"][None, :].astype(jnp.float32)
    return {"layers": layers, "fc_w": fc_w, "fc_b": fc_b}


# ----------------------------------------------------------------------------
# Pure-JAX reference (uses the raw PyTorch-layout params).
# ----------------------------------------------------------------------------
def lstm_model_reference(params, x_bsd):
    B = x_bsd.shape[0]
    h_seq = jnp.transpose(x_bsd, (1, 0, 2)).astype(jnp.float32)   # (S, B, D)
    for lp in params["layers"]:
        H = lp["w_hh"].shape[1]
        w_ih_t, w_hh_t = lp["w_ih"].T, lp["w_hh"].T
        bias = (lp["b_ih"] + lp["b_hh"])[None, :]
        h = jnp.zeros((B, H), jnp.float32)
        c = jnp.zeros((B, H), jnp.float32)
        outs = []
        for t in range(h_seq.shape[0]):
            gates = h_seq[t] @ w_ih_t + h @ w_hh_t + bias
            i = jax.nn.sigmoid(gates[:, 0 * H:1 * H])
            f = jax.nn.sigmoid(gates[:, 1 * H:2 * H])
            g = jnp.tanh(gates[:, 2 * H:3 * H])
            o = jax.nn.sigmoid(gates[:, 3 * H:4 * H])
            c = f * c + i * g
            h = o * jnp.tanh(c)
            outs.append(h)
        h_seq = jnp.stack(outs, axis=0)
    return h_seq[-1] @ params["fc_w"].T + params["fc_b"][None, :]


if __name__ == "__main__":
    batch, seq, input_size, hidden_size, num_layers, output_size = 2, 8, 8, 32, 2, 1

    key = jax.random.PRNGKey(0)
    key, pkey, xkey = jax.random.split(key, 3)
    params = init_lstm_model_params(pkey, input_size, hidden_size, num_layers,
                                    output_size)
    kernel_params = prepare_kernel_params(params)
    x = jax.random.normal(xkey, (batch, seq, input_size), jnp.float32)

    out = lstm_model_forward(kernel_params, x)
    out = jax.block_until_ready(out)

    ref = lstm_model_reference(params, x)
    assert out.shape == (batch, output_size)
    # Slightly looser than before: tanh(g) is computed as 2*sigmoid(2g)-1.
    assert jnp.allclose(out, ref, atol=1e-4, rtol=1e-4), (out, ref)

    print("KERNEL_OK")
</pallas_src>

<mosaic_0001>
module attributes {stable_mosaic.version = 11 : i64} {
  func.func @_fused_lstm_fc_kernel(%arg0: memref<2x8x8xf32, #tpu.memory_space<vmem>>, %arg1: memref<8x128xf32, #tpu.memory_space<vmem>>, %arg2: memref<128x128xf32, #tpu.memory_space<vmem>>, %arg3: memref<1x128xf32, #tpu.memory_space<vmem>>, %arg4: memref<128x128xf32, #tpu.memory_space<vmem>>, %arg5: memref<128x128xf32, #tpu.memory_space<vmem>>, %arg6: memref<1x128xf32, #tpu.memory_space<vmem>>, %arg7: memref<128x1xf32, #tpu.memory_space<vmem>>, %arg8: memref<1x1xf32, #tpu.memory_space<vmem>>, %arg9: memref<2x1xf32, #tpu.memory_space<vmem>>) attributes {dimension_semantics = [], scalar_prefetch = 0 : i64, scratch_operands = 0 : i64, tpu.core_type = #tpu.core_type<tc>} {
    %0 = tpu.iota {dimensions = array<i32: 1>} : vector<2x128xi32>
    %c64_i32 = arith.constant 64 : i32
    %1 = vector.broadcast %c64_i32 : i32 to vector<2x128xi32>
    %2 = arith.cmpi sge, %0, %1 : vector<2x128xi32>
    %c96_i32 = arith.constant 96 : i32
    %3 = vector.broadcast %c96_i32 : i32 to vector<2x128xi32>
    %4 = arith.cmpi slt, %0, %3 : vector<2x128xi32>
    %5 = arith.andi %2, %4 : vector<2x128xi1>
    %cst = arith.constant 2.000000e+00 : f32
    %cst_0 = arith.constant 1.000000e+00 : f32
    %6 = vector.broadcast %cst : f32 to vector<2x128xf32>
    %7 = vector.broadcast %cst_0 : f32 to vector<2x128xf32>
    %8 = arith.select %5, %6, %7 : vector<2x128xi1>, vector<2x128xf32>
    %cst_1 = arith.constant -1.000000e+00 : f32
    %cst_2 = arith.constant 0.000000e+00 : f32
    %9 = vector.broadcast %cst_1 : f32 to vector<2x128xf32>
    %10 = vector.broadcast %cst_2 : f32 to vector<2x128xf32>
    %11 = arith.select %5, %9, %10 : vector<2x128xi1>, vector<2x128xf32>
    %c0 = arith.constant 0 : index
    %c0_3 = arith.constant 0 : index
    %c0_4 = arith.constant 0 : index
    %12 = vector.load %arg0[%c0, %c0_3, %c0_4] : memref<2x8x8xf32, #tpu.memory_space<vmem>>, vector<2x8x8xf32>
    %c0_5 = arith.constant 0 : index
    %c0_6 = arith.constant 0 : index
    %13 = vector.load %arg1[%c0_5, %c0_6] : memref<8x128xf32, #tpu.memory_space<vmem>>, vector<8x128xf32>
    %c0_7 = arith.constant 0 : index
    %c0_8 = arith.constant 0 : index
    %14 = vector.load %arg4[%c0_7, %c0_8] : memref<128x128xf32, #tpu.memory_space<vmem>>, vector<128x128xf32>
    %c0_9 = arith.constant 0 : index
    %c0_10 = arith.constant 0 : index
    %15 = vector.load %arg2[%c0_9, %c0_10] : memref<128x128xf32, #tpu.memory_space<vmem>>, vector<128x128xf32>
    %c0_11 = arith.constant 0 : index
    %c0_12 = arith.constant 0 : index
    %16 = vector.load %arg5[%c0_11, %c0_12] : memref<128x128xf32, #tpu.memory_space<vmem>>, vector<128x128xf32>
    %c0_13 = arith.constant 0 : index
    %c0_14 = arith.constant 0 : index
    %17 = vector.load %arg3[%c0_13, %c0_14] : memref<1x128xf32, #tpu.memory_space<vmem>>, vector<1x128xf32>
    %c0_15 = arith.constant 0 : index
    %c0_16 = arith.constant 0 : index
    %18 = vector.load %arg6[%c0_15, %c0_16] : memref<1x128xf32, #tpu.memory_space<vmem>>, vector<1x128xf32>
    %cst_17 = arith.constant 0.000000e+00 : f32
    %19 = vector.broadcast %cst_17 : f32 to vector<2x128xf32>
    %cst_18 = arith.constant 0.000000e+00 : f32
    %20 = vector.broadcast %cst_18 : f32 to vector<2x128xf32>
    %cst_19 = arith.constant 0.000000e+00 : f32
    %21 = vector.broadcast %cst_19 : f32 to vector<2x128xf32>
    %cst_20 = arith.constant 0.000000e+00 : f32
    %22 = vector.broadcast %cst_20 : f32 to vector<2x128xf32>
    %23 = vector.extract_strided_slice %12 {offsets = [0, 0, 0], sizes = [2, 1, 8], strides = [1, 1, 1]} : vector<2x8x8xf32> to vector<2x1x8xf32>
    %24 = vector.shape_cast %23 : vector<2x1x8xf32> to vector<2x8xf32>
    %cst_21 = arith.constant dense<0.000000e+00> : vector<2x128xf32>
    %25 = tpu.matmul %24, %13, %cst_21 {dimension_numbers = #tpu.dot_dimension_numbers<[1], [0], [0], [1], [0, 0, 1, 1], [], []>} : vector<2x8xf32>, vector<8x128xf32>, vector<2x128xf32> -> vector<2x128xf32>
    %26 = vector.broadcast %17 : vector<1x128xf32> to vector<2x128xf32>
    %27 = arith.addf %25, %26 : vector<2x128xf32>
    %cst_22 = arith.constant dense<0.000000e+00> : vector<2x128xf32>
    %28 = tpu.matmul %19, %15, %cst_22 {dimension_numbers = #tpu.dot_dimension_numbers<[1], [0], [0], [1], [0, 0, 1, 1], [], []>} : vector<2x128xf32>, vector<128x128xf32>, vector<2x128xf32> -> vector<2x128xf32>
    %29 = arith.addf %27, %28 : vector<2x128xf32>
    %30 = arith.negf %29 : vector<2x128xf32>
    %31 = math.exp %30 : vector<2x128xf32>
    %cst_23 = arith.constant 1.000000e+00 : f32
    %32 = vector.broadcast %cst_23 : f32 to vector<2x128xf32>
    %33 = arith.addf %32, %31 : vector<2x128xf32>
    %34 = arith.divf %32, %33 : vector<2x128xf32>
    %35 = arith.mulf %8, %34 : vector<2x128xf32>
    %36 = arith.addf %35, %11 : vector<2x128xf32>
    %c64_i32_24 = arith.constant 64 : i32
    %37 = tpu.dynamic_rotate %36 by %c64_i32_24 dim 1 : vector<2x128xf32>, i32 -> vector<2x128xf32>
    %38 = arith.mulf %36, %37 : vector<2x128xf32>
    %39 = arith.mulf %36, %21 : vector<2x128xf32>
    %c32_i32 = arith.constant 32 : i32
    %40 = tpu.dynamic_rotate %38 by %c32_i32 dim 1 : vector<2x128xf32>, i32 -> vector<2x128xf32>
    %41 = arith.addf %39, %40 : vector<2x128xf32>
    %42 = math.tanh %41 : vector<2x128xf32>
    %43 = arith.mulf %37, %42 : vector<2x128xf32>
    %cst_25 = arith.constant dense<0.000000e+00> : vector<2x128xf32>
    %44 = tpu.matmul %43, %14, %cst_25 {dimension_numbers = #tpu.dot_dimension_numbers<[1], [0], [0], [1], [0, 0, 1, 1], [], []>} : vector<2x128xf32>, vector<128x128xf32>, vector<2x128xf32> -> vector<2x128xf32>
    %45 = vector.broadcast %18 : vector<1x128xf32> to vector<2x128xf32>
    %46 = arith.addf %44, %45 : vector<2x128xf32>
    %cst_26 = arith.constant dense<0.000000e+00> : vector<2x128xf32>
    %47 = tpu.matmul %20, %16, %cst_26 {dimension_numbers = #tpu.dot_dimension_numbers<[1], [0], [0], [1], [0, 0, 1, 1], [], []>} : vector<2x128xf32>, vector<128x128xf32>, vector<2x128xf32> -> vector<2x128xf32>
    %48 = arith.addf %46, %47 : vector<2x128xf32>
    %49 = arith.negf %48 : vector<2x128xf32>
    %50 = math.exp %49 : vector<2x128xf32>
    %cst_27 = arith.constant 1.000000e+00 : f32
    %51 = vector.broadcast %cst_27 : f32 to vector<2x128xf32>
    %52 = arith.addf %51, %50 : vector<2x128xf32>
    %53 = arith.divf %51, %52 : vector<2x128xf32>
    %54 = arith.mulf %8, %53 : vector<2x128xf32>
    %55 = arith.addf %54, %11 : vector<2x128xf32>
    %c64_i32_28 = arith.constant 64 : i32
    %56 = tpu.dynamic_rotate %55 by %c64_i32_28 dim 1 : vector<2x128xf32>, i32 -> vector<2x128xf32>
    %57 = arith.mulf %55, %56 : vector<2x128xf32>
    %58 = arith.mulf %55, %22 : vector<2x128xf32>
    %c32_i32_29 = arith.constant 32 : i32
    %59 = tpu.dynamic_rotate %57 by %c32_i32_29 dim 1 : vector<2x128xf32>, i32 -> vector<2x128xf32>
    %60 = arith.addf %58, %59 : vector<2x128xf32>
    %61 = math.tanh %60 : vector<2x128xf32>
    %62 = arith.mulf %56, %61 : vector<2x128xf32>
    %63 = vector.extract_strided_slice %12 {offsets = [0, 1, 0], sizes = [2, 1, 8], strides = [1, 1, 1]} : vector<2x8x8xf32> to vector<2x1x8xf32>
    %64 = vector.shape_cast %63 : vector<2x1x8xf32> to vector<2x8xf32>
    %cst_30 = arith.constant dense<0.000000e+00> : vector<2x128xf32>
    %65 = tpu.matmul %64, %13, %cst_30 {dimension_numbers = #tpu.dot_dimension_numbers<[1], [0], [0], [1], [0, 0, 1, 1], [], []>} : vector<2x8xf32>, vector<8x128xf32>, vector<2x128xf32> -> vector<2x128xf32>
    %66 = vector.broadcast %17 : vector<1x128xf32> to vector<2x128xf32>
    %67 = arith.addf %65, %66 : vector<2x128xf32>
    %cst_31 = arith.constant dense<0.000000e+00> : vector<2x128xf32>
    %68 = tpu.matmul %43, %15, %cst_31 {dimension_numbers = #tpu.dot_dimension_numbers<[1], [0], [0], [1], [0, 0, 1, 1], [], []>} : vector<2x128xf32>, vector<128x128xf32>, vector<2x128xf32> -> vector<2x128xf32>
    %69 = arith.addf %67, %68 : vector<2x128xf32>
    %70 = arith.negf %69 : vector<2x128xf32>
    %71 = math.exp %70 : vector<2x128xf32>
    %cst_32 = arith.constant 1.000000e+00 : f32
    %72 = vector.broadcast %cst_32 : f32 to vector<2x128xf32>
    %73 = arith.addf %72, %71 : vector<2x128xf32>
    %74 = arith.divf %72, %73 : vector<2x128xf32>
    %75 = arith.mulf %8, %74 : vector<2x128xf32>
    %76 = arith.addf %75, %11 : vector<2x128xf32>
    %c64_i32_33 = arith.constant 64 : i32
    %77 = tpu.dynamic_rotate %76 by %c64_i32_33 dim 1 : vector<2x128xf32>, i32 -> vector<2x128xf32>
    %78 = arith.mulf %76, %77 : vector<2x128xf32>
    %79 = arith.mulf %76, %41 : vector<2x128xf32>
    %c32_i32_34 = arith.constant 32 : i32
    %80 = tpu.dynamic_rotate %78 by %c32_i32_34 dim 1 : vector<2x128xf32>, i32 -> vector<2x128xf32>
    %81 = arith.addf %79, %80 : vector<2x128xf32>
    %82 = math.tanh %81 : vector<2x128xf32>
    %83 = arith.mulf %77, %82 : vector<2x128xf32>
    %cst_35 = arith.constant dense<0.000000e+00> : vector<2x128xf32>
    %84 = tpu.matmul %83, %14, %cst_35 {dimension_numbers = #tpu.dot_dimension_numbers<[1], [0], [0], [1], [0, 0, 1, 1], [], []>} : vector<2x128xf32>, vector<128x128xf32>, vector<2x128xf32> -> vector<2x128xf32>
    %85 = vector.broadcast %18 : vector<1x128xf32> to vector<2x128xf32>
    %86 = arith.addf %84, %85 : vector<2x128xf32>
    %cst_36 = arith.constant dense<0.000000e+00> : vector<2x128xf32>
    %87 = tpu.matmul %62, %16, %cst_36 {dimension_numbers = #tpu.dot_dimension_numbers<[1], [0], [0], [1], [0, 0, 1, 1], [], []>} : vector<2x128xf32>, vector<128x128xf32>, vector<2x128xf32> -> vector<2x128xf32>
    %88 = arith.addf %86, %87 : vector<2x128xf32>
    %89 = arith.negf %88 : vector<2x128xf32>
    %90 = math.exp %89 : vector<2x128xf32>
    %cst_37 = arith.constant 1.000000e+00 : f32
    %91 = vector.broadcast %cst_37 : f32 to vector<2x128xf32>
    %92 = arith.addf %91, %90 : vector<2x128xf32>
    %93 = arith.divf %91, %92 : vector<2x128xf32>
    %94 = arith.mulf %8, %93 : vector<2x128xf32>
    %95 = arith.addf %94, %11 : vector<2x128xf32>
    %c64_i32_38 = arith.constant 64 : i32
    %96 = tpu.dynamic_rotate %95 by %c64_i32_38 dim 1 : vector<2x128xf32>, i32 -> vector<2x128xf32>
    %97 = arith.mulf %95, %96 : vector<2x128xf32>
    %98 = arith.mulf %95, %60 : vector<2x128xf32>
    %c32_i32_39 = arith.constant 32 : i32
    %99 = tpu.dynamic_rotate %97 by %c32_i32_39 dim 1 : vector<2x128xf32>, i32 -> vector<2x128xf32>
    %100 = arith.addf %98, %99 : vector<2x128xf32>
    %101 = math.tanh %100 : vector<2x128xf32>
    %102 = arith.mulf %96, %101 : vector<2x128xf32>
    %103 = vector.extract_strided_slice %12 {offsets = [0, 2, 0], sizes = [2, 1, 8], strides = [1, 1, 1]} : vector<2x8x8xf32> to vector<2x1x8xf32>
    %104 = vector.shape_cast %103 : vector<2x1x8xf32> to vector<2x8xf32>
    %cst_40 = arith.constant dense<0.000000e+00> : vector<2x128xf32>
    %105 = tpu.matmul %104, %13, %cst_40 {dimension_numbers = #tpu.dot_dimension_numbers<[1], [0], [0], [1], [0, 0, 1, 1], [], []>} : vector<2x8xf32>, vector<8x128xf32>, vector<2x128xf32> -> vector<2x128xf32>
    %106 = vector.broadcast %17 : vector<1x128xf32> to vector<2x128xf32>
    %107 = arith.addf %105, %106 : vector<2x128xf32>
    %cst_41 = arith.constant dense<0.000000e+00> : vector<2x128xf32>
    %108 = tpu.matmul %83, %15, %cst_41 {dimension_numbers = #tpu.dot_dimension_numbers<[1], [0], [0], [1], [0, 0, 1, 1], [], []>} : vector<2x128xf32>, vector<128x128xf32>, vector<2x128xf32> -> vector<2x128xf32>
    %109 = arith.addf %107, %108 : vector<2x128xf32>
    %110 = arith.negf %109 : vector<2x128xf32>
    %111 = math.exp %110 : vector<2x128xf32>
    %cst_42 = arith.constant 1.000000e+00 : f32
    %112 = vector.broadcast %cst_42 : f32 to vector<2x128xf32>
    %113 = arith.addf %112, %111 : vector<2x128xf32>
    %114 = arith.divf %112, %113 : vector<2x128xf32>
    %115 = arith.mulf %8, %114 : vector<2x128xf32>
    %116 = arith.addf %115, %11 : vector<2x128xf32>
    %c64_i32_43 = arith.constant 64 : i32
    %117 = tpu.dynamic_rotate %116 by %c64_i32_43 dim 1 : vector<2x128xf32>, i32 -> vector<2x128xf32>
    %118 = arith.mulf %116, %117 : vector<2x128xf32>
    %119 = arith.mulf %116, %81 : vector<2x128xf32>
    %c32_i32_44 = arith.constant 32 : i32
    %120 = tpu.dynamic_rotate %118 by %c32_i32_44 dim 1 : vector<2x128xf32>, i32 -> vector<2x128xf32>
    %121 = arith.addf %119, %120 : vector<2x128xf32>
    %122 = math.tanh %121 : vector<2x128xf32>
    %123 = arith.mulf %117, %122 : vector<2x128xf32>
    %cst_45 = arith.constant dense<0.000000e+00> : vector<2x128xf32>
    %124 = tpu.matmul %123, %14, %cst_45 {dimension_numbers = #tpu.dot_dimension_numbers<[1], [0], [0], [1], [0, 0, 1, 1], [], []>} : vector<2x128xf32>, vector<128x128xf32>, vector<2x128xf32> -> vector<2x128xf32>
    %125 = vector.broadcast %18 : vector<1x128xf32> to vector<2x128xf32>
    %126 = arith.addf %124, %125 : vector<2x128xf32>
    %cst_46 = arith.constant dense<0.000000e+00> : vector<2x128xf32>
    %127 = tpu.matmul %102, %16, %cst_46 {dimension_numbers = #tpu.dot_dimension_numbers<[1], [0], [0], [1], [0, 0, 1, 1], [], []>} : vector<2x128xf32>, vector<128x128xf32>, vector<2x128xf32> -> vector<2x128xf32>
    %128 = arith.addf %126, %127 : vector<2x128xf32>
    %129 = arith.negf %128 : vector<2x128xf32>
    %130 = math.exp %129 : vector<2x128xf32>
    %cst_47 = arith.constant 1.000000e+00 : f32
    %131 = vector.broadcast %cst_47 : f32 to vector<2x128xf32>
    %132 = arith.addf %131, %130 : vector<2x128xf32>
    %133 = arith.divf %131, %132 : vector<2x128xf32>
    %134 = arith.mulf %8, %133 : vector<2x128xf32>
    %135 = arith.addf %134, %11 : vector<2x128xf32>
    %c64_i32_48 = arith.constant 64 : i32
    %136 = tpu.dynamic_rotate %135 by %c64_i32_48 dim 1 : vector<2x128xf32>, i32 -> vector<2x128xf32>
    %137 = arith.mulf %135, %136 : vector<2x128xf32>
    %138 = arith.mulf %135, %100 : vector<2x128xf32>
    %c32_i32_49 = arith.constant 32 : i32
    %139 = tpu.dynamic_rotate %137 by %c32_i32_49 dim 1 : vector<2x128xf32>, i32 -> vector<2x128xf32>
    %140 = arith.addf %138, %139 : vector<2x128xf32>
    %141 = math.tanh %140 : vector<2x128xf32>
    %142 = arith.mulf %136, %141 : vector<2x128xf32>
    %143 = vector.extract_strided_slice %12 {offsets = [0, 3, 0], sizes = [2, 1, 8], strides = [1, 1, 1]} : vector<2x8x8xf32> to vector<2x1x8xf32>
    %144 = vector.shape_cast %143 : vector<2x1x8xf32> to vector<2x8xf32>
    %cst_50 = arith.constant dense<0.000000e+00> : vector<2x128xf32>
    %145 = tpu.matmul %144, %13, %cst_50 {dimension_numbers = #tpu.dot_dimension_numbers<[1], [0], [0], [1], [0, 0, 1, 1], [], []>} : vector<2x8xf32>, vector<8x128xf32>, vector<2x128xf32> -> vector<2x128xf32>
    %146 = vector.broadcast %17 : vector<1x128xf32> to vector<2x128xf32>
    %147 = arith.addf %145, %146 : vector<2x128xf32>
    %cst_51 = arith.constant dense<0.000000e+00> : vector<2x128xf32>
    %148 = tpu.matmul %123, %15, %cst_51 {dimension_numbers = #tpu.dot_dimension_numbers<[1], [0], [0], [1], [0, 0, 1, 1], [], []>} : vector<2x128xf32>, vector<128x128xf32>, vector<2x128xf32> -> vector<2x128xf32>
    %149 = arith.addf %147, %148 : vector<2x128xf32>
    %150 = arith.negf %149 : vector<2x128xf32>
    %151 = math.exp %150 : vector<2x128xf32>
    %cst_52 = arith.constant 1.000000e+00 : f32
    %152 = vector.broadcast %cst_52 : f32 to vector<2x128xf32>
    %153 = arith.addf %152, %151 : vector<2x128xf32>
    %154 = arith.divf %152, %153 : vector<2x128xf32>
    %155 = arith.mulf %8, %154 : vector<2x128xf32>
    %156 = arith.addf %155, %11 : vector<2x128xf32>
    %c64_i32_53 = arith.constant 64 : i32
    %157 = tpu.dynamic_rotate %156 by %c64_i32_53 dim 1 : vector<2x128xf32>, i32 -> vector<2x128xf32>
    %158 = arith.mulf %156, %157 : vector<2x128xf32>
    %159 = arith.mulf %156, %121 : vector<2x128xf32>
    %c32_i32_54 = arith.constant 32 : i32
    %160 = tpu.dynamic_rotate %158 by %c32_i32_54 dim 1 : vector<2x128xf32>, i32 -> vector<2x128xf32>
    %161 = arith.addf %159, %160 : vector<2x128xf32>
    %162 = math.tanh %161 : vector<2x128xf32>
    %163 = arith.mulf %157, %162 : vector<2x128xf32>
    %cst_55 = arith.constant dense<0.000000e+00> : vector<2x128xf32>
    %164 = tpu.matmul %163, %14, %cst_55 {dimension_numbers = #tpu.dot_dimension_numbers<[1], [0], [0], [1], [0, 0, 1, 1], [], []>} : vector<2x128xf32>, vector<128x128xf32>, vector<2x128xf32> -> vector<2x128xf32>
    %165 = vector.broadcast %18 : vector<1x128xf32> to vector<2x128xf32>
    %166 = arith.addf %164, %165 : vector<2x128xf32>
    %cst_56 = arith.constant dense<0.000000e+00> : vector<2x128xf32>
    %167 = tpu.matmul %142, %16, %cst_56 {dimension_numbers = #tpu.dot_dimension_numbers<[1], [0], [0], [1], [0, 0, 1, 1], [], []>} : vector<2x128xf32>, vector<128x128xf32>, vector<2x128xf32> -> vector<2x128xf32>
    %168 = arith.addf %166, %167 : vector<2x128xf32>
    %169 = arith.negf %168 : vector<2x128xf32>
    %170 = math.exp %169 : vector<2x128xf32>
    %cst_57 = arith.constant 1.000000e+00 : f32
    %171 = vector.broadcast %cst_57 : f32 to vector<2x128xf32>
    %172 = arith.addf %171, %170 : vector<2x128xf32>
    %173 = arith.divf %171, %172 : vector<2x128xf32>
    %174 = arith.mulf %8, %173 : vector<2x128xf32>
    %175 = arith.addf %174, %11 : vector<2x128xf32>
    %c64_i32_58 = arith.constant 64 : i32
    %176 = tpu.dynamic_rotate %175 by %c64_i32_58 dim 1 : vector<2x128xf32>, i32 -> vector<2x128xf32>
    %177 = arith.mulf %175, %176 : vector<2x128xf32>
    %178 = arith.mulf %175, %140 : vector<2x128xf32>
    %c32_i32_59 = arith.constant 32 : i32
    %179 = tpu.dynamic_rotate %177 by %c32_i32_59 dim 1 : vector<2x128xf32>, i32 -> vector<2x128xf32>
    %180 = arith.addf %178, %179 : vector<2x128xf32>
    %181 = math.tanh %180 : vector<2x128xf32>
    %182 = arith.mulf %176, %181 : vector<2x128xf32>
    %183 = vector.extract_strided_slice %12 {offsets = [0, 4, 0], sizes = [2, 1, 8], strides = [1, 1, 1]} : vector<2x8x8xf32> to vector<2x1x8xf32>
    %184 = vector.shape_cast %183 : vector<2x1x8xf32> to vector<2x8xf32>
    %cst_60 = arith.constant dense<0.000000e+00> : vector<2x128xf32>
    %185 = tpu.matmul %184, %13, %cst_60 {dimension_numbers = #tpu.dot_dimension_numbers<[1], [0], [0], [1], [0, 0, 1, 1], [], []>} : vector<2x8xf32>, vector<8x128xf32>, vector<2x128xf32> -> vector<2x128xf32>
    %186 = vector.broadcast %17 : vector<1x128xf32> to vector<2x128xf32>
    %187 = arith.addf %185, %186 : vector<2x128xf32>
    %cst_61 = arith.constant dense<0.000000e+00> : vector<2x128xf32>
    %188 = tpu.matmul %163, %15, %cst_61 {dimension_numbers = #tpu.dot_dimension_numbers<[1], [0], [0], [1], [0, 0, 1, 1], [], []>} : vector<2x128xf32>, vector<128x128xf32>, vector<2x128xf32> -> vector<2x128xf32>
    %189 = arith.addf %187, %188 : vector<2x128xf32>
    %190 = arith.negf %189 : vector<2x128xf32>
    %191 = math.exp %190 : vector<2x128xf32>
    %cst_62 = arith.constant 1.000000e+00 : f32
    %192 = vector.broadcast %cst_62 : f32 to vector<2x128xf32>
    %193 = arith.addf %192, %191 : vector<2x128xf32>
    %194 = arith.divf %192, %193 : vector<2x128xf32>
    %195 = arith.mulf %8, %194 : vector<2x128xf32>
    %196 = arith.addf %195, %11 : vector<2x128xf32>
    %c64_i32_63 = arith.constant 64 : i32
    %197 = tpu.dynamic_rotate %196 by %c64_i32_63 dim 1 : vector<2x128xf32>, i32 -> vector<2x128xf32>
    %198 = arith.mulf %196, %197 : vector<2x128xf32>
    %199 = arith.mulf %196, %161 : vector<2x128xf32>
    %c32_i32_64 = arith.constant 32 : i32
    %200 = tpu.dynamic_rotate %198 by %c32_i32_64 dim 1 : vector<2x128xf32>, i32 -> vector<2x128xf32>
    %201 = arith.addf %199, %200 : vector<2x128xf32>
    %202 = math.tanh %201 : vector<2x128xf32>
    %203 = arith.mulf %197, %202 : vector<2x128xf32>
    %cst_65 = arith.constant dense<0.000000e+00> : vector<2x128xf32>
    %204 = tpu.matmul %203, %14, %cst_65 {dimension_numbers = #tpu.dot_dimension_numbers<[1], [0], [0], [1], [0, 0, 1, 1], [], []>} : vector<2x128xf32>, vector<128x128xf32>, vector<2x128xf32> -> vector<2x128xf32>
    %205 = vector.broadcast %18 : vector<1x128xf32> to vector<2x128xf32>
    %206 = arith.addf %204, %205 : vector<2x128xf32>
    %cst_66 = arith.constant dense<0.000000e+00> : vector<2x128xf32>
    %207 = tpu.matmul %182, %16, %cst_66 {dimension_numbers = #tpu.dot_dimension_numbers<[1], [0], [0], [1], [0, 0, 1, 1], [], []>} : vector<2x128xf32>, vector<128x128xf32>, vector<2x128xf32> -> vector<2x128xf32>
    %208 = arith.addf %206, %207 : vector<2x128xf32>
    %209 = arith.negf %208 : vector<2x128xf32>
    %210 = math.exp %209 : vector<2x128xf32>
    %cst_67 = arith.constant 1.000000e+00 : f32
    %211 = vector.broadcast %cst_67 : f32 to vector<2x128xf32>
    %212 = arith.addf %211, %210 : vector<2x128xf32>
    %213 = arith.divf %211, %212 : vector<2x128xf32>
    %214 = arith.mulf %8, %213 : vector<2x128xf32>
    %215 = arith.addf %214, %11 : vector<2x128xf32>
    %c64_i32_68 = arith.constant 64 : i32
    %216 = tpu.dynamic_rotate %215 by %c64_i32_68 dim 1 : vector<2x128xf32>, i32 -> vector<2x128xf32>
    %217 = arith.mulf %215, %216 : vector<2x128xf32>
    %218 = arith.mulf %215, %180 : vector<2x128xf32>
    %c32_i32_69 = arith.constant 32 : i32
    %219 = tpu.dynamic_rotate %217 by %c32_i32_69 dim 1 : vector<2x128xf32>, i32 -> vector<2x128xf32>
    %220 = arith.addf %218, %219 : vector<2x128xf32>
    %221 = math.tanh %220 : vector<2x128xf32>
    %222 = arith.mulf %216, %221 : vector<2x128xf32>
    %223 = vector.extract_strided_slice %12 {offsets = [0, 5, 0], sizes = [2, 1, 8], strides = [1, 1, 1]} : vector<2x8x8xf32> to vector<2x1x8xf32>
    %224 = vector.shape_cast %223 : vector<2x1x8xf32> to vector<2x8xf32>
    %cst_70 = arith.constant dense<0.000000e+00> : vector<2x128xf32>
    %225 = tpu.matmul %224, %13, %cst_70 {dimension_numbers = #tpu.dot_dimension_numbers<[1], [0], [0], [1], [0, 0, 1, 1], [], []>} : vector<2x8xf32>, vector<8x128xf32>, vector<2x128xf32> -> vector<2x128xf32>
    %226 = vector.broadcast %17 : vector<1x128xf32> to vector<2x128xf32>
    %227 = arith.addf %225, %226 : vector<2x128xf32>
    %cst_71 = arith.constant dense<0.000000e+00> : vector<2x128xf32>
    %228 = tpu.matmul %203, %15, %cst_71 {dimension_numbers = #tpu.dot_dimension_numbers<[1], [0], [0], [1], [0, 0, 1, 1], [], []>} : vector<2x128xf32>, vector<128x128xf32>, vector<2x128xf32> -> vector<2x128xf32>
    %229 = arith.addf %227, %228 : vector<2x128xf32>
    %230 = arith.negf %229 : vector<2x128xf32>
    %231 = math.exp %230 : vector<2x128xf32>
    %cst_72 = arith.constant 1.000000e+00 : f32
    %232 = vector.broadcast %cst_72 : f32 to vector<2x128xf32>
    %233 = arith.addf %232, %231 : vector<2x128xf32>
    %234 = arith.divf %232, %233 : vector<2x128xf32>
    %235 = arith.mulf %8, %234 : vector<2x128xf32>
    %236 = arith.addf %235, %11 : vector<2x128xf32>
    %c64_i32_73 = arith.constant 64 : i32
    %237 = tpu.dynamic_rotate %236 by %c64_i32_73 dim 1 : vector<2x128xf32>, i32 -> vector<2x128xf32>
    %238 = arith.mulf %236, %237 : vector<2x128xf32>
    %239 = arith.mulf %236, %201 : vector<2x128xf32>
    %c32_i32_74 = arith.constant 32 : i32
    %240 = tpu.dynamic_rotate %238 by %c32_i32_74 dim 1 : vector<2x128xf32>, i32 -> vector<2x128xf32>
    %241 = arith.addf %239, %240 : vector<2x128xf32>
    %242 = math.tanh %241 : vector<2x128xf32>
    %243 = arith.mulf %237, %242 : vector<2x128xf32>
    %cst_75 = arith.constant dense<0.000000e+00> : vector<2x128xf32>
    %244 = tpu.matmul %243, %14, %cst_75 {dimension_numbers = #tpu.dot_dimension_numbers<[1], [0], [0], [1], [0, 0, 1, 1], [], []>} : vector<2x128xf32>, vector<128x128xf32>, vector<2x128xf32> -> vector<2x128xf32>
    %245 = vector.broadcast %18 : vector<1x128xf32> to vector<2x128xf32>
    %246 = arith.addf %244, %245 : vector<2x128xf32>
    %cst_76 = arith.constant dense<0.000000e+00> : vector<2x128xf32>
    %247 = tpu.matmul %222, %16, %cst_76 {dimension_numbers = #tpu.dot_dimension_numbers<[1], [0], [0], [1], [0, 0, 1, 1], [], []>} : vector<2x128xf32>, vector<128x128xf32>, vector<2x128xf32> -> vector<2x128xf32>
    %248 = arith.addf %246, %247 : vector<2x128xf32>
    %249 = arith.negf %248 : vector<2x128xf32>
    %250 = math.exp %249 : vector<2x128xf32>
    %cst_77 = arith.constant 1.000000e+00 : f32
    %251 = vector.broadcast %cst_77 : f32 to vector<2x128xf32>
    %252 = arith.addf %251, %250 : vector<2x128xf32>
    %253 = arith.divf %251, %252 : vector<2x128xf32>
    %254 = arith.mulf %8, %253 : vector<2x128xf32>
    %255 = arith.addf %254, %11 : vector<2x128xf32>
    %c64_i32_78 = arith.constant 64 : i32
    %256 = tpu.dynamic_rotate %255 by %c64_i32_78 dim 1 : vector<2x128xf32>, i32 -> vector<2x128xf32>
    %257 = arith.mulf %255, %256 : vector<2x128xf32>
    %258 = arith.mulf %255, %220 : vector<2x128xf32>
    %c32_i32_79 = arith.constant 32 : i32
    %259 = tpu.dynamic_rotate %257 by %c32_i32_79 dim 1 : vector<2x128xf32>, i32 -> vector<2x128xf32>
    %260 = arith.addf %258, %259 : vector<2x128xf32>
    %261 = math.tanh %260 : vector<2x128xf32>
    %262 = arith.mulf %256, %261 : vector<2x128xf32>
    %263 = vector.extract_strided_slice %12 {offsets = [0, 6, 0], sizes = [2, 1, 8], strides = [1, 1, 1]} : vector<2x8x8xf32> to vector<2x1x8xf32>
    %264 = vector.shape_cast %263 : vector<2x1x8xf32> to vector<2x8xf32>
    %cst_80 = arith.constant dense<0.000000e+00> : vector<2x128xf32>
    %265 = tpu.matmul %264, %13, %cst_80 {dimension_numbers = #tpu.dot_dimension_numbers<[1], [0], [0], [1], [0, 0, 1, 1], [], []>} : vector<2x8xf32>, vector<8x128xf32>, vector<2x128xf32> -> vector<2x128xf32>
    %266 = vector.broadcast %17 : vector<1x128xf32> to vector<2x128xf32>
    %267 = arith.addf %265, %266 : vector<2x128xf32>
    %cst_81 = arith.constant dense<0.000000e+00> : vector<2x128xf32>
    %268 = tpu.matmul %243, %15, %cst_81 {dimension_numbers = #tpu.dot_dimension_numbers<[1], [0], [0], [1], [0, 0, 1, 1], [], []>} : vector<2x128xf32>, vector<128x128xf32>, vector<2x128xf32> -> vector<2x128xf32>
    %269 = arith.addf %267, %268 : vector<2x128xf32>
    %270 = arith.negf %269 : vector<2x128xf32>
    %271 = math.exp %270 : vector<2x128xf32>
    %cst_82 = arith.constant 1.000000e+00 : f32
    %272 = vector.broadcast %cst_82 : f32 to vector<2x128xf32>
    %273 = arith.addf %272, %271 : vector<2x128xf32>
    %274 = arith.divf %272, %273 : vector<2x128xf32>
    %275 = arith.mulf %8, %274 : vector<2x128xf32>
    %276 = arith.addf %275, %11 : vector<2x128xf32>
    %c64_i32_83 = arith.constant 64 : i32
    %277 = tpu.dynamic_rotate %276 by %c64_i32_83 dim 1 : vector<2x128xf32>, i32 -> vector<2x128xf32>
    %278 = arith.mulf %276, %277 : vector<2x128xf32>
    %279 = arith.mulf %276, %241 : vector<2x128xf32>
    %c32_i32_84 = arith.constant 32 : i32
    %280 = tpu.dynamic_rotate %278 by %c32_i32_84 dim 1 : vector<2x128xf32>, i32 -> vector<2x128xf32>
    %281 = arith.addf %279, %280 : vector<2x128xf32>
    %282 = math.tanh %281 : vector<2x128xf32>
    %283 = arith.mulf %277, %282 : vector<2x128xf32>
    %cst_85 = arith.constant dense<0.000000e+00> : vector<2x128xf32>
    %284 = tpu.matmul %283, %14, %cst_85 {dimension_numbers = #tpu.dot_dimension_numbers<[1], [0], [0], [1], [0, 0, 1, 1], [], []>} : vector<2x128xf32>, vector<128x128xf32>, vector<2x128xf32> -> vector<2x128xf32>
    %285 = vector.broadcast %18 : vector<1x128xf32> to vector<2x128xf32>
    %286 = arith.addf %284, %285 : vector<2x128xf32>
    %cst_86 = arith.constant dense<0.000000e+00> : vector<2x128xf32>
    %287 = tpu.matmul %262, %16, %cst_86 {dimension_numbers = #tpu.dot_dimension_numbers<[1], [0], [0], [1], [0, 0, 1, 1], [], []>} : vector<2x128xf32>, vector<128x128xf32>, vector<2x128xf32> -> vector<2x128xf32>
    %288 = arith.addf %286, %287 : vector<2x128xf32>
    %289 = arith.negf %288 : vector<2x128xf32>
    %290 = math.exp %289 : vector<2x128xf32>
    %cst_87 = arith.constant 1.000000e+00 : f32
    %291 = vector.broadcast %cst_87 : f32 to vector<2x128xf32>
    %292 = arith.addf %291, %290 : vector<2x128xf32>
    %293 = arith.divf %291, %292 : vector<2x128xf32>
    %294 = arith.mulf %8, %293 : vector<2x128xf32>
    %295 = arith.addf %294, %11 : vector<2x128xf32>
    %c64_i32_88 = arith.constant 64 : i32
    %296 = tpu.dynamic_rotate %295 by %c64_i32_88 dim 1 : vector<2x128xf32>, i32 -> vector<2x128xf32>
    %297 = arith.mulf %295, %296 : vector<2x128xf32>
    %298 = arith.mulf %295, %260 : vector<2x128xf32>
    %c32_i32_89 = arith.constant 32 : i32
    %299 = tpu.dynamic_rotate %297 by %c32_i32_89 dim 1 : vector<2x128xf32>, i32 -> vector<2x128xf32>
    %300 = arith.addf %298, %299 : vector<2x128xf32>
    %301 = math.tanh %300 : vector<2x128xf32>
    %302 = arith.mulf %296, %301 : vector<2x128xf32>
    %303 = vector.extract_strided_slice %12 {offsets = [0, 7, 0], sizes = [2, 1, 8], strides = [1, 1, 1]} : vector<2x8x8xf32> to vector<2x1x8xf32>
    %304 = vector.shape_cast %303 : vector<2x1x8xf32> to vector<2x8xf32>
    %cst_90 = arith.constant dense<0.000000e+00> : vector<2x128xf32>
    %305 = tpu.matmul %304, %13, %cst_90 {dimension_numbers = #tpu.dot_dimension_numbers<[1], [0], [0], [1], [0, 0, 1, 1], [], []>} : vector<2x8xf32>, vector<8x128xf32>, vector<2x128xf32> -> vector<2x128xf32>
    %306 = vector.broadcast %17 : vector<1x128xf32> to vector<2x128xf32>
    %307 = arith.addf %305, %306 : vector<2x128xf32>
    %cst_91 = arith.constant dense<0.000000e+00> : vector<2x128xf32>
    %308 = tpu.matmul %283, %15, %cst_91 {dimension_numbers = #tpu.dot_dimension_numbers<[1], [0], [0], [1], [0, 0, 1, 1], [], []>} : vector<2x128xf32>, vector<128x128xf32>, vector<2x128xf32> -> vector<2x128xf32>
    %309 = arith.addf %307, %308 : vector<2x128xf32>
    %310 = arith.negf %309 : vector<2x128xf32>
    %311 = math.exp %310 : vector<2x128xf32>
    %cst_92 = arith.constant 1.000000e+00 : f32
    %312 = vector.broadcast %cst_92 : f32 to vector<2x128xf32>
    %313 = arith.addf %312, %311 : vector<2x128xf32>
    %314 = arith.divf %312, %313 : vector<2x128xf32>
    %315 = arith.mulf %8, %314 : vector<2x128xf32>
    %316 = arith.addf %315, %11 : vector<2x128xf32>
    %c64_i32_93 = arith.constant 64 : i32
    %317 = tpu.dynamic_rotate %316 by %c64_i32_93 dim 1 : vector<2x128xf32>, i32 -> vector<2x128xf32>
    %318 = arith.mulf %316, %317 : vector<2x128xf32>
    %319 = arith.mulf %316, %281 : vector<2x128xf32>
    %c32_i32_94 = arith.constant 32 : i32
    %320 = tpu.dynamic_rotate %318 by %c32_i32_94 dim 1 : vector<2x128xf32>, i32 -> vector<2x128xf32>
    %321 = arith.addf %319, %320 : vector<2x128xf32>
    %322 = math.tanh %321 : vector<2x128xf32>
    %323 = arith.mulf %317, %322 : vector<2x128xf32>
    %cst_95 = arith.constant dense<0.000000e+00> : vector<2x128xf32>
    %324 = tpu.matmul %323, %14, %cst_95 {dimension_numbers = #tpu.dot_dimension_numbers<[1], [0], [0], [1], [0, 0, 1, 1], [], []>} : vector<2x128xf32>, vector<128x128xf32>, vector<2x128xf32> -> vector<2x128xf32>
    %325 = vector.broadcast %18 : vector<1x128xf32> to vector<2x128xf32>
    %326 = arith.addf %324, %325 : vector<2x128xf32>
    %cst_96 = arith.constant dense<0.000000e+00> : vector<2x128xf32>
    %327 = tpu.matmul %302, %16, %cst_96 {dimension_numbers = #tpu.dot_dimension_numbers<[1], [0], [0], [1], [0, 0, 1, 1], [], []>} : vector<2x128xf32>, vector<128x128xf32>, vector<2x128xf32> -> vector<2x128xf32>
    %328 = arith.addf %326, %327 : vector<2x128xf32>
    %329 = arith.negf %328 : vector<2x128xf32>
    %330 = math.exp %329 : vector<2x128xf32>
    %cst_97 = arith.constant 1.000000e+00 : f32
    %331 = vector.broadcast %cst_97 : f32 to vector<2x128xf32>
    %332 = arith.addf %331, %330 : vector<2x128xf32>
    %333 = arith.divf %331, %332 : vector<2x128xf32>
    %334 = arith.mulf %8, %333 : vector<2x128xf32>
    %335 = arith.addf %334, %11 : vector<2x128xf32>
    %c64_i32_98 = arith.constant 64 : i32
    %336 = tpu.dynamic_rotate %335 by %c64_i32_98 dim 1 : vector<2x128xf32>, i32 -> vector<2x128xf32>
    %337 = arith.mulf %335, %336 : vector<2x128xf32>
    %338 = arith.mulf %335, %300 : vector<2x128xf32>
    %c32_i32_99 = arith.constant 32 : i32
    %339 = tpu.dynamic_rotate %337 by %c32_i32_99 dim 1 : vector<2x128xf32>, i32 -> vector<2x128xf32>
    %340 = arith.addf %338, %339 : vector<2x128xf32>
    %341 = math.tanh %340 : vector<2x128xf32>
    %342 = arith.mulf %336, %341 : vector<2x128xf32>
    %c0_100 = arith.constant 0 : index
    %c0_101 = arith.constant 0 : index
    %343 = vector.load %arg7[%c0_100, %c0_101] : memref<128x1xf32, #tpu.memory_space<vmem>>, vector<128x1xf32>
    %cst_102 = arith.constant dense<0.000000e+00> : vector<2x1xf32>
    %344 = tpu.matmul %342, %343, %cst_102 {dimension_numbers = #tpu.dot_dimension_numbers<[1], [0], [0], [1], [0, 0, 1, 1], [], []>} : vector<2x128xf32>, vector<128x1xf32>, vector<2x1xf32> -> vector<2x1xf32>
    %c0_103 = arith.constant 0 : index
    %c0_104 = arith.constant 0 : index
    %345 = vector.load %arg8[%c0_103, %c0_104] : memref<1x1xf32, #tpu.memory_space<vmem>>, vector<1x1xf32>
    %346 = vector.broadcast %345 : vector<1x1xf32> to vector<2x1xf32>
    %347 = arith.addf %344, %346 : vector<2x1xf32>
    %c0_105 = arith.constant 0 : index
    %c0_106 = arith.constant 0 : index
    %348 = vector.load %arg9[%c0_105, %c0_106] : memref<2x1xf32, #tpu.memory_space<vmem>>, vector<2x1xf32>
    tpu.vector_store %arg9[%c0_105, %c0_106], %347 {strides = array<i32>} : memref<2x1xf32, #tpu.memory_space<vmem>>, vector<2x1xf32>,
    return
  }
}

</mosaic_0001>

<llo_original>
// kernel: lstm_model_forward.1
$region0: #{lstm_model_forward.1}
  #allocation0 [shape = 'u32[]', space=smem, size = 0x4, offset = 0x4, fixed_abs, tag = 'smem constant byte address 0x4 - core index']
  #allocation1 [shape = 'u32[144,128]{1,0:T(1,128)}', space=vmem, size = 0x12000, scoped, tag = 'internal scratch']
  #allocation2 [shape = 'f32[1,1]{1,0:T(1,128)S(1)}', space=vmem, size = 0x200, scoped, tag = 'scoped memory for lstm_model_forward.1']
  %s0 = inlined_call_operand.vmem [shape: f32[2,8,8], index: 0, kind: input, shape index: {}]
  %s1 = inlined_call_operand.hbm [shape: f32[8,128], index: 1, kind: input, shape index: {}]
  %s2 = inlined_call_operand.vmem [shape: f32[128,128], index: 2, kind: input, shape index: {}]
  %s3 = inlined_call_operand.hbm [shape: f32[1,128], index: 3, kind: input, shape index: {}]
  %s4 = inlined_call_operand.hbm [shape: f32[128,128], index: 4, kind: input, shape index: {}]
  %s5 = inlined_call_operand.hbm [shape: f32[128,128], index: 5, kind: input, shape index: {}]
  %s6 = inlined_call_operand.vmem [shape: f32[1,128], index: 6, kind: input, shape index: {}]
  %s7 = inlined_call_operand.vmem [shape: f32[128,1], index: 7, kind: input, shape index: {}]
  %s8 = inlined_call_operand.<no memory space> [shape: f32[1,1], index: 8, kind: input, shape index: {}]
  %s9 = inlined_call_operand.vmem [shape: f32[2,1], index: 9, kind: output, shape index: {}]
  %s10 = sld [smem:[#allocation0]]
  $region62: #{lstm_model_forward.1} parent=0
    _
  %s12 = ssub.s32 1, %s10
  %s13 = scalar_select 0, %s12, %s10
  %v14 = vstv %s8
  %15 = vst [vmem:[#allocation2] sm:$0x1] %v14
  $region1: #{lstm_model_forward.1} parent=0
    #allocation3 [shape = 'u8[4096]{0}', space=vmem, size = 0x1000, scoped, tag = 'input window, operand 1, single buffered']
    #allocation4 [shape = 's32[1]{0}', space=sflag, size = 0x4, scoped, tag = 'scoped memory for lstm_model_forward.1']
    #allocation5 [shape = 'u8[512]{0}', space=vmem, size = 0x400, scoped, tag = 'input window, operand 3, single buffered']
    #allocation6 [shape = 's32[1]{0}', space=sflag, size = 0x4, scoped, tag = 'scoped memory for lstm_model_forward.1']
    #allocation7 [shape = 'u8[65536]{0}', space=vmem, size = 0x10000, scoped, tag = 'input window, operand 4, single buffered']
    #allocation8 [shape = 'u8[65536]{0}', space=vmem, size = 0x10000, scoped, tag = 'input window, operand 5, single buffered']
    #allocation9 [shape = 's32[1]{0}', space=sflag, size = 0x4, scoped, tag = 'scoped memory for lstm_model_forward.1']
    %16 = vsyncpa [#allocation4], 0
    %17 = vsyncpa [#allocation6], 0
    %18 = vsyncpa [#allocation9], 0
    // Predicated region
    $region2: #{lstm_model_forward.1} parent=1 // pred_check
      _
    $region3: #{lstm_model_forward.1} parent=1 // pred_check_branch
      %20 = sbr.rel (0) target = $region5
    $region4: #{lstm_model_forward.1} parent=1 // pred_region
      _
    $region5: #{lstm_model_forward.1} parent=1 // pred_fallthru
      _
    // Predicated region
    $region6: #{lstm_model_forward.1} parent=1 // pred_check
      _
    $region7: #{lstm_model_forward.1} parent=1 // pred_check_branch
      %22 = sbr.rel (0) target = $region9
    $region8: #{lstm_model_forward.1} parent=1 // pred_region
      %s24 = ssub.s32 128, 128
      %25 = vsyncadd [#allocation4], %s24
      %s27 = sshll.u32 [#allocation3], 4
      %s28 = int_to_ptr.vmem [resolvable:$true] %s27
      %30 = dma.hbm_to_vmem [thread:$0]  %s1, 128, %s28, [#allocation4]
    $region9: #{lstm_model_forward.1} parent=1 // pred_fallthru
      _
    // Predicated region
    $region10: #{lstm_model_forward.1} parent=1 // pred_check
      _
    $region11: #{lstm_model_forward.1} parent=1 // pred_check_branch
      %32 = sbr.rel (0) target = $region13
    $region12: #{lstm_model_forward.1} parent=1 // pred_region
      _
    $region13: #{lstm_model_forward.1} parent=1 // pred_fallthru
      _
    // Predicated region
    $region14: #{lstm_model_forward.1} parent=1 // pred_check
      _
    $region15: #{lstm_model_forward.1} parent=1 // pred_check_branch
      %34 = sbr.rel (0) target = $region17
    $region16: #{lstm_model_forward.1} parent=1 // pred_region
      %s36 = ssub.s32 16, 16
      %37 = vsyncadd [#allocation6], %s36
      %s39 = sshll.u32 [#allocation5], 4
      %s40 = int_to_ptr.vmem [resolvable:$true] %s39
      %42 = dma.hbm_to_vmem [thread:$0]  %s3, 16, %s40, [#allocation6]
    $region17: #{lstm_model_forward.1} parent=1 // pred_fallthru
      _
    // Predicated region
    $region18: #{lstm_model_forward.1} parent=1 // pred_check
      _
    $region19: #{lstm_model_forward.1} parent=1 // pred_check_branch
      %44 = sbr.rel (0) target = $region21
    $region20: #{lstm_model_forward.1} parent=1 // pred_region
      %s46 = ssub.s32 2048, 2048
      %47 = vsyncadd [#allocation6], %s46
      %s48 = sshll.u32 [#allocation7], 4
      %s49 = int_to_ptr.vmem [resolvable:$true] %s48
      %54 = dma.hbm_to_vmem [thread:$0]  %s4, 2048, %s49, [#allocation6], 128, 128, 8
    $region21: #{lstm_model_forward.1} parent=1 // pred_fallthru
      _
    // Predicated region
    $region22: #{lstm_model_forward.1} parent=1 // pred_check
      _
    $region23: #{lstm_model_forward.1} parent=1 // pred_check_branch
      %56 = sbr.rel (0) target = $region25
    $region24: #{lstm_model_forward.1} parent=1 // pred_region
      %s58 = ssub.s32 2048, 2048
      %59 = vsyncadd [#allocation9], %s58
      %s60 = sshll.u32 [#allocation8], 4
      %s61 = int_to_ptr.vmem [resolvable:$true] %s60
      %66 = dma.hbm_to_vmem [thread:$0]  %s5, 2048, %s61, [#allocation9], 128, 128, 8
    $region25: #{lstm_model_forward.1} parent=1 // pred_fallthru
      _
    // Predicated region
    $region26: #{lstm_model_forward.1} parent=1 // pred_check
      _
    $region27: #{lstm_model_forward.1} parent=1 // pred_check_branch
      %68 = sbr.rel (0) target = $region29
    $region28: #{lstm_model_forward.1} parent=1 // pred_region
      _
    $region29: #{lstm_model_forward.1} parent=1 // pred_fallthru
      _
    // Predicated region
    $region30: #{lstm_model_forward.1} parent=1 // pred_check
      _
    $region31: #{lstm_model_forward.1} parent=1 // pred_check_branch
      %70 = sbr.rel (0) target = $region33
    $region32: #{lstm_model_forward.1} parent=1 // pred_region
      _
    $region33: #{lstm_model_forward.1} parent=1 // pred_fallthru
      _
    // Predicated region
    $region34: #{lstm_model_forward.1} parent=1 // pred_check
      _
    $region35: #{lstm_model_forward.1} parent=1 // pred_check_branch
      %72 = sbr.rel (0) target = $region37
    $region36: #{lstm_model_forward.1} parent=1 // pred_region
      _
    $region37: #{lstm_model_forward.1} parent=1 // pred_fallthru
      _
    // Predicated region
    $region38: #{lstm_model_forward.1} parent=1 // pred_check
      _
    $region39: #{lstm_model_forward.1} parent=1 // pred_check_branch
      %74 = sbr.rel (0) target = $region41
    $region40: #{lstm_model_forward.1} parent=1 // pred_region
      %75 = dma.done [#allocation4], 128
    $region41: #{lstm_model_forward.1} parent=1 // pred_fallthru
      _
    // Predicated region
    $region42: #{lstm_model_forward.1} parent=1 // pred_check
      _
    $region43: #{lstm_model_forward.1} parent=1 // pred_check_branch
      %77 = sbr.rel (0) target = $region45
    $region44: #{lstm_model_forward.1} parent=1 // pred_region
      %78 = dma.done [#allocation6], 16
    $region45: #{lstm_model_forward.1} parent=1 // pred_fallthru
      _
    // Predicated region
    $region46: #{lstm_model_forward.1} parent=1 // pred_check
      _
    $region47: #{lstm_model_forward.1} parent=1 // pred_check_branch
      %80 = sbr.rel (0) target = $region49
    $region48: #{lstm_model_forward.1} parent=1 // pred_region
      %81 = dma.done [#allocation6], 2048
    $region49: #{lstm_model_forward.1} parent=1 // pred_fallthru
      _
    // Predicated region
    $region50: #{lstm_model_forward.1} parent=1 // pred_check
      _
    $region51: #{lstm_model_forward.1} parent=1 // pred_check_branch
      %83 = sbr.rel (0) target = $region53
    $region52: #{lstm_model_forward.1} parent=1 // pred_region
      %84 = dma.done [#allocation9], 2048
    $region53: #{lstm_model_forward.1} parent=1 // pred_fallthru
      _
    %v85 = vlaneseq
    %v86 = vand.u32 %v85, 127
    %vm87 = vcmp.ge.s32.totalorder %v86, 64
    %vm88 = vcmp.lt.s32.totalorder %v86, 96
    %vm89 = vmand %vm87, %vm88
    %v90 = vsel %vm89, 2.0, 1.0
    %v91 = vsel %vm89, -1.0, 0.0
    %v92 = vld [vmem:[%s0] sm:$0xff]
    %v93 = vld [vmem:[%s0 + $0x8] sm:$0xff]
    %v94 = vld [vmem:[#allocation3] sm:$0xff]
    %v95 = vld [vmem:[#allocation7] sm:$0xff]
    %v96 = vld [vmem:[#allocation7 + $0x8] sm:$0xff]
    %v97 = vld [vmem:[#allocation7 + $0x10] sm:$0xff]
    %v98 = vld [vmem:[#allocation7 + $0x18] sm:$0xff]
    %v99 = vld [vmem:[#allocation7 + $0x20] sm:$0xff]
    %v100 = vld [vmem:[#allocation7 + $0x28] sm:$0xff]
    %v101 = vld [vmem:[#allocation7 + $0x30] sm:$0xff]
    %v102 = vld [vmem:[#allocation7 + $0x38] sm:$0xff]
    %v103 = vld [vmem:[#allocation7 + $0x40] sm:$0xff]
    %v104 = vld [vmem:[#allocation7 + $0x48] sm:$0xff]
    %v105 = vld [vmem:[#allocation7 + $0x50] sm:$0xff]
    %v106 = vld [vmem:[#allocation7 + $0x58] sm:$0xff]
    %v107 = vld [vmem:[#allocation7 + $0x60] sm:$0xff]
    %v108 = vld [vmem:[#allocation7 + $0x68] sm:$0xff]
    %v109 = vld [vmem:[#allocation7 + $0x70] sm:$0xff]
    %v110 = vld [vmem:[#allocation7 + $0x78] sm:$0xff]
    %v111 = vld [vmem:[%s2] sm:$0xff]
    %v112 = vld [vmem:[%s2 + $0x8] sm:$0xff]
    %v113 = vld [vmem:[%s2 + $0x10] sm:$0xff]
    %v114 = vld [vmem:[%s2 + $0x18] sm:$0xff]
    %v115 = vld [vmem:[%s2 + $0x20] sm:$0xff]
    %v116 = vld [vmem:[%s2 + $0x28] sm:$0xff]
    %v117 = vld [vmem:[%s2 + $0x30] sm:$0xff]
    %v118 = vld [vmem:[%s2 + $0x38] sm:$0xff]
    %v119 = vld [vmem:[%s2 + $0x40] sm:$0xff]
    %v120 = vld [vmem:[%s2 + $0x48] sm:$0xff]
    %v121 = vld [vmem:[%s2 + $0x50] sm:$0xff]
    %v122 = vld [vmem:[%s2 + $0x58] sm:$0xff]
    %v123 = vld [vmem:[%s2 + $0x60] sm:$0xff]
    %v124 = vld [vmem:[%s2 + $0x68] sm:$0xff]
    %v125 = vld [vmem:[%s2 + $0x70] sm:$0xff]
    %v126 = vld [vmem:[%s2 + $0x78] sm:$0xff]
    %v127 = vld [vmem:[#allocation8] sm:$0xff]
    %v128 = vld [vmem:[#allocation8 + $0x8] sm:$0xff]
    %v129 = vld [vmem:[#allocation8 + $0x10] sm:$0xff]
    %v130 = vld [vmem:[#allocation8 + $0x18] sm:$0xff]
    %v131 = vld [vmem:[#allocation8 + $0x20] sm:$0xff]
    %v132 = vld [vmem:[#allocation8 + $0x28] sm:$0xff]
    %v133 = vld [vmem:[#allocation8 + $0x30] sm:$0xff]
    %v134 = vld [vmem:[#allocation8 + $0x38] sm:$0xff]
    %v135 = vld [vmem:[#allocation8 + $0x40] sm:$0xff]
    %v136 = vld [vmem:[#allocation8 + $0x48] sm:$0xff]
    %v137 = vld [vmem:[#allocation8 + $0x50] sm:$0xff]
    %v138 = vld [vmem:[#allocation8 + $0x58] sm:$0xff]
    %v139 = vld [vmem:[#allocation8 + $0x60] sm:$0xff]
    %v140 = vld [vmem:[#allocation8 + $0x68] sm:$0xff]
    %v141 = vld [vmem:[#allocation8 + $0x70] sm:$0xff]
    %v142 = vld [vmem:[#allocation8 + $0x78] sm:$0xff]
    %v143 = vld [vmem:[#allocation5] sm:$0x1]
    %v144 = vld [vmem:[%s6] sm:$0x1]
    %v146 = vlaneseq
    %v147 = vshrl.u32 %v146, 7
    %v148 = vsub.s32 0, %v147
    %v149 = vrot.slane %v143, %v148
    %v153 = vrot.slane %v93, 7
    %vm154 = vcmask 1041409
    %v155 = vsel %vm154, %v153, %v92
    %vm156 = vcmask 64512
    %v157 = vsel %vm156, %v155, 0
    %159 = vmatprep.subr.mxu0 0.0
    %160 = vmatpush1.msra.mxu0 %v94
    %161 = vmatprep.subr.mxu0 0.0
    %162 = vmatpush1.msra.mxu0 0.0
    %163 = vmatprep.subr.mxu0 0.0
    %164 = vmatpush1.msra.mxu0 0.0
    %165 = vmatprep.subr.mxu0 0.0
    %166 = vmatpush1.msra.mxu0 0.0
    %167 = vmatprep.subr.mxu0 0.0
    %168 = vmatpush1.msra.mxu0 0.0
    %169 = vmatprep.subr.mxu0 0.0
    %170 = vmatpush1.msra.mxu0 0.0
    %171 = vmatprep.subr.mxu0 0.0
    %172 = vmatpush1.msra.mxu0 0.0
    %173 = vmatprep.subr.mxu0 0.0
    %174 = vmatpush1.msra.mxu0 0.0
    %175 = vmatprep.subr.mxu0 0.0
    %176 = vmatpush1.msra.mxu0 0.0
    %177 = vmatprep.subr.mxu0 0.0
    %178 = vmatpush1.msra.mxu0 0.0
    %179 = vmatprep.subr.mxu0 0.0
    %180 = vmatpush1.msra.mxu0 0.0
    %181 = vmatprep.subr.mxu0 0.0
    %182 = vmatpush1.msra.mxu0 0.0
    %183 = vmatprep.subr.mxu0 0.0
    %184 = vmatpush1.msra.mxu0 0.0
    %185 = vmatprep.subr.mxu0 0.0
    %186 = vmatpush1.msra.mxu0 0.0
    %187 = vmatprep.subr.mxu0 0.0
    %188 = vmatpush1.msra.mxu0 0.0
    %189 = vmatprep.subr.mxu0 0.0
    %190 = vmatpush1.msra.mxu0 0.0
    %191 = vmatprep.subr.mxu0 0.0
    %192 = vmatpush1.msra.mxu0 0.0
    %193 = vmatprep.subr.mxu0 0.0
    %194 = vmatpush1.msra.mxu0 0.0
    %195 = vmatprep.subr.mxu0 0.0
    %196 = vmatpush1.msra.mxu0 0.0
    %197 = vmatprep.subr.mxu0 0.0
    %198 = vmatpush1.msra.mxu0 0.0
    %199 = vmatprep.subr.mxu0 0.0
    %200 = vmatpush1.msra.mxu0 0.0
    %201 = vmatprep.subr.mxu0 0.0
    %202 = vmatpush1.msra.mxu0 0.0
    %203 = vmatprep.subr.mxu0 0.0
    %204 = vmatpush1.msra.mxu0 0.0
    %205 = vmatprep.subr.mxu0 0.0
    %206 = vmatpush1.msra.mxu0 0.0
    %207 = vmatprep.subr.mxu0 0.0
    %208 = vmatpush1.msra.mxu0 0.0
    %209 = vmatprep.subr.mxu0 0.0
    %210 = vmatpush1.msra.mxu0 0.0
    %211 = vmatprep.subr.mxu0 0.0
    %212 = vmatpush1.msra.mxu0 0.0
    %213 = vmatprep.subr.mxu0 0.0
    %214 = vmatpush1.msra.mxu0 0.0
    %215 = vmatprep.subr.mxu0 0.0
    %216 = vmatpush1.msra.mxu0 0.0
    %217 = vmatprep.subr.mxu0 0.0
    %218 = vmatpush1.msra.mxu0 0.0
    %219 = vmatprep.subr.mxu0 0.0
    %220 = vmatpush1.msra.mxu0 0.0
    %221 = vmatprep.subr.mxu0 0.0
    %222 = vmatpush1.msra.mxu0 0.0
    %223 = vmatprep.mubr.f32.mxu0 0.0
    %224 = vmatmul.mubr.f32.gmra.mrb[0].mxu0 %v157
    %v225 = vpop.f32.mrb[0].mxu0
    %v226 = vadd.f32 %v149, %v225
    %v227 = vpop.f32.mrb[0].mxu0
    %228 = vdwg.mxu0
    %229 = vmatprep.subr.mxu0 0.0
    %230 = vmatpush1.msra.mxu0 %v111
    %231 = vmatprep.subr.mxu0 0.0
    %232 = vmatpush1.msra.mxu0 %v112
    %233 = vmatprep.subr.mxu0 0.0
    %234 = vmatpush1.msra.mxu0 %v113
    %235 = vmatprep.subr.mxu0 0.0
    %236 = vmatpush1.msra.mxu0 %v114
    %237 = vmatprep.subr.mxu0 0.0
    %238 = vmatpush1.msra.mxu0 %v115
    %239 = vmatprep.subr.mxu0 0.0
    %240 = vmatpush1.msra.mxu0 %v116
    %241 = vmatprep.subr.mxu0 0.0
    %242 = vmatpush1.msra.mxu0 %v117
    %243 = vmatprep.subr.mxu0 0.0
    %244 = vmatpush1.msra.mxu0 %v118
    %245 = vmatprep.subr.mxu0 0.0
    %246 = vmatpush1.msra.mxu0 %v119
    %247 = vmatprep.subr.mxu0 0.0
    %248 = vmatpush1.msra.mxu0 %v120
    %249 = vmatprep.subr.mxu0 0.0
    %250 = vmatpush1.msra.mxu0 %v121
    %251 = vmatprep.subr.mxu0 0.0
    %252 = vmatpush1.msra.mxu0 %v122
    %253 = vmatprep.subr.mxu0 0.0
    %254 = vmatpush1.msra.mxu0 %v123
    %255 = vmatprep.subr.mxu0 0.0
    %256 = vmatpush1.msra.mxu0 %v124
    %257 = vmatprep.subr.mxu0 0.0
    %258 = vmatpush1.msra.mxu0 %v125
    %259 = vmatprep.subr.mxu0 0.0
    %260 = vmatpush1.msra.mxu0 %v126
    %261 = vmatprep.subr.mxu0 0.0
    %262 = vmatpush1.msra.mxu0 0.0
    %263 = vmatprep.subr.mxu0 0.0
    %264 = vmatpush1.msra.mxu0 0.0
    %265 = vmatprep.subr.mxu0 0.0
    %266 = vmatpush1.msra.mxu0 0.0
    %267 = vmatprep.subr.mxu0 0.0
    %268 = vmatpush1.msra.mxu0 0.0
    %269 = vmatprep.subr.mxu0 0.0
    %270 = vmatpush1.msra.mxu0 0.0
    %271 = vmatprep.subr.mxu0 0.0
    %272 = vmatpush1.msra.mxu0 0.0
    %273 = vmatprep.subr.mxu0 0.0
    %274 = vmatpush1.msra.mxu0 0.0
    %275 = vmatprep.subr.mxu0 0.0
    %276 = vmatpush1.msra.mxu0 0.0
    %277 = vmatprep.subr.mxu0 0.0
    %278 = vmatpush1.msra.mxu0 0.0
    %279 = vmatprep.subr.mxu0 0.0
    %280 = vmatpush1.msra.mxu0 0.0
    %281 = vmatprep.subr.mxu0 0.0
    %282 = vmatpush1.msra.mxu0 0.0
    %283 = vmatprep.subr.mxu0 0.0
    %284 = vmatpush1.msra.mxu0 0.0
    %285 = vmatprep.subr.mxu0 0.0
    %286 = vmatpush1.msra.mxu0 0.0
    %287 = vmatprep.subr.mxu0 0.0
    %288 = vmatpush1.msra.mxu0 0.0
    %289 = vmatprep.subr.mxu0 0.0
    %290 = vmatpush1.msra.mxu0 0.0
    %291 = vmatprep.subr.mxu0 0.0
    %292 = vmatpush1.msra.mxu0 0.0
    %293 = vmatprep.mubr.f32.mxu0 0.0
    %294 = vmatmul.mubr.f32.gmra.mrb[0].mxu0 0.0
    %v295 = vpop.f32.mrb[0].mxu0
    %v296 = vadd.f32 0.0, %v295
    %v297 = vpop.f32.mrb[0].mxu0
    %298 = vdwg.mxu0
    %v299 = vadd.f32 %v226, %v296
    %v300 = vxor.u32 %v299, 2147483648
    %v301 = vmul.f32 %v300, 1.442695
    %v302 = vpow.pop %v301
    %v303 = vadd.f32 %v302, 1.0
    %v304 = vrcp.pop %v303
    %v305 = vmul.f32 1.0, %v304
    %v306 = vmul.f32 %v90, %v305
    %v307 = vadd.f32 %v306, %v91
    %308 = vrot.lane.b32.xlu0 %v307, 64
    %v309 = vpop.permute.xlu0 %308
    %v310 = vmul.f32 %v307, %v309
    %v311 = vmul.f32 %v307, 0.0
    %312 = vrot.lane.b32.xlu0 %v310, 32
    %v313 = vpop.permute.xlu0 %312
    %v314 = vadd.f32 %v311, %v313
    %v315 = vtanh.pop %v314
    %v316 = vmul.f32 %v309, %v315
    %v318 = vlaneseq
    %v319 = vshrl.u32 %v318, 7
    %v320 = vsub.s32 0, %v319
    %v321 = vrot.slane %v144, %v320
    %323 = vmatprep.subr.mxu0 0.0
    %324 = vmatpush1.msra.mxu0 %v95
    %325 = vmatprep.subr.mxu0 0.0
    %326 = vmatpush1.msra.mxu0 %v96
    %327 = vmatprep.subr.mxu0 0.0
    %328 = vmatpush1.msra.mxu0 %v97
    %329 = vmatprep.subr.mxu0 0.0
    %330 = vmatpush1.msra.mxu0 %v98
    %331 = vmatprep.subr.mxu0 0.0
    %332 = vmatpush1.msra.mxu0 %v99
    %333 = vmatprep.subr.mxu0 0.0
    %334 = vmatpush1.msra.mxu0 %v100
    %335 = vmatprep.subr.mxu0 0.0
    %336 = vmatpush1.msra.mxu0 %v101
    %337 = vmatprep.subr.mxu0 0.0
    %338 = vmatpush1.msra.mxu0 %v102
    %339 = vmatprep.subr.mxu0 0.0
    %340 = vmatpush1.msra.mxu0 %v103
    %341 = vmatprep.subr.mxu0 0.0
    %342 = vmatpush1.msra.mxu0 %v104
    %343 = vmatprep.subr.mxu0 0.0
    %344 = vmatpush1.msra.mxu0 %v105
    %345 = vmatprep.subr.mxu0 0.0
    %346 = vmatpush1.msra.mxu0 %v106
    %347 = vmatprep.subr.mxu0 0.0
    %348 = vmatpush1.msra.mxu0 %v107
    %349 = vmatprep.subr.mxu0 0.0
    %350 = vmatpush1.msra.mxu0 %v108
    %351 = vmatprep.subr.mxu0 0.0
    %352 = vmatpush1.msra.mxu0 %v109
    %353 = vmatprep.subr.mxu0 0.0
    %354 = vmatpush1.msra.mxu0 %v110
    %355 = vmatprep.subr.mxu0 0.0
    %356 = vmatpush1.msra.mxu0 0.0
    %357 = vmatprep.subr.mxu0 0.0
    %358 = vmatpush1.msra.mxu0 0.0
    %359 = vmatprep.subr.mxu0 0.0
    %360 = vmatpush1.msra.mxu0 0.0
    %361 = vmatprep.subr.mxu0 0.0
    %362 = vmatpush1.msra.mxu0 0.0
    %363 = vmatprep.subr.mxu0 0.0
    %364 = vmatpush1.msra.mxu0 0.0
    %365 = vmatprep.subr.mxu0 0.0
    %366 = vmatpush1.msra.mxu0 0.0
    %367 = vmatprep.subr.mxu0 0.0
    %368 = vmatpush1.msra.mxu0 0.0
    %369 = vmatprep.subr.mxu0 0.0
    %370 = vmatpush1.msra.mxu0 0.0
    %371 = vmatprep.subr.mxu0 0.0
    %372 = vmatpush1.msra.mxu0 0.0
    %373 = vmatprep.subr.mxu0 0.0
    %374 = vmatpush1.msra.mxu0 0.0
    %375 = vmatprep.subr.mxu0 0.0
    %376 = vmatpush1.msra.mxu0 0.0
    %377 = vmatprep.subr.mxu0 0.0
    %378 = vmatpush1.msra.mxu0 0.0
    %379 = vmatprep.subr.mxu0 0.0
    %380 = vmatpush1.msra.mxu0 0.0
    %381 = vmatprep.subr.mxu0 0.0
    %382 = vmatpush1.msra.mxu0 0.0
    %383 = vmatprep.subr.mxu0 0.0
    %384 = vmatpush1.msra.mxu0 0.0
    %385 = vmatprep.subr.mxu0 0.0
    %386 = vmatpush1.msra.mxu0 0.0
    %387 = vmatprep.mubr.f32.mxu0 0.0
    %388 = vmatmul.mubr.f32.gmra.mrb[0].mxu0 %v316
    %v389 = vpop.f32.mrb[0].mxu0
    %v390 = vadd.f32 %v321, %v389
    %v391 = vpop.f32.mrb[0].mxu0
    %392 = vdwg.mxu0
    %393 = vmatprep.subr.mxu0 0.0
    %394 = vmatpush1.msra.mxu0 %v127
    %395 = vmatprep.subr.mxu0 0.0
    %396 = vmatpush1.msra.mxu0 %v128
    %397 = vmatprep.subr.mxu0 0.0
    %398 = vmatpush1.msra.mxu0 %v129
    %399 = vmatprep.subr.mxu0 0.0
    %400 = vmatpush1.msra.mxu0 %v130
    %401 = vmatprep.subr.mxu0 0.0
    %402 = vmatpush1.msra.mxu0 %v131
    %403 = vmatprep.subr.mxu0 0.0
    %404 = vmatpush1.msra.mxu0 %v132
    %405 = vmatprep.subr.mxu0 0.0
    %406 = vmatpush1.msra.mxu0 %v133
    %407 = vmatprep.subr.mxu0 0.0
    %408 = vmatpush1.msra.mxu0 %v134
    %409 = vmatprep.subr.mxu0 0.0
    %410 = vmatpush1.msra.mxu0 %v135
    %411 = vmatprep.subr.mxu0 0.0
    %412 = vmatpush1.msra.mxu0 %v136
    %413 = vmatprep.subr.mxu0 0.0
    %414 = vmatpush1.msra.mxu0 %v137
    %415 = vmatprep.subr.mxu0 0.0
    %416 = vmatpush1.msra.mxu0 %v138
    %417 = vmatprep.subr.mxu0 0.0
    %418 = vmatpush1.msra.mxu0 %v139
    %419 = vmatprep.subr.mxu0 0.0
    %420 = vmatpush1.msra.mxu0 %v140
    %421 = vmatprep.subr.mxu0 0.0
    %422 = vmatpush1.msra.mxu0 %v141
    %423 = vmatprep.subr.mxu0 0.0
    %424 = vmatpush1.msra.mxu0 %v142
    %425 = vmatprep.subr.mxu0 0.0
    %426 = vmatpush1.msra.mxu0 0.0
    %427 = vmatprep.subr.mxu0 0.0
    %428 = vmatpush1.msra.mxu0 0.0
    %429 = vmatprep.subr.mxu0 0.0
    %430 = vmatpush1.msra.mxu0 0.0
    %431 = vmatprep.subr.mxu0 0.0
    %432 = vmatpush1.msra.mxu0 0.0
    %433 = vmatprep.subr.mxu0 0.0
    %434 = vmatpush1.msra.mxu0 0.0
    %435 = vmatprep.subr.mxu0 0.0
    %436 = vmatpush1.msra.mxu0 0.0
    %437 = vmatprep.subr.mxu0 0.0
    %438 = vmatpush1.msra.mxu0 0.0
    %439 = vmatprep.subr.mxu0 0.0
    %440 = vmatpush1.msra.mxu0 0.0
    %441 = vmatprep.subr.mxu0 0.0
    %442 = vmatpush1.msra.mxu0 0.0
    %443 = vmatprep.subr.mxu0 0.0
    %444 = vmatpush1.msra.mxu0 0.0
    %445 = vmatprep.subr.mxu0 0.0
    %446 = vmatpush1.msra.mxu0 0.0
    %447 = vmatprep.subr.mxu0 0.0
    %448 = vmatpush1.msra.mxu0 0.0
    %449 = vmatprep.subr.mxu0 0.0
    %450 = vmatpush1.msra.mxu0 0.0
    %451 = vmatprep.subr.mxu0 0.0
    %452 = vmatpush1.msra.mxu0 0.0
    %453 = vmatprep.subr.mxu0 0.0
    %454 = vmatpush1.msra.mxu0 0.0
    %455 = vmatprep.subr.mxu0 0.0
    %456 = vmatpush1.msra.mxu0 0.0
    %457 = vmatprep.mubr.f32.mxu0 0.0
    %458 = vmatmul.mubr.f32.gmra.mrb[0].mxu0 0.0
    %v459 = vpop.f32.mrb[0].mxu0
    %v460 = vadd.f32 0.0, %v459
    %v461 = vpop.f32.mrb[0].mxu0
    %462 = vdwg.mxu0
    %v463 = vadd.f32 %v390, %v460
    %v464 = vxor.u32 %v463, 2147483648
    %v465 = vmul.f32 %v464, 1.442695
    %v466 = vpow.pop %v465
    %v467 = vadd.f32 %v466, 1.0
    %v468 = vrcp.pop %v467
    %v469 = vmul.f32 1.0, %v468
    %v470 = vmul.f32 %v90, %v469
    %v471 = vadd.f32 %v470, %v91
    %472 = vrot.lane.b32.xlu0 %v471, 64
    %v473 = vpop.permute.xlu0 %472
    %v474 = vmul.f32 %v471, %v473
    %v475 = vmul.f32 %v471, 0.0
    %476 = vrot.lane.b32.xlu0 %v474, 32
    %v477 = vpop.permute.xlu0 %476
    %v478 = vadd.f32 %v475, %v477
    %v479 = vtanh.pop %v478
    %v480 = vmul.f32 %v473, %v479
    %v481 = vrot.slane %v92, 1
    %v482 = vsel %vm154, %v93, %v481
    %v483 = vsel %vm156, %v482, 0
    %485 = vmatprep.subr.mxu0 0.0
    %486 = vmatpush1.msra.mxu0 %v94
    %487 = vmatprep.subr.mxu0 0.0
    %488 = vmatpush1.msra.mxu0 0.0
    %489 = vmatprep.subr.mxu0 0.0
    %490 = vmatpush1.msra.mxu0 0.0
    %491 = vmatprep.subr.mxu0 0.0
    %492 = vmatpush1.msra.mxu0 0.0
    %493 = vmatprep.subr.mxu0 0.0
    %494 = vmatpush1.msra.mxu0 0.0
    %495 = vmatprep.subr.mxu0 0.0
    %496 = vmatpush1.msra.mxu0 0.0
    %497 = vmatprep.subr.mxu0 0.0
    %498 = vmatpush1.msra.mxu0 0.0
    %499 = vmatprep.subr.mxu0 0.0
    %500 = vmatpush1.msra.mxu0 0.0
    %501 = vmatprep.subr.mxu0 0.0
    %502 = vmatpush1.msra.mxu0 0.0
    %503 = vmatprep.subr.mxu0 0.0
    %504 = vmatpush1.msra.mxu0 0.0
    %505 = vmatprep.subr.mxu0 0.0
    %506 = vmatpush1.msra.mxu0 0.0
    %507 = vmatprep.subr.mxu0 0.0
    %508 = vmatpush1.msra.mxu0 0.0
    %509 = vmatprep.subr.mxu0 0.0
    %510 = vmatpush1.msra.mxu0 0.0
    %511 = vmatprep.subr.mxu0 0.0
    %512 = vmatpush1.msra.mxu0 0.0
    %513 = vmatprep.subr.mxu0 0.0
    %514 = vmatpush1.msra.mxu0 0.0
    %515 = vmatprep.subr.mxu0 0.0
    %516 = vmatpush1.msra.mxu0 0.0
    %517 = vmatprep.subr.mxu0 0.0
    %518 = vmatpush1.msra.mxu0 0.0
    %519 = vmatprep.subr.mxu0 0.0
    %520 = vmatpush1.msra.mxu0 0.0
    %521 = vmatprep.subr.mxu0 0.0
    %522 = vmatpush1.msra.mxu0 0.0
    %523 = vmatprep.subr.mxu0 0.0
    %524 = vmatpush1.msra.mxu0 0.0
    %525 = vmatprep.subr.mxu0 0.0
    %526 = vmatpush1.msra.mxu0 0.0
    %527 = vmatprep.subr.mxu0 0.0
    %528 = vmatpush1.msra.mxu0 0.0
    %529 = vmatprep.subr.mxu0 0.0
    %530 = vmatpush1.msra.mxu0 0.0
    %531 = vmatprep.subr.mxu0 0.0
    %532 = vmatpush1.msra.mxu0 0.0
    %533 = vmatprep.subr.mxu0 0.0
    %534 = vmatpush1.msra.mxu0 0.0
    %535 = vmatprep.subr.mxu0 0.0
    %536 = vmatpush1.msra.mxu0 0.0
    %537 = vmatprep.subr.mxu0 0.0
    %538 = vmatpush1.msra.mxu0 0.0
    %539 = vmatprep.subr.mxu0 0.0
    %540 = vmatpush1.msra.mxu0 0.0
    %541 = vmatprep.subr.mxu0 0.0
    %542 = vmatpush1.msra.mxu0 0.0
    %543 = vmatprep.subr.mxu0 0.0
    %544 = vmatpush1.msra.mxu0 0.0
    %545 = vmatprep.subr.mxu0 0.0
    %546 = vmatpush1.msra.mxu0 0.0
    %547 = vmatprep.subr.mxu0 0.0
    %548 = vmatpush1.msra.mxu0 0.0
    %549 = vmatprep.mubr.f32.mxu0 0.0
    %550 = vmatmul.mubr.f32.gmra.mrb[0].mxu0 %v483
    %v551 = vpop.f32.mrb[0].mxu0
    %v552 = vadd.f32 %v149, %v551
    %v553 = vpop.f32.mrb[0].mxu0
    %554 = vdwg.mxu0
    %555 = vmatprep.subr.mxu0 0.0
    %556 = vmatpush1.msra.mxu0 %v111
    %557 = vmatprep.subr.mxu0 0.0
    %558 = vmatpush1.msra.mxu0 %v112
    %559 = vmatprep.subr.mxu0 0.0
    %560 = vmatpush1.msra.mxu0 %v113
    %561 = vmatprep.subr.mxu0 0.0
    %562 = vmatpush1.msra.mxu0 %v114
    %563 = vmatprep.subr.mxu0 0.0
    %564 = vmatpush1.msra.mxu0 %v115
    %565 = vmatprep.subr.mxu0 0.0
    %566 = vmatpush1.msra.mxu0 %v116
    %567 = vmatprep.subr.mxu0 0.0
    %568 = vmatpush1.msra.mxu0 %v117
    %569 = vmatprep.subr.mxu0 0.0
    %570 = vmatpush1.msra.mxu0 %v118
    %571 = vmatprep.subr.mxu0 0.0
    %572 = vmatpush1.msra.mxu0 %v119
    %573 = vmatprep.subr.mxu0 0.0
    %574 = vmatpush1.msra.mxu0 %v120
    %575 = vmatprep.subr.mxu0 0.0
    %576 = vmatpush1.msra.mxu0 %v121
    %577 = vmatprep.subr.mxu0 0.0
    %578 = vmatpush1.msra.mxu0 %v122
    %579 = vmatprep.subr.mxu0 0.0
    %580 = vmatpush1.msra.mxu0 %v123
    %581 = vmatprep.subr.mxu0 0.0
    %582 = vmatpush1.msra.mxu0 %v124
    %583 = vmatprep.subr.mxu0 0.0
    %584 = vmatpush1.msra.mxu0 %v125
    %585 = vmatprep.subr.mxu0 0.0
    %586 = vmatpush1.msra.mxu0 %v126
    %587 = vmatprep.subr.mxu0 0.0
    %588 = vmatpush1.msra.mxu0 0.0
    %589 = vmatprep.subr.mxu0 0.0
    %590 = vmatpush1.msra.mxu0 0.0
    %591 = vmatprep.subr.mxu0 0.0
    %592 = vmatpush1.msra.mxu0 0.0
    %593 = vmatprep.subr.mxu0 0.0
    %594 = vmatpush1.msra.mxu0 0.0
    %595 = vmatprep.subr.mxu0 0.0
    %596 = vmatpush1.msra.mxu0 0.0
    %597 = vmatprep.subr.mxu0 0.0
    %598 = vmatpush1.msra.mxu0 0.0
    %599 = vmatprep.subr.mxu0 0.0
    %600 = vmatpush1.msra.mxu0 0.0
    %601 = vmatprep.subr.mxu0 0.0
    %602 = vmatpush1.msra.mxu0 0.0
    %603 = vmatprep.subr.mxu0 0.0
    %604 = vmatpush1.msra.mxu0 0.0
    %605 = vmatprep.subr.mxu0 0.0
    %606 = vmatpush1.msra.mxu0 0.0
    %607 = vmatprep.subr.mxu0 0.0
    %608 = vmatpush1.msra.mxu0 0.0
    %609 = vmatprep.subr.mxu0 0.0
    %610 = vmatpush1.msra.mxu0 0.0
    %611 = vmatprep.subr.mxu0 0.0
    %612 = vmatpush1.msra.mxu0 0.0
    %613 = vmatprep.subr.mxu0 0.0
    %614 = vmatpush1.msra.mxu0 0.0
    %615 = vmatprep.subr.mxu0 0.0
    %616 = vmatpush1.msra.mxu0 0.0
    %617 = vmatprep.subr.mxu0 0.0
    %618 = vmatpush1.msra.mxu0 0.0
    %619 = vmatprep.mubr.f32.mxu0 0.0
    %620 = vmatmul.mubr.f32.gmra.mrb[0].mxu0 %v316
    %v621 = vpop.f32.mrb[0].mxu0
    %v622 = vadd.f32 0.0, %v621
    %v623 = vpop.f32.mrb[0].mxu0
    %624 = vdwg.mxu0
    %v625 = vadd.f32 %v552, %v622
    %v626 = vxor.u32 %v625, 2147483648
    %v627 = vmul.f32 %v626, 1.442695
    %v628 = vpow.pop %v627
    %v629 = vadd.f32 %v628, 1.0
    %v630 = vrcp.pop %v629
    %v631 = vmul.f32 1.0, %v630
    %v632 = vmul.f32 %v90, %v631
    %v633 = vadd.f32 %v632, %v91
    %634 = vrot.lane.b32.xlu0 %v633, 64
    %v635 = vpop.permute.xlu0 %634
    %v636 = vmul.f32 %v633, %v635
    %v637 = vmul.f32 %v633, %v314
    %638 = vrot.lane.b32.xlu0 %v636, 32
    %v639 = vpop.permute.xlu0 %638
    %v640 = vadd.f32 %v637, %v639
    %v641 = vtanh.pop %v640
    %v642 = vmul.f32 %v635, %v641
    %643 = vmatprep.subr.mxu0 0.0
    %644 = vmatpush1.msra.mxu0 %v95
    %645 = vmatprep.subr.mxu0 0.0
    %646 = vmatpush1.msra.mxu0 %v96
    %647 = vmatprep.subr.mxu0 0.0
    %648 = vmatpush1.msra.mxu0 %v97
    %649 = vmatprep.subr.mxu0 0.0
    %650 = vmatpush1.msra.mxu0 %v98
    %651 = vmatprep.subr.mxu0 0.0
    %652 = vmatpush1.msra.mxu0 %v99
    %653 = vmatprep.subr.mxu0 0.0
    %654 = vmatpush1.msra.mxu0 %v100
    %655 = vmatprep.subr.mxu0 0.0
    %656 = vmatpush1.msra.mxu0 %v101
    %657 = vmatprep.subr.mxu0 0.0
    %658 = vmatpush1.msra.mxu0 %v102
    %659 = vmatprep.subr.mxu0 0.0
    %660 = vmatpush1.msra.mxu0 %v103
    %661 = vmatprep.subr.mxu0 0.0
    %662 = vmatpush1.msra.mxu0 %v104
    %663 = vmatprep.subr.mxu0 0.0
    %664 = vmatpush1.msra.mxu0 %v105
    %665 = vmatprep.subr.mxu0 0.0
    %666 = vmatpush1.msra.mxu0 %v106
    %667 = vmatprep.subr.mxu0 0.0
    %668 = vmatpush1.msra.mxu0 %v107
    %669 = vmatprep.subr.mxu0 0.0
    %670 = vmatpush1.msra.mxu0 %v108
    %671 = vmatprep.subr.mxu0 0.0
    %672 = vmatpush1.msra.mxu0 %v109
    %673 = vmatprep.subr.mxu0 0.0
    %674 = vmatpush1.msra.mxu0 %v110
    %675 = vmatprep.subr.mxu0 0.0
    %676 = vmatpush1.msra.mxu0 0.0
    %677 = vmatprep.subr.mxu0 0.0
    %678 = vmatpush1.msra.mxu0 0.0
    %679 = vmatprep.subr.mxu0 0.0
    %680 = vmatpush1.msra.mxu0 0.0
    %681 = vmatprep.subr.mxu0 0.0
    %682 = vmatpush1.msra.mxu0 0.0
    %683 = vmatprep.subr.mxu0 0.0
    %684 = vmatpush1.msra.mxu0 0.0
    %685 = vmatprep.subr.mxu0 0.0
    %686 = vmatpush1.msra.mxu0 0.0
    %687 = vmatprep.subr.mxu0 0.0
    %688 = vmatpush1.msra.mxu0 0.0
    %689 = vmatprep.subr.mxu0 0.0
    %690 = vmatpush1.msra.mxu0 0.0
    %691 = vmatprep.subr.mxu0 0.0
    %692 = vmatpush1.msra.mxu0 0.0
    %693 = vmatprep.subr.mxu0 0.0
    %694 = vmatpush1.msra.mxu0 0.0
    %695 = vmatprep.subr.mxu0 0.0
    %696 = vmatpush1.msra.mxu0 0.0
    %697 = vmatprep.subr.mxu0 0.0
    %698 = vmatpush1.msra.mxu0 0.0
    %699 = vmatprep.subr.mxu0 0.0
    %700 = vmatpush1.msra.mxu0 0.0
    %701 = vmatprep.subr.mxu0 0.0
    %702 = vmatpush1.msra.mxu0 0.0
    %703 = vmatprep.subr.mxu0 0.0
    %704 = vmatpush1.msra.mxu0 0.0
    %705 = vmatprep.subr.mxu0 0.0
    %706 = vmatpush1.msra.mxu0 0.0
    %707 = vmatprep.mubr.f32.mxu0 0.0
    %708 = vmatmul.mubr.f32.gmra.mrb[0].mxu0 %v642
    %v709 = vpop.f32.mrb[0].mxu0
    %v710 = vadd.f32 %v321, %v709
    %v711 = vpop.f32.mrb[0].mxu0
    %712 = vdwg.mxu0
    %713 = vmatprep.subr.mxu0 0.0
    %714 = vmatpush1.msra.mxu0 %v127
    %715 = vmatprep.subr.mxu0 0.0
    %716 = vmatpush1.msra.mxu0 %v128
    %717 = vmatprep.subr.mxu0 0.0
    %718 = vmatpush1.msra.mxu0 %v129
    %719 = vmatprep.subr.mxu0 0.0
    %720 = vmatpush1.msra.mxu0 %v130
    %721 = vmatprep.subr.mxu0 0.0
    %722 = vmatpush1.msra.mxu0 %v131
    %723 = vmatprep.subr.mxu0 0.0
    %724 = vmatpush1.msra.mxu0 %v132
    %725 = vmatprep.subr.mxu0 0.0
    %726 = vmatpush1.msra.mxu0 %v133
    %727 = vmatprep.subr.mxu0 0.0
    %728 = vmatpush1.msra.mxu0 %v134
    %729 = vmatprep.subr.mxu0 0.0
    %730 = vmatpush1.msra.mxu0 %v135
    %731 = vmatprep.subr.mxu0 0.0
    %732 = vmatpush1.msra.mxu0 %v136
    %733 = vmatprep.subr.mxu0 0.0
    %734 = vmatpush1.msra.mxu0 %v137
    %735 = vmatprep.subr.mxu0 0.0
    %736 = vmatpush1.msra.mxu0 %v138
    %737 = vmatprep.subr.mxu0 0.0
    %738 = vmatpush1.msra.mxu0 %v139
    %739 = vmatprep.subr.mxu0 0.0
    %740 = vmatpush1.msra.mxu0 %v140
    %741 = vmatprep.subr.mxu0 0.0
    %742 = vmatpush1.msra.mxu0 %v141
    %743 = vmatprep.subr.mxu0 0.0
    %744 = vmatpush1.msra.mxu0 %v142
    %745 = vmatprep.subr.mxu0 0.0
    %746 = vmatpush1.msra.mxu0 0.0
    %747 = vmatprep.subr.mxu0 0.0
    %748 = vmatpush1.msra.mxu0 0.0
    %749 = vmatprep.subr.mxu0 0.0
    %750 = vmatpush1.msra.mxu0 0.0
    %751 = vmatprep.subr.mxu0 0.0
    %752 = vmatpush1.msra.mxu0 0.0
    %753 = vmatprep.subr.mxu0 0.0
    %754 = vmatpush1.msra.mxu0 0.0
    %755 = vmatprep.subr.mxu0 0.0
    %756 = vmatpush1.msra.mxu0 0.0
    %757 = vmatprep.subr.mxu0 0.0
    %758 = vmatpush1.msra.mxu0 0.0
    %759 = vmatprep.subr.mxu0 0.0
    %760 = vmatpush1.msra.mxu0 0.0
    %761 = vmatprep.subr.mxu0 0.0
    %762 = vmatpush1.msra.mxu0 0.0
    %763 = vmatprep.subr.mxu0 0.0
    %764 = vmatpush1.msra.mxu0 0.0
    %765 = vmatprep.subr.mxu0 0.0
    %766 = vmatpush1.msra.mxu0 0.0
    %767 = vmatprep.subr.mxu0 0.0
    %768 = vmatpush1.msra.mxu0 0.0
    %769 = vmatprep.subr.mxu0 0.0
    %770 = vmatpush1.msra.mxu0 0.0
    %771 = vmatprep.subr.mxu0 0.0
    %772 = vmatpush1.msra.mxu0 0.0
    %773 = vmatprep.subr.mxu0 0.0
    %774 = vmatpush1.msra.mxu0 0.0
    %775 = vmatprep.subr.mxu0 0.0
    %776 = vmatpush1.msra.mxu0 0.0
    %777 = vmatprep.mubr.f32.mxu0 0.0
    %778 = vmatmul.mubr.f32.gmra.mrb[0].mxu0 %v480
    %v779 = vpop.f32.mrb[0].mxu0
    %v780 = vadd.f32 0.0, %v779
    %v781 = vpop.f32.mrb[0].mxu0
    %782 = vdwg.mxu0
    %v783 = vadd.f32 %v710, %v780
    %v784 = vxor.u32 %v783, 2147483648
    %v785 = vmul.f32 %v784, 1.442695
    %v786 = vpow.pop %v785
    %v787 = vadd.f32 %v786, 1.0
    %v788 = vrcp.pop %v787
    %v789 = vmul.f32 1.0, %v788
    %v790 = vmul.f32 %v90, %v789
    %v791 = vadd.f32 %v790, %v91
    %792 = vrot.lane.b32.xlu0 %v791, 64
    %v793 = vpop.permute.xlu0 %792
    %v794 = vmul.f32 %v791, %v793
    %v795 = vmul.f32 %v791, %v478
    %796 = vrot.lane.b32.xlu0 %v794, 32
    %v797 = vpop.permute.xlu0 %796
    %v798 = vadd.f32 %v795, %v797
    %v799 = vtanh.pop %v798
    %v800 = vmul.f32 %v793, %v799
    %v801 = vrot.slane %v92, 2
    %v802 = vrot.slane %v93, 1
    %v803 = vsel %vm154, %v802, %v801
    %v804 = vsel %vm156, %v803, 0
    %806 = vmatprep.subr.mxu0 0.0
    %807 = vmatpush1.msra.mxu0 %v94
    %808 = vmatprep.subr.mxu0 0.0
    %809 = vmatpush1.msra.mxu0 0.0
    %810 = vmatprep.subr.mxu0 0.0
    %811 = vmatpush1.msra.mxu0 0.0
    %812 = vmatprep.subr.mxu0 0.0
    %813 = vmatpush1.msra.mxu0 0.0
    %814 = vmatprep.subr.mxu0 0.0
    %815 = vmatpush1.msra.mxu0 0.0
    %816 = vmatprep.subr.mxu0 0.0
    %817 = vmatpush1.msra.mxu0 0.0
    %818 = vmatprep.subr.mxu0 0.0
    %819 = vmatpush1.msra.mxu0 0.0
    %820 = vmatprep.subr.mxu0 0.0
    %821 = vmatpush1.msra.mxu0 0.0
    %822 = vmatprep.subr.mxu0 0.0
    %823 = vmatpush1.msra.mxu0 0.0
    %824 = vmatprep.subr.mxu0 0.0
    %825 = vmatpush1.msra.mxu0 0.0
    %826 = vmatprep.subr.mxu0 0.0
    %827 = vmatpush1.msra.mxu0 0.0
    %828 = vmatprep.subr.mxu0 0.0
    %829 = vmatpush1.msra.mxu0 0.0
    %830 = vmatprep.subr.mxu0 0.0
    %831 = vmatpush1.msra.mxu0 0.0
    %832 = vmatprep.subr.mxu0 0.0
    %833 = vmatpush1.msra.mxu0 0.0
    %834 = vmatprep.subr.mxu0 0.0
    %835 = vmatpush1.msra.mxu0 0.0
    %836 = vmatprep.subr.mxu0 0.0
    %837 = vmatpush1.msra.mxu0 0.0
    %838 = vmatprep.subr.mxu0 0.0
    %839 = vmatpush1.msra.mxu0 0.0
    %840 = vmatprep.subr.mxu0 0.0
    %841 = vmatpush1.msra.mxu0 0.0
    %842 = vmatprep.subr.mxu0 0.0
    %843 = vmatpush1.msra.mxu0 0.0
    %844 = vmatprep.subr.mxu0 0.0
    %845 = vmatpush1.msra.mxu0 0.0
    %846 = vmatprep.subr.mxu0 0.0
    %847 = vmatpush1.msra.mxu0 0.0
    %848 = vmatprep.subr.mxu0 0.0
    %849 = vmatpush1.msra.mxu0 0.0
    %850 = vmatprep.subr.mxu0 0.0
    %851 = vmatpush1.msra.mxu0 0.0
    %852 = vmatprep.subr.mxu0 0.0
    %853 = vmatpush1.msra.mxu0 0.0
    %854 = vmatprep.subr.mxu0 0.0
    %855 = vmatpush1.msra.mxu0 0.0
    %856 = vmatprep.subr.mxu0 0.0
    %857 = vmatpush1.msra.mxu0 0.0
    %858 = vmatprep.subr.mxu0 0.0
    %859 = vmatpush1.msra.mxu0 0.0
    %860 = vmatprep.subr.mxu0 0.0
    %861 = vmatpush1.msra.mxu0 0.0
    %862 = vmatprep.subr.mxu0 0.0
    %863 = vmatpush1.msra.mxu0 0.0
    %864 = vmatprep.subr.mxu0 0.0
    %865 = vmatpush1.msra.mxu0 0.0
    %866 = vmatprep.subr.mxu0 0.0
    %867 = vmatpush1.msra.mxu0 0.0
    %868 = vmatprep.subr.mxu0 0.0
    %869 = vmatpush1.msra.mxu0 0.0
    %870 = vmatprep.mubr.f32.mxu0 0.0
    %871 = vmatmul.mubr.f32.gmra.mrb[0].mxu0 %v804
    %v872 = vpop.f32.mrb[0].mxu0
    %v873 = vadd.f32 %v149, %v872
    %v874 = vpop.f32.mrb[0].mxu0
    %875 = vdwg.mxu0
    %876 = vmatprep.subr.mxu0 0.0
    %877 = vmatpush1.msra.mxu0 %v111
    %878 = vmatprep.subr.mxu0 0.0
    %879 = vmatpush1.msra.mxu0 %v112
    %880 = vmatprep.subr.mxu0 0.0
    %881 = vmatpush1.msra.mxu0 %v113
    %882 = vmatprep.subr.mxu0 0.0
    %883 = vmatpush1.msra.mxu0 %v114
    %884 = vmatprep.subr.mxu0 0.0
    %885 = vmatpush1.msra.mxu0 %v115
    %886 = vmatprep.subr.mxu0 0.0
    %887 = vmatpush1.msra.mxu0 %v116
    %888 = vmatprep.subr.mxu0 0.0
    %889 = vmatpush1.msra.mxu0 %v117
    %890 = vmatprep.subr.mxu0 0.0
    %891 = vmatpush1.msra.mxu0 %v118
    %892 = vmatprep.subr.mxu0 0.0
    %893 = vmatpush1.msra.mxu0 %v119
    %894 = vmatprep.subr.mxu0 0.0
    %895 = vmatpush1.msra.mxu0 %v120
    %896 = vmatprep.subr.mxu0 0.0
    %897 = vmatpush1.msra.mxu0 %v121
    %898 = vmatprep.subr.mxu0 0.0
    %899 = vmatpush1.msra.mxu0 %v122
    %900 = vmatprep.subr.mxu0 0.0
    %901 = vmatpush1.msra.mxu0 %v123
    %902 = vmatprep.subr.mxu0 0.0
    %903 = vmatpush1.msra.mxu0 %v124
    %904 = vmatprep.subr.mxu0 0.0
    %905 = vmatpush1.msra.mxu0 %v125
    %906 = vmatprep.subr.mxu0 0.0
    %907 = vmatpush1.msra.mxu0 %v126
    %908 = vmatprep.subr.mxu0 0.0
    %909 = vmatpush1.msra.mxu0 0.0
    %910 = vmatprep.subr.mxu0 0.0
    %911 = vmatpush1.msra.mxu0 0.0
    %912 = vmatprep.subr.mxu0 0.0
    %913 = vmatpush1.msra.mxu0 0.0
    %914 = vmatprep.subr.mxu0 0.0
    %915 = vmatpush1.msra.mxu0 0.0
    %916 = vmatprep.subr.mxu0 0.0
    %917 = vmatpush1.msra.mxu0 0.0
    %918 = vmatprep.subr.mxu0 0.0
    %919 = vmatpush1.msra.mxu0 0.0
    %920 = vmatprep.subr.mxu0 0.0
    %921 = vmatpush1.msra.mxu0 0.0
    %922 = vmatprep.subr.mxu0 0.0
    %923 = vmatpush1.msra.mxu0 0.0
    %924 = vmatprep.subr.mxu0 0.0
    %925 = vmatpush1.msra.mxu0 0.0
    %926 = vmatprep.subr.mxu0 0.0
    %927 = vmatpush1.msra.mxu0 0.0
    %928 = vmatprep.subr.mxu0 0.0
    %929 = vmatpush1.msra.mxu0 0.0
    %930 = vmatprep.subr.mxu0 0.0
    %931 = vmatpush1.msra.mxu0 0.0
    %932 = vmatprep.subr.mxu0 0.0
    %933 = vmatpush1.msra.mxu0 0.0
    %934 = vmatprep.subr.mxu0 0.0
    %935 = vmatpush1.msra.mxu0 0.0
    %936 = vmatprep.subr.mxu0 0.0
    %937 = vmatpush1.msra.mxu0 0.0
    %938 = vmatprep.subr.mxu0 0.0
    %939 = vmatpush1.msra.mxu0 0.0
    %940 = vmatprep.mubr.f32.mxu0 0.0
    %941 = vmatmul.mubr.f32.gmra.mrb[0].mxu0 %v642
    %v942 = vpop.f32.mrb[0].mxu0
    %v943 = vadd.f32 0.0, %v942
    %v944 = vpop.f32.mrb[0].mxu0
    %945 = vdwg.mxu0
    %v946 = vadd.f32 %v873, %v943
    %v947 = vxor.u32 %v946, 2147483648
    %v948 = vmul.f32 %v947, 1.442695
    %v949 = vpow.pop %v948
    %v950 = vadd.f32 %v949, 1.0
    %v951 = vrcp.pop %v950
    %v952 = vmul.f32 1.0, %v951
    %v953 = vmul.f32 %v90, %v952
    %v954 = vadd.f32 %v953, %v91
    %955 = vrot.lane.b32.xlu0 %v954, 64
    %v956 = vpop.permute.xlu0 %955
    %v957 = vmul.f32 %v954, %v956
    %v958 = vmul.f32 %v954, %v640
    %959 = vrot.lane.b32.xlu0 %v957, 32
    %v960 = vpop.permute.xlu0 %959
    %v961 = vadd.f32 %v958, %v960
    %v962 = vtanh.pop %v961
    %v963 = vmul.f32 %v956, %v962
    %964 = vmatprep.subr.mxu0 0.0
    %965 = vmatpush1.msra.mxu0 %v95
    %966 = vmatprep.subr.mxu0 0.0
    %967 = vmatpush1.msra.mxu0 %v96
    %968 = vmatprep.subr.mxu0 0.0
    %969 = vmatpush1.msra.mxu0 %v97
    %970 = vmatprep.subr.mxu0 0.0
    %971 = vmatpush1.msra.mxu0 %v98
    %972 = vmatprep.subr.mxu0 0.0
    %973 = vmatpush1.msra.mxu0 %v99
    %974 = vmatprep.subr.mxu0 0.0
    %975 = vmatpush1.msra.mxu0 %v100
    %976 = vmatprep.subr.mxu0 0.0
    %977 = vmatpush1.msra.mxu0 %v101
    %978 = vmatprep.subr.mxu0 0.0
    %979 = vmatpush1.msra.mxu0 %v102
    %980 = vmatprep.subr.mxu0 0.0
    %981 = vmatpush1.msra.mxu0 %v103
    %982 = vmatprep.subr.mxu0 0.0
    %983 = vmatpush1.msra.mxu0 %v104
    %984 = vmatprep.subr.mxu0 0.0
    %985 = vmatpush1.msra.mxu0 %v105
    %986 = vmatprep.subr.mxu0 0.0
    %987 = vmatpush1.msra.mxu0 %v106
    %988 = vmatprep.subr.mxu0 0.0
    %989 = vmatpush1.msra.mxu0 %v107
    %990 = vmatprep.subr.mxu0 0.0
    %991 = vmatpush1.msra.mxu0 %v108
    %992 = vmatprep.subr.mxu0 0.0
    %993 = vmatpush1.msra.mxu0 %v109
    %994 = vmatprep.subr.mxu0 0.0
    %995 = vmatpush1.msra.mxu0 %v110
    %996 = vmatprep.subr.mxu0 0.0
    %997 = vmatpush1.msra.mxu0 0.0
    %998 = vmatprep.subr.mxu0 0.0
    %999 = vmatpush1.msra.mxu0 0.0
    %1000 = vmatprep.subr.mxu0 0.0
    %1001 = vmatpush1.msra.mxu0 0.0
    %1002 = vmatprep.subr.mxu0 0.0
    %1003 = vmatpush1.msra.mxu0 0.0
    %1004 = vmatprep.subr.mxu0 0.0
    %1005 = vmatpush1.msra.mxu0 0.0
    %1006 = vmatprep.subr.mxu0 0.0
    %1007 = vmatpush1.msra.mxu0 0.0
    %1008 = vmatprep.subr.mxu0 0.0
    %1009 = vmatpush1.msra.mxu0 0.0
    %1010 = vmatprep.subr.mxu0 0.0
    %1011 = vmatpush1.msra.mxu0 0.0
    %1012 = vmatprep.subr.mxu0 0.0
    %1013 = vmatpush1.msra.mxu0 0.0
    %1014 = vmatprep.subr.mxu0 0.0
    %1015 = vmatpush1.msra.mxu0 0.0
    %1016 = vmatprep.subr.mxu0 0.0
    %1017 = vmatpush1.msra.mxu0 0.0
    %1018 = vmatprep.subr.mxu0 0.0
    %1019 = vmatpush1.msra.mxu0 0.0
    %1020 = vmatprep.subr.mxu0 0.0
    %1021 = vmatpush1.msra.mxu0 0.0
    %1022 = vmatprep.subr.mxu0 0.0
    %1023 = vmatpush1.msra.mxu0 0.0
    %1024 = vmatprep.subr.mxu0 0.0
    %1025 = vmatpush1.msra.mxu0 0.0
    %1026 = vmatprep.subr.mxu0 0.0
    %1027 = vmatpush1.msra.mxu0 0.0
    %1028 = vmatprep.mubr.f32.mxu0 0.0
    %1029 = vmatmul.mubr.f32.gmra.mrb[0].mxu0 %v963
    %v1030 = vpop.f32.mrb[0].mxu0
    %v1031 = vadd.f32 %v321, %v1030
    %v1032 = vpop.f32.mrb[0].mxu0
    %1033 = vdwg.mxu0
    %1034 = vmatprep.subr.mxu0 0.0
    %1035 = vmatpush1.msra.mxu0 %v127
    %1036 = vmatprep.subr.mxu0 0.0
    %1037 = vmatpush1.msra.mxu0 %v128
    %1038 = vmatprep.subr.mxu0 0.0
    %1039 = vmatpush1.msra.mxu0 %v129
    %1040 = vmatprep.subr.mxu0 0.0
    %1041 = vmatpush1.msra.mxu0 %v130
    %1042 = vmatprep.subr.mxu0 0.0
    %1043 = vmatpush1.msra.mxu0 %v131
    %1044 = vmatprep.subr.mxu0 0.0
    %1045 = vmatpush1.msra.mxu0 %v132
    %1046 = vmatprep.subr.mxu0 0.0
    %1047 = vmatpush1.msra.mxu0 %v133
    %1048 = vmatprep.subr.mxu0 0.0
    %1049 = vmatpush1.msra.mxu0 %v134
    %1050 = vmatprep.subr.mxu0 0.0
    %1051 = vmatpush1.msra.mxu0 %v135
    %1052 = vmatprep.subr.mxu0 0.0
    %1053 = vmatpush1.msra.mxu0 %v136
    %1054 = vmatprep.subr.mxu0 0.0
    %1055 = vmatpush1.msra.mxu0 %v137
    %1056 = vmatprep.subr.mxu0 0.0
    %1057 = vmatpush1.msra.mxu0 %v138
    %1058 = vmatprep.subr.mxu0 0.0
    %1059 = vmatpush1.msra.mxu0 %v139
    %1060 = vmatprep.subr.mxu0 0.0
    %1061 = vmatpush1.msra.mxu0 %v140
    %1062 = vmatprep.subr.mxu0 0.0
    %1063 = vmatpush1.msra.mxu0 %v141
    %1064 = vmatprep.subr.mxu0 0.0
    %1065 = vmatpush1.msra.mxu0 %v142
    %1066 = vmatprep.subr.mxu0 0.0
    %1067 = vmatpush1.msra.mxu0 0.0
    %1068 = vmatprep.subr.mxu0 0.0
    %1069 = vmatpush1.msra.mxu0 0.0
    %1070 = vmatprep.subr.mxu0 0.0
    %1071 = vmatpush1.msra.mxu0 0.0
    %1072 = vmatprep.subr.mxu0 0.0
    %1073 = vmatpush1.msra.mxu0 0.0
    %1074 = vmatprep.subr.mxu0 0.0
    %1075 = vmatpush1.msra.mxu0 0.0
    %1076 = vmatprep.subr.mxu0 0.0
    %1077 = vmatpush1.msra.mxu0 0.0
    %1078 = vmatprep.subr.mxu0 0.0
    %1079 = vmatpush1.msra.mxu0 0.0
    %1080 = vmatprep.subr.mxu0 0.0
    %1081 = vmatpush1.msra.mxu0 0.0
    %1082 = vmatprep.subr.mxu0 0.0
    %1083 = vmatpush1.msra.mxu0 0.0
    %1084 = vmatprep.subr.mxu0 0.0
    %1085 = vmatpush1.msra.mxu0 0.0
    %1086 = vmatprep.subr.mxu0 0.0
    %1087 = vmatpush1.msra.mxu0 0.0
    %1088 = vmatprep.subr.mxu0 0.0
    %1089 = vmatpush1.msra.mxu0 0.0
    %1090 = vmatprep.subr.mxu0 0.0
    %1091 = vmatpush1.msra.mxu0 0.0
    %1092 = vmatprep.subr.mxu0 0.0
    %1093 = vmatpush1.msra.mxu0 0.0
    %1094 = vmatprep.subr.mxu0 0.0
    %1095 = vmatpush1.msra.mxu0 0.0
    %1096 = vmatprep.subr.mxu0 0.0
    %1097 = vmatpush1.msra.mxu0 0.0
    %1098 = vmatprep.mubr.f32.mxu0 0.0
    %1099 = vmatmul.mubr.f32.gmra.mrb[0].mxu0 %v800
    %v1100 = vpop.f32.mrb[0].mxu0
    %v1101 = vadd.f32 0.0, %v1100
    %v1102 = vpop.f32.mrb[0].mxu0
    %1103 = vdwg.mxu0
    %v1104 = vadd.f32 %v1031, %v1101
    %v1105 = vxor.u32 %v1104, 2147483648
    %v1106 = vmul.f32 %v1105, 1.442695
    %v1107 = vpow.pop %v1106
    %v1108 = vadd.f32 %v1107, 1.0
    %v1109 = vrcp.pop %v1108
    %v1110 = vmul.f32 1.0, %v1109
    %v1111 = vmul.f32 %v90, %v1110
    %v1112 = vadd.f32 %v1111, %v91
    %1113 = vrot.lane.b32.xlu0 %v1112, 64
    %v1114 = vpop.permute.xlu0 %1113
    %v1115 = vmul.f32 %v1112, %v1114
    %v1116 = vmul.f32 %v1112, %v798
    %1117 = vrot.lane.b32.xlu0 %v1115, 32
    %v1118 = vpop.permute.xlu0 %1117
    %v1119 = vadd.f32 %v1116, %v1118
    %v1120 = vtanh.pop %v1119
    %v1121 = vmul.f32 %v1114, %v1120
    %v1122 = vrot.slane %v92, 3
    %v1123 = vrot.slane %v93, 2
    %v1124 = vsel %vm154, %v1123, %v1122
    %v1125 = vsel %vm156, %v1124, 0
    %1127 = vmatprep.subr.mxu0 0.0
    %1128 = vmatpush1.msra.mxu0 %v94
    %1129 = vmatprep.subr.mxu0 0.0
    %1130 = vmatpush1.msra.mxu0 0.0
    %1131 = vmatprep.subr.mxu0 0.0
    %1132 = vmatpush1.msra.mxu0 0.0
    %1133 = vmatprep.subr.mxu0 0.0
    %1134 = vmatpush1.msra.mxu0 0.0
    %1135 = vmatprep.subr.mxu0 0.0
    %1136 = vmatpush1.msra.mxu0 0.0
    %1137 = vmatprep.subr.mxu0 0.0
    %1138 = vmatpush1.msra.mxu0 0.0
    %1139 = vmatprep.subr.mxu0 0.0
    %1140 = vmatpush1.msra.mxu0 0.0
    %1141 = vmatprep.subr.mxu0 0.0
    %1142 = vmatpush1.msra.mxu0 0.0
    %1143 = vmatprep.subr.mxu0 0.0
    %1144 = vmatpush1.msra.mxu0 0.0
    %1145 = vmatprep.subr.mxu0 0.0
    %1146 = vmatpush1.msra.mxu0 0.0
    %1147 = vmatprep.subr.mxu0 0.0
    %1148 = vmatpush1.msra.mxu0 0.0
    %1149 = vmatprep.subr.mxu0 0.0
    %1150 = vmatpush1.msra.mxu0 0.0
    %1151 = vmatprep.subr.mxu0 0.0
    %1152 = vmatpush1.msra.mxu0 0.0
    %1153 = vmatprep.subr.mxu0 0.0
    %1154 = vmatpush1.msra.mxu0 0.0
    %1155 = vmatprep.subr.mxu0 0.0
    %1156 = vmatpush1.msra.mxu0 0.0
    %1157 = vmatprep.subr.mxu0 0.0
    %1158 = vmatpush1.msra.mxu0 0.0
    %1159 = vmatprep.subr.mxu0 0.0
    %1160 = vmatpush1.msra.mxu0 0.0
    %1161 = vmatprep.subr.mxu0 0.0
    %1162 = vmatpush1.msra.mxu0 0.0
    %1163 = vmatprep.subr.mxu0 0.0
    %1164 = vmatpush1.msra.mxu0 0.0
    %1165 = vmatprep.subr.mxu0 0.0
    %1166 = vmatpush1.msra.mxu0 0.0
    %1167 = vmatprep.subr.mxu0 0.0
    %1168 = vmatpush1.msra.mxu0 0.0
    %1169 = vmatprep.subr.mxu0 0.0
    %1170 = vmatpush1.msra.mxu0 0.0
    %1171 = vmatprep.subr.mxu0 0.0
    %1172 = vmatpush1.msra.mxu0 0.0
    %1173 = vmatprep.subr.mxu0 0.0
    %1174 = vmatpush1.msra.mxu0 0.0
    %1175 = vmatprep.subr.mxu0 0.0
    %1176 = vmatpush1.msra.mxu0 0.0
    %1177 = vmatprep.subr.mxu0 0.0
    %1178 = vmatpush1.msra.mxu0 0.0
    %1179 = vmatprep.subr.mxu0 0.0
    %1180 = vmatpush1.msra.mxu0 0.0
    %1181 = vmatprep.subr.mxu0 0.0
    %1182 = vmatpush1.msra.mxu0 0.0
    %1183 = vmatprep.subr.mxu0 0.0
    %1184 = vmatpush1.msra.mxu0 0.0
    %1185 = vmatprep.subr.mxu0 0.0
    %1186 = vmatpush1.msra.mxu0 0.0
    %1187 = vmatprep.subr.mxu0 0.0
    %1188 = vmatpush1.msra.mxu0 0.0
    %1189 = vmatprep.subr.mxu0 0.0
    %1190 = vmatpush1.msra.mxu0 0.0
    %1191 = vmatprep.mubr.f32.mxu0 0.0
    %1192 = vmatmul.mubr.f32.gmra.mrb[0].mxu0 %v1125
    %v1193 = vpop.f32.mrb[0].mxu0
    %v1194 = vadd.f32 %v149, %v1193
    %v1195 = vpop.f32.mrb[0].mxu0
    %1196 = vdwg.mxu0
    %1197 = vmatprep.subr.mxu0 0.0
    %1198 = vmatpush1.msra.mxu0 %v111
    %1199 = vmatprep.subr.mxu0 0.0
    %1200 = vmatpush1.msra.mxu0 %v112
    %1201 = vmatprep.subr.mxu0 0.0
    %1202 = vmatpush1.msra.mxu0 %v113
    %1203 = vmatprep.subr.mxu0 0.0
    %1204 = vmatpush1.msra.mxu0 %v114
    %1205 = vmatprep.subr.mxu0 0.0
    %1206 = vmatpush1.msra.mxu0 %v115
    %1207 = vmatprep.subr.mxu0 0.0
    %1208 = vmatpush1.msra.mxu0 %v116
    %1209 = vmatprep.subr.mxu0 0.0
    %1210 = vmatpush1.msra.mxu0 %v117
    %1211 = vmatprep.subr.mxu0 0.0
    %1212 = vmatpush1.msra.mxu0 %v118
    %1213 = vmatprep.subr.mxu0 0.0
    %1214 = vmatpush1.msra.mxu0 %v119
    %1215 = vmatprep.subr.mxu0 0.0
    %1216 = vmatpush1.msra.mxu0 %v120
    %1217 = vmatprep.subr.mxu0 0.0
    %1218 = vmatpush1.msra.mxu0 %v121
    %1219 = vmatprep.subr.mxu0 0.0
    %1220 = vmatpush1.msra.mxu0 %v122
    %1221 = vmatprep.subr.mxu0 0.0
    %1222 = vmatpush1.msra.mxu0 %v123
    %1223 = vmatprep.subr.mxu0 0.0
    %1224 = vmatpush1.msra.mxu0 %v124
    %1225 = vmatprep.subr.mxu0 0.0
    %1226 = vmatpush1.msra.mxu0 %v125
    %1227 = vmatprep.subr.mxu0 0.0
    %1228 = vmatpush1.msra.mxu0 %v126
    %1229 = vmatprep.subr.mxu0 0.0
    %1230 = vmatpush1.msra.mxu0 0.0
    %1231 = vmatprep.subr.mxu0 0.0
    %1232 = vmatpush1.msra.mxu0 0.0
    %1233 = vmatprep.subr.mxu0 0.0
    %1234 = vmatpush1.msra.mxu0 0.0
    %1235 = vmatprep.subr.mxu0 0.0
    %1236 = vmatpush1.msra.mxu0 0.0
    %1237 = vmatprep.subr.mxu0 0.0
    %1238 = vmatpush1.msra.mxu0 0.0
    %1239 = vmatprep.subr.mxu0 0.0
    %1240 = vmatpush1.msra.mxu0 0.0
    %1241 = vmatprep.subr.mxu0 0.0
    %1242 = vmatpush1.msra.mxu0 0.0
    %1243 = vmatprep.subr.mxu0 0.0
    %1244 = vmatpush1.msra.mxu0 0.0
    %1245 = vmatprep.subr.mxu0 0.0
    %1246 = vmatpush1.msra.mxu0 0.0
    %1247 = vmatprep.subr.mxu0 0.0
    %1248 = vmatpush1.msra.mxu0 0.0
    %1249 = vmatprep.subr.mxu0 0.0
    %1250 = vmatpush1.msra.mxu0 0.0
    %1251 = vmatprep.subr.mxu0 0.0
    %1252 = vmatpush1.msra.mxu0 0.0
    %1253 = vmatprep.subr.mxu0 0.0
    %1254 = vmatpush1.msra.mxu0 0.0
    %1255 = vmatprep.subr.mxu0 0.0
    %1256 = vmatpush1.msra.mxu0 0.0
    %1257 = vmatprep.subr.mxu0 0.0
    %1258 = vmatpush1.msra.mxu0 0.0
    %1259 = vmatprep.subr.mxu0 0.0
    %1260 = vmatpush1.msra.mxu0 0.0
    %1261 = vmatprep.mubr.f32.mxu0 0.0
    %1262 = vmatmul.mubr.f32.gmra.mrb[0].mxu0 %v963
    %v1263 = vpop.f32.mrb[0].mxu0
    %v1264 = vadd.f32 0.0, %v1263
    %v1265 = vpop.f32.mrb[0].mxu0
    %1266 = vdwg.mxu0
    %v1267 = vadd.f32 %v1194, %v1264
    %v1268 = vxor.u32 %v1267, 2147483648
    %v1269 = vmul.f32 %v1268, 1.442695
    %v1270 = vpow.pop %v1269
    %v1271 = vadd.f32 %v1270, 1.0
    %v1272 = vrcp.pop %v1271
    %v1273 = vmul.f32 1.0, %v1272
    %v1274 = vmul.f32 %v90, %v1273
    %v1275 = vadd.f32 %v1274, %v91
    %1276 = vrot.lane.b32.xlu0 %v1275, 64
    %v1277 = vpop.permute.xlu0 %1276
    %v1278 = vmul.f32 %v1275, %v1277
    %v1279 = vmul.f32 %v1275, %v961
    %1280 = vrot.lane.b32.xlu0 %v1278, 32
    %v1281 = vpop.permute.xlu0 %1280
    %v1282 = vadd.f32 %v1279, %v1281
    %v1283 = vtanh.pop %v1282
    %v1284 = vmul.f32 %v1277, %v1283
    %1285 = vmatprep.subr.mxu0 0.0
    %1286 = vmatpush1.msra.mxu0 %v95
    %1287 = vmatprep.subr.mxu0 0.0
    %1288 = vmatpush1.msra.mxu0 %v96
    %1289 = vmatprep.subr.mxu0 0.0
    %1290 = vmatpush1.msra.mxu0 %v97
    %1291 = vmatprep.subr.mxu0 0.0
    %1292 = vmatpush1.msra.mxu0 %v98
    %1293 = vmatprep.subr.mxu0 0.0
    %1294 = vmatpush1.msra.mxu0 %v99
    %1295 = vmatprep.subr.mxu0 0.0
    %1296 = vmatpush1.msra.mxu0 %v100
    %1297 = vmatprep.subr.mxu0 0.0
    %1298 = vmatpush1.msra.mxu0 %v101
    %1299 = vmatprep.subr.mxu0 0.0
    %1300 = vmatpush1.msra.mxu0 %v102
    %1301 = vmatprep.subr.mxu0 0.0
    %1302 = vmatpush1.msra.mxu0 %v103
    %1303 = vmatprep.subr.mxu0 0.0
    %1304 = vmatpush1.msra.mxu0 %v104
    %1305 = vmatprep.subr.mxu0 0.0
    %1306 = vmatpush1.msra.mxu0 %v105
    %1307 = vmatprep.subr.mxu0 0.0
    %1308 = vmatpush1.msra.mxu0 %v106
    %1309 = vmatprep.subr.mxu0 0.0
    %1310 = vmatpush1.msra.mxu0 %v107
    %1311 = vmatprep.subr.mxu0 0.0
    %1312 = vmatpush1.msra.mxu0 %v108
    %1313 = vmatprep.subr.mxu0 0.0
    %1314 = vmatpush1.msra.mxu0 %v109
    %1315 = vmatprep.subr.mxu0 0.0
    %1316 = vmatpush1.msra.mxu0 %v110
    %1317 = vmatprep.subr.mxu0 0.0
    %1318 = vmatpush1.msra.mxu0 0.0
    %1319 = vmatprep.subr.mxu0 0.0
    %1320 = vmatpush1.msra.mxu0 0.0
    %1321 = vmatprep.subr.mxu0 0.0
    %1322 = vmatpush1.msra.mxu0 0.0
    %1323 = vmatprep.subr.mxu0 0.0
    %1324 = vmatpush1.msra.mxu0 0.0
    %1325 = vmatprep.subr.mxu0 0.0
    %1326 = vmatpush1.msra.mxu0 0.0
    %1327 = vmatprep.subr.mxu0 0.0
    %1328 = vmatpush1.msra.mxu0 0.0
    %1329 = vmatprep.subr.mxu0 0.0
    %1330 = vmatpush1.msra.mxu0 0.0
    %1331 = vmatprep.subr.mxu0 0.0
    %1332 = vmatpush1.msra.mxu0 0.0
    %1333 = vmatprep.subr.mxu0 0.0
    %1334 = vmatpush1.msra.mxu0 0.0
    %1335 = vmatprep.subr.mxu0 0.0
    %1336 = vmatpush1.msra.mxu0 0.0
    %1337 = vmatprep.subr.mxu0 0.0
    %1338 = vmatpush1.msra.mxu0 0.0
    %1339 = vmatprep.subr.mxu0 0.0
    %1340 = vmatpush1.msra.mxu0 0.0
    %1341 = vmatprep.subr.mxu0 0.0
    %1342 = vmatpush1.msra.mxu0 0.0
    %1343 = vmatprep.subr.mxu0 0.0
    %1344 = vmatpush1.msra.mxu0 0.0
    %1345 = vmatprep.subr.mxu0 0.0
    %1346 = vmatpush1.msra.mxu0 0.0
    %1347 = vmatprep.subr.mxu0 0.0
    %1348 = vmatpush1.msra.mxu0 0.0
    %1349 = vmatprep.mubr.f32.mxu0 0.0
    %1350 = vmatmul.mubr.f32.gmra.mrb[0].mxu0 %v1284
    %v1351 = vpop.f32.mrb[0].mxu0
    %v1352 = vadd.f32 %v321, %v1351
    %v1353 = vpop.f32.mrb[0].mxu0
    %1354 = vdwg.mxu0
    %1355 = vmatprep.subr.mxu0 0.0
    %1356 = vmatpush1.msra.mxu0 %v127
    %1357 = vmatprep.subr.mxu0 0.0
    %1358 = vmatpush1.msra.mxu0 %v128
    %1359 = vmatprep.subr.mxu0 0.0
    %1360 = vmatpush1.msra.mxu0 %v129
    %1361 = vmatprep.subr.mxu0 0.0
    %1362 = vmatpush1.msra.mxu0 %v130
    %1363 = vmatprep.subr.mxu0 0.0
    %1364 = vmatpush1.msra.mxu0 %v131
    %1365 = vmatprep.subr.mxu0 0.0
    %1366 = vmatpush1.msra.mxu0 %v132
    %1367 = vmatprep.subr.mxu0 0.0
    %1368 = vmatpush1.msra.mxu0 %v133
    %1369 = vmatprep.subr.mxu0 0.0
    %1370 = vmatpush1.msra.mxu0 %v134
    %1371 = vmatprep.subr.mxu0 0.0
    %1372 = vmatpush1.msra.mxu0 %v135
    %1373 = vmatprep.subr.mxu0 0.0
    %1374 = vmatpush1.msra.mxu0 %v136
    %1375 = vmatprep.subr.mxu0 0.0
    %1376 = vmatpush1.msra.mxu0 %v137
    %1377 = vmatprep.subr.mxu0 0.0
    %1378 = vmatpush1.msra.mxu0 %v138
    %1379 = vmatprep.subr.mxu0 0.0
    %1380 = vmatpush1.msra.mxu0 %v139
    %1381 = vmatprep.subr.mxu0 0.0
    %1382 = vmatpush1.msra.mxu0 %v140
    %1383 = vmatprep.subr.mxu0 0.0
    %1384 = vmatpush1.msra.mxu0 %v141
    %1385 = vmatprep.subr.mxu0 0.0
    %1386 = vmatpush1.msra.mxu0 %v142
    %1387 = vmatprep.subr.mxu0 0.0
    %1388 = vmatpush1.msra.mxu0 0.0
    %1389 = vmatprep.subr.mxu0 0.0
    %1390 = vmatpush1.msra.mxu0 0.0
    %1391 = vmatprep.subr.mxu0 0.0
    %1392 = vmatpush1.msra.mxu0 0.0
    %1393 = vmatprep.subr.mxu0 0.0
    %1394 = vmatpush1.msra.mxu0 0.0
    %1395 = vmatprep.subr.mxu0 0.0
    %1396 = vmatpush1.msra.mxu0 0.0
    %1397 = vmatprep.subr.mxu0 0.0
    %1398 = vmatpush1.msra.mxu0 0.0
    %1399 = vmatprep.subr.mxu0 0.0
    %1400 = vmatpush1.msra.mxu0 0.0
    %1401 = vmatprep.subr.mxu0 0.0
    %1402 = vmatpush1.msra.mxu0 0.0
    %1403 = vmatprep.subr.mxu0 0.0
    %1404 = vmatpush1.msra.mxu0 0.0
    %1405 = vmatprep.subr.mxu0 0.0
    %1406 = vmatpush1.msra.mxu0 0.0
    %1407 = vmatprep.subr.mxu0 0.0
    %1408 = vmatpush1.msra.mxu0 0.0
    %1409 = vmatprep.subr.mxu0 0.0
    %1410 = vmatpush1.msra.mxu0 0.0
    %1411 = vmatprep.subr.mxu0 0.0
    %1412 = vmatpush1.msra.mxu0 0.0
    %1413 = vmatprep.subr.mxu0 0.0
    %1414 = vmatpush1.msra.mxu0 0.0
    %1415 = vmatprep.subr.mxu0 0.0
    %1416 = vmatpush1.msra.mxu0 0.0
    %1417 = vmatprep.subr.mxu0 0.0
    %1418 = vmatpush1.msra.mxu0 0.0
    %1419 = vmatprep.mubr.f32.mxu0 0.0
    %1420 = vmatmul.mubr.f32.gmra.mrb[0].mxu0 %v1121
    %v1421 = vpop.f32.mrb[0].mxu0
    %v1422 = vadd.f32 0.0, %v1421
    %v1423 = vpop.f32.mrb[0].mxu0
    %1424 = vdwg.mxu0
    %v1425 = vadd.f32 %v1352, %v1422
    %v1426 = vxor.u32 %v1425, 2147483648
    %v1427 = vmul.f32 %v1426, 1.442695
    %v1428 = vpow.pop %v1427
    %v1429 = vadd.f32 %v1428, 1.0
    %v1430 = vrcp.pop %v1429
    %v1431 = vmul.f32 1.0, %v1430
    %v1432 = vmul.f32 %v90, %v1431
    %v1433 = vadd.f32 %v1432, %v91
    %1434 = vrot.lane.b32.xlu0 %v1433, 64
    %v1435 = vpop.permute.xlu0 %1434
    %v1436 = vmul.f32 %v1433, %v1435
    %v1437 = vmul.f32 %v1433, %v1119
    %1438 = vrot.lane.b32.xlu0 %v1436, 32
    %v1439 = vpop.permute.xlu0 %1438
    %v1440 = vadd.f32 %v1437, %v1439
    %v1441 = vtanh.pop %v1440
    %v1442 = vmul.f32 %v1435, %v1441
    %v1443 = vrot.slane %v92, 4
    %v1444 = vrot.slane %v93, 3
    %v1445 = vsel %vm154, %v1444, %v1443
    %v1446 = vsel %vm156, %v1445, 0
    %1448 = vmatprep.subr.mxu0 0.0
    %1449 = vmatpush1.msra.mxu0 %v94
    %1450 = vmatprep.subr.mxu0 0.0
    %1451 = vmatpush1.msra.mxu0 0.0
    %1452 = vmatprep.subr.mxu0 0.0
    %1453 = vmatpush1.msra.mxu0 0.0
    %1454 = vmatprep.subr.mxu0 0.0
    %1455 = vmatpush1.msra.mxu0 0.0
    %1456 = vmatprep.subr.mxu0 0.0
    %1457 = vmatpush1.msra.mxu0 0.0
    %1458 = vmatprep.subr.mxu0 0.0
    %1459 = vmatpush1.msra.mxu0 0.0
    %1460 = vmatprep.subr.mxu0 0.0
    %1461 = vmatpush1.msra.mxu0 0.0
    %1462 = vmatprep.subr.mxu0 0.0
    %1463 = vmatpush1.msra.mxu0 0.0
    %1464 = vmatprep.subr.mxu0 0.0
    %1465 = vmatpush1.msra.mxu0 0.0
    %1466 = vmatprep.subr.mxu0 0.0
    %1467 = vmatpush1.msra.mxu0 0.0
    %1468 = vmatprep.subr.mxu0 0.0
    %1469 = vmatpush1.msra.mxu0 0.0
    %1470 = vmatprep.subr.mxu0 0.0
    %1471 = vmatpush1.msra.mxu0 0.0
    %1472 = vmatprep.subr.mxu0 0.0
    %1473 = vmatpush1.msra.mxu0 0.0
    %1474 = vmatprep.subr.mxu0 0.0
    %1475 = vmatpush1.msra.mxu0 0.0
    %1476 = vmatprep.subr.mxu0 0.0
    %1477 = vmatpush1.msra.mxu0 0.0
    %1478 = vmatprep.subr.mxu0 0.0
    %1479 = vmatpush1.msra.mxu0 0.0
    %1480 = vmatprep.subr.mxu0 0.0
    %1481 = vmatpush1.msra.mxu0 0.0
    %1482 = vmatprep.subr.mxu0 0.0
    %1483 = vmatpush1.msra.mxu0 0.0
    %1484 = vmatprep.subr.mxu0 0.0
    %1485 = vmatpush1.msra.mxu0 0.0
    %1486 = vmatprep.subr.mxu0 0.0
    %1487 = vmatpush1.msra.mxu0 0.0
    %1488 = vmatprep.subr.mxu0 0.0
    %1489 = vmatpush1.msra.mxu0 0.0
    %1490 = vmatprep.subr.mxu0 0.0
    %1491 = vmatpush1.msra.mxu0 0.0
    %1492 = vmatprep.subr.mxu0 0.0
    %1493 = vmatpush1.msra.mxu0 0.0
    %1494 = vmatprep.subr.mxu0 0.0
    %1495 = vmatpush1.msra.mxu0 0.0
    %1496 = vmatprep.subr.mxu0 0.0
    %1497 = vmatpush1.msra.mxu0 0.0
    %1498 = vmatprep.subr.mxu0 0.0
    %1499 = vmatpush1.msra.mxu0 0.0
    %1500 = vmatprep.subr.mxu0 0.0
    %1501 = vmatpush1.msra.mxu0 0.0
    %1502 = vmatprep.subr.mxu0 0.0
    %1503 = vmatpush1.msra.mxu0 0.0
    %1504 = vmatprep.subr.mxu0 0.0
    %1505 = vmatpush1.msra.mxu0 0.0
    %1506 = vmatprep.subr.mxu0 0.0
    %1507 = vmatpush1.msra.mxu0 0.0
    %1508 = vmatprep.subr.mxu0 0.0
    %1509 = vmatpush1.msra.mxu0 0.0
    %1510 = vmatprep.subr.mxu0 0.0
    %1511 = vmatpush1.msra.mxu0 0.0
    %1512 = vmatprep.mubr.f32.mxu0 0.0
    %1513 = vmatmul.mubr.f32.gmra.mrb[0].mxu0 %v1446
    %v1514 = vpop.f32.mrb[0].mxu0
    %v1515 = vadd.f32 %v149, %v1514
    %v1516 = vpop.f32.mrb[0].mxu0
    %1517 = vdwg.mxu0
    %1518 = vmatprep.subr.mxu0 0.0
    %1519 = vmatpush1.msra.mxu0 %v111
    %1520 = vmatprep.subr.mxu0 0.0
    %1521 = vmatpush1.msra.mxu0 %v112
    %1522 = vmatprep.subr.mxu0 0.0
    %1523 = vmatpush1.msra.mxu0 %v113
    %1524 = vmatprep.subr.mxu0 0.0
    %1525 = vmatpush1.msra.mxu0 %v114
    %1526 = vmatprep.subr.mxu0 0.0
    %1527 = vmatpush1.msra.mxu0 %v115
    %1528 = vmatprep.subr.mxu0 0.0
    %1529 = vmatpush1.msra.mxu0 %v116
    %1530 = vmatprep.subr.mxu0 0.0
    %1531 = vmatpush1.msra.mxu0 %v117
    %1532 = vmatprep.subr.mxu0 0.0
    %1533 = vmatpush1.msra.mxu0 %v118
    %1534 = vmatprep.subr.mxu0 0.0
    %1535 = vmatpush1.msra.mxu0 %v119
    %1536 = vmatprep.subr.mxu0 0.0
    %1537 = vmatpush1.msra.mxu0 %v120
    %1538 = vmatprep.subr.mxu0 0.0
    %1539 = vmatpush1.msra.mxu0 %v121
    %1540 = vmatprep.subr.mxu0 0.0
    %1541 = vmatpush1.msra.mxu0 %v122
    %1542 = vmatprep.subr.mxu0 0.0
    %1543 = vmatpush1.msra.mxu0 %v123
    %1544 = vmatprep.subr.mxu0 0.0
    %1545 = vmatpush1.msra.mxu0 %v124
    %1546 = vmatprep.subr.mxu0 0.0
    %1547 = vmatpush1.msra.mxu0 %v125
    %1548 = vmatprep.subr.mxu0 0.0
    %1549 = vmatpush1.msra.mxu0 %v126
    %1550 = vmatprep.subr.mxu0 0.0
    %1551 = vmatpush1.msra.mxu0 0.0
    %1552 = vmatprep.subr.mxu0 0.0
    %1553 = vmatpush1.msra.mxu0 0.0
    %1554 = vmatprep.subr.mxu0 0.0
    %1555 = vmatpush1.msra.mxu0 0.0
    %1556 = vmatprep.subr.mxu0 0.0
    %1557 = vmatpush1.msra.mxu0 0.0
    %1558 = vmatprep.subr.mxu0 0.0
    %1559 = vmatpush1.msra.mxu0 0.0
    %1560 = vmatprep.subr.mxu0 0.0
    %1561 = vmatpush1.msra.mxu0 0.0
    %1562 = vmatprep.subr.mxu0 0.0
    %1563 = vmatpush1.msra.mxu0 0.0
    %1564 = vmatprep.subr.mxu0 0.0
    %1565 = vmatpush1.msra.mxu0 0.0
    %1566 = vmatprep.subr.mxu0 0.0
    %1567 = vmatpush1.msra.mxu0 0.0
    %1568 = vmatprep.subr.mxu0 0.0
    %1569 = vmatpush1.msra.mxu0 0.0
    %1570 = vmatprep.subr.mxu0 0.0
    %1571 = vmatpush1.msra.mxu0 0.0
    %1572 = vmatprep.subr.mxu0 0.0
    %1573 = vmatpush1.msra.mxu0 0.0
    %1574 = vmatprep.subr.mxu0 0.0
    %1575 = vmatpush1.msra.mxu0 0.0
    %1576 = vmatprep.subr.mxu0 0.0
    %1577 = vmatpush1.msra.mxu0 0.0
    %1578 = vmatprep.subr.mxu0 0.0
    %1579 = vmatpush1.msra.mxu0 0.0
    %1580 = vmatprep.subr.mxu0 0.0
    %1581 = vmatpush1.msra.mxu0 0.0
    %1582 = vmatprep.mubr.f32.mxu0 0.0
    %1583 = vmatmul.mubr.f32.gmra.mrb[0].mxu0 %v1284
    %v1584 = vpop.f32.mrb[0].mxu0
    %v1585 = vadd.f32 0.0, %v1584
    %v1586 = vpop.f32.mrb[0].mxu0
    %1587 = vdwg.mxu0
    %v1588 = vadd.f32 %v1515, %v1585
    %v1589 = vxor.u32 %v1588, 2147483648
    %v1590 = vmul.f32 %v1589, 1.442695
    %v1591 = vpow.pop %v1590
    %v1592 = vadd.f32 %v1591, 1.0
    %v1593 = vrcp.pop %v1592
    %v1594 = vmul.f32 1.0, %v1593
    %v1595 = vmul.f32 %v90, %v1594
    %v1596 = vadd.f32 %v1595, %v91
    %1597 = vrot.lane.b32.xlu0 %v1596, 64
    %v1598 = vpop.permute.xlu0 %1597
    %v1599 = vmul.f32 %v1596, %v1598
    %v1600 = vmul.f32 %v1596, %v1282
    %1601 = vrot.lane.b32.xlu0 %v1599, 32
    %v1602 = vpop.permute.xlu0 %1601
    %v1603 = vadd.f32 %v1600, %v1602
    %v1604 = vtanh.pop %v1603
    %v1605 = vmul.f32 %v1598, %v1604
    %1606 = vmatprep.subr.mxu0 0.0
    %1607 = vmatpush1.msra.mxu0 %v95
    %1608 = vmatprep.subr.mxu0 0.0
    %1609 = vmatpush1.msra.mxu0 %v96
    %1610 = vmatprep.subr.mxu0 0.0
    %1611 = vmatpush1.msra.mxu0 %v97
    %1612 = vmatprep.subr.mxu0 0.0
    %1613 = vmatpush1.msra.mxu0 %v98
    %1614 = vmatprep.subr.mxu0 0.0
    %1615 = vmatpush1.msra.mxu0 %v99
    %1616 = vmatprep.subr.mxu0 0.0
    %1617 = vmatpush1.msra.mxu0 %v100
    %1618 = vmatprep.subr.mxu0 0.0
    %1619 = vmatpush1.msra.mxu0 %v101
    %1620 = vmatprep.subr.mxu0 0.0
    %1621 = vmatpush1.msra.mxu0 %v102
    %1622 = vmatprep.subr.mxu0 0.0
    %1623 = vmatpush1.msra.mxu0 %v103
    %1624 = vmatprep.subr.mxu0 0.0
    %1625 = vmatpush1.msra.mxu0 %v104
    %1626 = vmatprep.subr.mxu0 0.0
    %1627 = vmatpush1.msra.mxu0 %v105
    %1628 = vmatprep.subr.mxu0 0.0
    %1629 = vmatpush1.msra.mxu0 %v106
    %1630 = vmatprep.subr.mxu0 0.0
    %1631 = vmatpush1.msra.mxu0 %v107
    %1632 = vmatprep.subr.mxu0 0.0
    %1633 = vmatpush1.msra.mxu0 %v108
    %1634 = vmatprep.subr.mxu0 0.0
    %1635 = vmatpush1.msra.mxu0 %v109
    %1636 = vmatprep.subr.mxu0 0.0
    %1637 = vmatpush1.msra.mxu0 %v110
    %1638 = vmatprep.subr.mxu0 0.0
    %1639 = vmatpush1.msra.mxu0 0.0
    %1640 = vmatprep.subr.mxu0 0.0
    %1641 = vmatpush1.msra.mxu0 0.0
    %1642 = vmatprep.subr.mxu0 0.0
    %1643 = vmatpush1.msra.mxu0 0.0
    %1644 = vmatprep.subr.mxu0 0.0
    %1645 = vmatpush1.msra.mxu0 0.0
    %1646 = vmatprep.subr.mxu0 0.0
    %1647 = vmatpush1.msra.mxu0 0.0
    %1648 = vmatprep.subr.mxu0 0.0
    %1649 = vmatpush1.msra.mxu0 0.0
    %1650 = vmatprep.subr.mxu0 0.0
    %1651 = vmatpush1.msra.mxu0 0.0
    %1652 = vmatprep.subr.mxu0 0.0
    %1653 = vmatpush1.msra.mxu0 0.0
    %1654 = vmatprep.subr.mxu0 0.0
    %1655 = vmatpush1.msra.mxu0 0.0
    %1656 = vmatprep.subr.mxu0 0.0
    %1657 = vmatpush1.msra.mxu0 0.0
    %1658 = vmatprep.subr.mxu0 0.0
    %1659 = vmatpush1.msra.mxu0 0.0
    %1660 = vmatprep.subr.mxu0 0.0
    %1661 = vmatpush1.msra.mxu0 0.0
    %1662 = vmatprep.subr.mxu0 0.0
    %1663 = vmatpush1.msra.mxu0 0.0
    %1664 = vmatprep.subr.mxu0 0.0
    %1665 = vmatpush1.msra.mxu0 0.0
    %1666 = vmatprep.subr.mxu0 0.0
    %1667 = vmatpush1.msra.mxu0 0.0
    %1668 = vmatprep.subr.mxu0 0.0
    %1669 = vmatpush1.msra.mxu0 0.0
    %1670 = vmatprep.mubr.f32.mxu0 0.0
    %1671 = vmatmul.mubr.f32.gmra.mrb[0].mxu0 %v1605
    %v1672 = vpop.f32.mrb[0].mxu0
    %v1673 = vadd.f32 %v321, %v1672
    %v1674 = vpop.f32.mrb[0].mxu0
    %1675 = vdwg.mxu0
    %1676 = vmatprep.subr.mxu0 0.0
    %1677 = vmatpush1.msra.mxu0 %v127
    %1678 = vmatprep.subr.mxu0 0.0
    %1679 = vmatpush1.msra.mxu0 %v128
    %1680 = vmatprep.subr.mxu0 0.0
    %1681 = vmatpush1.msra.mxu0 %v129
    %1682 = vmatprep.subr.mxu0 0.0
    %1683 = vmatpush1.msra.mxu0 %v130
    %1684 = vmatprep.subr.mxu0 0.0
    %1685 = vmatpush1.msra.mxu0 %v131
    %1686 = vmatprep.subr.mxu0 0.0
    %1687 = vmatpush1.msra.mxu0 %v132
    %1688 = vmatprep.subr.mxu0 0.0
    %1689 = vmatpush1.msra.mxu0 %v133
    %1690 = vmatprep.subr.mxu0 0.0
    %1691 = vmatpush1.msra.mxu0 %v134
    %1692 = vmatprep.subr.mxu0 0.0
    %1693 = vmatpush1.msra.mxu0 %v135
    %1694 = vmatprep.subr.mxu0 0.0
    %1695 = vmatpush1.msra.mxu0 %v136
    %1696 = vmatprep.subr.mxu0 0.0
    %1697 = vmatpush1.msra.mxu0 %v137
    %1698 = vmatprep.subr.mxu0 0.0
    %1699 = vmatpush1.msra.mxu0 %v138
    %1700 = vmatprep.subr.mxu0 0.0
    %1701 = vmatpush1.msra.mxu0 %v139
    %1702 = vmatprep.subr.mxu0 0.0
    %1703 = vmatpush1.msra.mxu0 %v140
    %1704 = vmatprep.subr.mxu0 0.0
    %1705 = vmatpush1.msra.mxu0 %v141
    %1706 = vmatprep.subr.mxu0 0.0
    %1707 = vmatpush1.msra.mxu0 %v142
    %1708 = vmatprep.subr.mxu0 0.0
    %1709 = vmatpush1.msra.mxu0 0.0
    %1710 = vmatprep.subr.mxu0 0.0
    %1711 = vmatpush1.msra.mxu0 0.0
    %1712 = vmatprep.subr.mxu0 0.0
    %1713 = vmatpush1.msra.mxu0 0.0
    %1714 = vmatprep.subr.mxu0 0.0
    %1715 = vmatpush1.msra.mxu0 0.0
    %1716 = vmatprep.subr.mxu0 0.0
    %1717 = vmatpush1.msra.mxu0 0.0
    %1718 = vmatprep.subr.mxu0 0.0
    %1719 = vmatpush1.msra.mxu0 0.0
    %1720 = vmatprep.subr.mxu0 0.0
    %1721 = vmatpush1.msra.mxu0 0.0
    %1722 = vmatprep.subr.mxu0 0.0
    %1723 = vmatpush1.msra.mxu0 0.0
    %1724 = vmatprep.subr.mxu0 0.0
    %1725 = vmatpush1.msra.mxu0 0.0
    %1726 = vmatprep.subr.mxu0 0.0
    %1727 = vmatpush1.msra.mxu0 0.0
    %1728 = vmatprep.subr.mxu0 0.0
    %1729 = vmatpush1.msra.mxu0 0.0
    %1730 = vmatprep.subr.mxu0 0.0
    %1731 = vmatpush1.msra.mxu0 0.0
    %1732 = vmatprep.subr.mxu0 0.0
    %1733 = vmatpush1.msra.mxu0 0.0
    %1734 = vmatprep.subr.mxu0 0.0
    %1735 = vmatpush1.msra.mxu0 0.0
    %1736 = vmatprep.subr.mxu0 0.0
    %1737 = vmatpush1.msra.mxu0 0.0
    %1738 = vmatprep.subr.mxu0 0.0
    %1739 = vmatpush1.msra.mxu0 0.0
    %1740 = vmatprep.mubr.f32.mxu0 0.0
    %1741 = vmatmul.mubr.f32.gmra.mrb[0].mxu0 %v1442
    %v1742 = vpop.f32.mrb[0].mxu0
    %v1743 = vadd.f32 0.0, %v1742
    %v1744 = vpop.f32.mrb[0].mxu0
    %1745 = vdwg.mxu0
    %v1746 = vadd.f32 %v1673, %v1743
    %v1747 = vxor.u32 %v1746, 2147483648
    %v1748 = vmul.f32 %v1747, 1.442695
    %v1749 = vpow.pop %v1748
    %v1750 = vadd.f32 %v1749, 1.0
    %v1751 = vrcp.pop %v1750
    %v1752 = vmul.f32 1.0, %v1751
    %v1753 = vmul.f32 %v90, %v1752
    %v1754 = vadd.f32 %v1753, %v91
    %1755 = vrot.lane.b32.xlu0 %v1754, 64
    %v1756 = vpop.permute.xlu0 %1755
    %v1757 = vmul.f32 %v1754, %v1756
    %v1758 = vmul.f32 %v1754, %v1440
    %1759 = vrot.lane.b32.xlu0 %v1757, 32
    %v1760 = vpop.permute.xlu0 %1759
    %v1761 = vadd.f32 %v1758, %v1760
    %v1762 = vtanh.pop %v1761
    %v1763 = vmul.f32 %v1756, %v1762
    %v1764 = vrot.slane %v92, 5
    %v1765 = vrot.slane %v93, 4
    %v1766 = vsel %vm154, %v1765, %v1764
    %v1767 = vsel %vm156, %v1766, 0
    %1769 = vmatprep.subr.mxu0 0.0
    %1770 = vmatpush1.msra.mxu0 %v94
    %1771 = vmatprep.subr.mxu0 0.0
    %1772 = vmatpush1.msra.mxu0 0.0
    %1773 = vmatprep.subr.mxu0 0.0
    %1774 = vmatpush1.msra.mxu0 0.0
    %1775 = vmatprep.subr.mxu0 0.0
    %1776 = vmatpush1.msra.mxu0 0.0
    %1777 = vmatprep.subr.mxu0 0.0
    %1778 = vmatpush1.msra.mxu0 0.0
    %1779 = vmatprep.subr.mxu0 0.0
    %1780 = vmatpush1.msra.mxu0 0.0
    %1781 = vmatprep.subr.mxu0 0.0
    %1782 = vmatpush1.msra.mxu0 0.0
    %1783 = vmatprep.subr.mxu0 0.0
    %1784 = vmatpush1.msra.mxu0 0.0
    %1785 = vmatprep.subr.mxu0 0.0
    %1786 = vmatpush1.msra.mxu0 0.0
    %1787 = vmatprep.subr.mxu0 0.0
    %1788 = vmatpush1.msra.mxu0 0.0
    %1789 = vmatprep.subr.mxu0 0.0
    %1790 = vmatpush1.msra.mxu0 0.0
    %1791 = vmatprep.subr.mxu0 0.0
    %1792 = vmatpush1.msra.mxu0 0.0
    %1793 = vmatprep.subr.mxu0 0.0
    %1794 = vmatpush1.msra.mxu0 0.0
    %1795 = vmatprep.subr.mxu0 0.0
    %1796 = vmatpush1.msra.mxu0 0.0
    %1797 = vmatprep.subr.mxu0 0.0
    %1798 = vmatpush1.msra.mxu0 0.0
    %1799 = vmatprep.subr.mxu0 0.0
    %1800 = vmatpush1.msra.mxu0 0.0
    %1801 = vmatprep.subr.mxu0 0.0
    %1802 = vmatpush1.msra.mxu0 0.0
    %1803 = vmatprep.subr.mxu0 0.0
    %1804 = vmatpush1.msra.mxu0 0.0
    %1805 = vmatprep.subr.mxu0 0.0
    %1806 = vmatpush1.msra.mxu0 0.0
    %1807 = vmatprep.subr.mxu0 0.0
    %1808 = vmatpush1.msra.mxu0 0.0
    %1809 = vmatprep.subr.mxu0 0.0
    %1810 = vmatpush1.msra.mxu0 0.0
    %1811 = vmatprep.subr.mxu0 0.0
    %1812 = vmatpush1.msra.mxu0 0.0
    %1813 = vmatprep.subr.mxu0 0.0
    %1814 = vmatpush1.msra.mxu0 0.0
    %1815 = vmatprep.subr.mxu0 0.0
    %1816 = vmatpush1.msra.mxu0 0.0
    %1817 = vmatprep.subr.mxu0 0.0
    %1818 = vmatpush1.msra.mxu0 0.0
    %1819 = vmatprep.subr.mxu0 0.0
    %1820 = vmatpush1.msra.mxu0 0.0
    %1821 = vmatprep.subr.mxu0 0.0
    %1822 = vmatpush1.msra.mxu0 0.0
    %1823 = vmatprep.subr.mxu0 0.0
    %1824 = vmatpush1.msra.mxu0 0.0
    %1825 = vmatprep.subr.mxu0 0.0
    %1826 = vmatpush1.msra.mxu0 0.0
    %1827 = vmatprep.subr.mxu0 0.0
    %1828 = vmatpush1.msra.mxu0 0.0
    %1829 = vmatprep.subr.mxu0 0.0
    %1830 = vmatpush1.msra.mxu0 0.0
    %1831 = vmatprep.subr.mxu0 0.0
    %1832 = vmatpush1.msra.mxu0 0.0
    %1833 = vmatprep.mubr.f32.mxu0 0.0
    %1834 = vmatmul.mubr.f32.gmra.mrb[0].mxu0 %v1767
    %v1835 = vpop.f32.mrb[0].mxu0
    %v1836 = vadd.f32 %v149, %v1835
    %v1837 = vpop.f32.mrb[0].mxu0
    %1838 = vdwg.mxu0
    %1839 = vmatprep.subr.mxu0 0.0
    %1840 = vmatpush1.msra.mxu0 %v111
    %1841 = vmatprep.subr.mxu0 0.0
    %1842 = vmatpush1.msra.mxu0 %v112
    %1843 = vmatprep.subr.mxu0 0.0
    %1844 = vmatpush1.msra.mxu0 %v113
    %1845 = vmatprep.subr.mxu0 0.0
    %1846 = vmatpush1.msra.mxu0 %v114
    %1847 = vmatprep.subr.mxu0 0.0
    %1848 = vmatpush1.msra.mxu0 %v115
    %1849 = vmatprep.subr.mxu0 0.0
    %1850 = vmatpush1.msra.mxu0 %v116
    %1851 = vmatprep.subr.mxu0 0.0
    %1852 = vmatpush1.msra.mxu0 %v117
    %1853 = vmatprep.subr.mxu0 0.0
    %1854 = vmatpush1.msra.mxu0 %v118
    %1855 = vmatprep.subr.mxu0 0.0
    %1856 = vmatpush1.msra.mxu0 %v119
    %1857 = vmatprep.subr.mxu0 0.0
    %1858 = vmatpush1.msra.mxu0 %v120
    %1859 = vmatprep.subr.mxu0 0.0
    %1860 = vmatpush1.msra.mxu0 %v121
    %1861 = vmatprep.subr.mxu0 0.0
    %1862 = vmatpush1.msra.mxu0 %v122
    %1863 = vmatprep.subr.mxu0 0.0
    %1864 = vmatpush1.msra.mxu0 %v123
    %1865 = vmatprep.subr.mxu0 0.0
    %1866 = vmatpush1.msra.mxu0 %v124
    %1867 = vmatprep.subr.mxu0 0.0
    %1868 = vmatpush1.msra.mxu0 %v125
    %1869 = vmatprep.subr.mxu0 0.0
    %1870 = vmatpush1.msra.mxu0 %v126
    %1871 = vmatprep.subr.mxu0 0.0
    %1872 = vmatpush1.msra.mxu0 0.0
    %1873 = vmatprep.subr.mxu0 0.0
    %1874 = vmatpush1.msra.mxu0 0.0
    %1875 = vmatprep.subr.mxu0 0.0
    %1876 = vmatpush1.msra.mxu0 0.0
    %1877 = vmatprep.subr.mxu0 0.0
    %1878 = vmatpush1.msra.mxu0 0.0
    %1879 = vmatprep.subr.mxu0 0.0
    %1880 = vmatpush1.msra.mxu0 0.0
    %1881 = vmatprep.subr.mxu0 0.0
    %1882 = vmatpush1.msra.mxu0 0.0
    %1883 = vmatprep.subr.mxu0 0.0
    %1884 = vmatpush1.msra.mxu0 0.0
    %1885 = vmatprep.subr.mxu0 0.0
    %1886 = vmatpush1.msra.mxu0 0.0
    %1887 = vmatprep.subr.mxu0 0.0
    %1888 = vmatpush1.msra.mxu0 0.0
    %1889 = vmatprep.subr.mxu0 0.0
    %1890 = vmatpush1.msra.mxu0 0.0
    %1891 = vmatprep.subr.mxu0 0.0
    %1892 = vmatpush1.msra.mxu0 0.0
    %1893 = vmatprep.subr.mxu0 0.0
    %1894 = vmatpush1.msra.mxu0 0.0
    %1895 = vmatprep.subr.mxu0 0.0
    %1896 = vmatpush1.msra.mxu0 0.0
    %1897 = vmatprep.subr.mxu0 0.0
    %1898 = vmatpush1.msra.mxu0 0.0
    %1899 = vmatprep.subr.mxu0 0.0
    %1900 = vmatpush1.msra.mxu0 0.0
    %1901 = vmatprep.subr.mxu0 0.0
    %1902 = vmatpush1.msra.mxu0 0.0
    %1903 = vmatprep.mubr.f32.mxu0 0.0
    %1904 = vmatmul.mubr.f32.gmra.mrb[0].mxu0 %v1605
    %v1905 = vpop.f32.mrb[0].mxu0
    %v1906 = vadd.f32 0.0, %v1905
    %v1907 = vpop.f32.mrb[0].mxu0
    %1908 = vdwg.mxu0
    %v1909 = vadd.f32 %v1836, %v1906
    %v1910 = vxor.u32 %v1909, 2147483648
    %v1911 = vmul.f32 %v1910, 1.442695
    %v1912 = vpow.pop %v1911
    %v1913 = vadd.f32 %v1912, 1.0
    %v1914 = vrcp.pop %v1913
    %v1915 = vmul.f32 1.0, %v1914
    %v1916 = vmul.f32 %v90, %v1915
    %v1917 = vadd.f32 %v1916, %v91
    %1918 = vrot.lane.b32.xlu0 %v1917, 64
    %v1919 = vpop.permute.xlu0 %1918
    %v1920 = vmul.f32 %v1917, %v1919
    %v1921 = vmul.f32 %v1917, %v1603
    %1922 = vrot.lane.b32.xlu0 %v1920, 32
    %v1923 = vpop.permute.xlu0 %1922
    %v1924 = vadd.f32 %v1921, %v1923
    %v1925 = vtanh.pop %v1924
    %v1926 = vmul.f32 %v1919, %v1925
    %1927 = vmatprep.subr.mxu0 0.0
    %1928 = vmatpush1.msra.mxu0 %v95
    %1929 = vmatprep.subr.mxu0 0.0
    %1930 = vmatpush1.msra.mxu0 %v96
    %1931 = vmatprep.subr.mxu0 0.0
    %1932 = vmatpush1.msra.mxu0 %v97
    %1933 = vmatprep.subr.mxu0 0.0
    %1934 = vmatpush1.msra.mxu0 %v98
    %1935 = vmatprep.subr.mxu0 0.0
    %1936 = vmatpush1.msra.mxu0 %v99
    %1937 = vmatprep.subr.mxu0 0.0
    %1938 = vmatpush1.msra.mxu0 %v100
    %1939 = vmatprep.subr.mxu0 0.0
    %1940 = vmatpush1.msra.mxu0 %v101
    %1941 = vmatprep.subr.mxu0 0.0
    %1942 = vmatpush1.msra.mxu0 %v102
    %1943 = vmatprep.subr.mxu0 0.0
    %1944 = vmatpush1.msra.mxu0 %v103
    %1945 = vmatprep.subr.mxu0 0.0
    %1946 = vmatpush1.msra.mxu0 %v104
    %1947 = vmatprep.subr.mxu0 0.0
    %1948 = vmatpush1.msra.mxu0 %v105
    %1949 = vmatprep.subr.mxu0 0.0
    %1950 = vmatpush1.msra.mxu0 %v106
    %1951 = vmatprep.subr.mxu0 0.0
    %1952 = vmatpush1.msra.mxu0 %v107
    %1953 = vmatprep.subr.mxu0 0.0
    %1954 = vmatpush1.msra.mxu0 %v108
    %1955 = vmatprep.subr.mxu0 0.0
    %1956 = vmatpush1.msra.mxu0 %v109
    %1957 = vmatprep.subr.mxu0 0.0
    %1958 = vmatpush1.msra.mxu0 %v110
    %1959 = vmatprep.subr.mxu0 0.0
    %1960 = vmatpush1.msra.mxu0 0.0
    %1961 = vmatprep.subr.mxu0 0.0
    %1962 = vmatpush1.msra.mxu0 0.0
    %1963 = vmatprep.subr.mxu0 0.0
    %1964 = vmatpush1.msra.mxu0 0.0
    %1965 = vmatprep.subr.mxu0 0.0
    %1966 = vmatpush1.msra.mxu0 0.0
    %1967 = vmatprep.subr.mxu0 0.0
    %1968 = vmatpush1.msra.mxu0 0.0
    %1969 = vmatprep.subr.mxu0 0.0
    %1970 = vmatpush1.msra.mxu0 0.0
    %1971 = vmatprep.subr.mxu0 0.0
    %1972 = vmatpush1.msra.mxu0 0.0
    %1973 = vmatprep.subr.mxu0 0.0
    %1974 = vmatpush1.msra.mxu0 0.0
    %1975 = vmatprep.subr.mxu0 0.0
    %1976 = vmatpush1.msra.mxu0 0.0
    %1977 = vmatprep.subr.mxu0 0.0
    %1978 = vmatpush1.msra.mxu0 0.0
    %1979 = vmatprep.subr.mxu0 0.0
    %1980 = vmatpush1.msra.mxu0 0.0
    %1981 = vmatprep.subr.mxu0 0.0
    %1982 = vmatpush1.msra.mxu0 0.0
    %1983 = vmatprep.subr.mxu0 0.0
    %1984 = vmatpush1.msra.mxu0 0.0
    %1985 = vmatprep.subr.mxu0 0.0
    %1986 = vmatpush1.msra.mxu0 0.0
    %1987 = vmatprep.subr.mxu0 0.0
    %1988 = vmatpush1.msra.mxu0 0.0
    %1989 = vmatprep.subr.mxu0 0.0
    %1990 = vmatpush1.msra.mxu0 0.0
    %1991 = vmatprep.mubr.f32.mxu0 0.0
    %1992 = vmatmul.mubr.f32.gmra.mrb[0].mxu0 %v1926
    %v1993 = vpop.f32.mrb[0].mxu0
    %v1994 = vadd.f32 %v321, %v1993
    %v1995 = vpop.f32.mrb[0].mxu0
    %1996 = vdwg.mxu0
    %1997 = vmatprep.subr.mxu0 0.0
    %1998 = vmatpush1.msra.mxu0 %v127
    %1999 = vmatprep.subr.mxu0 0.0
    %2000 = vmatpush1.msra.mxu0 %v128
    %2001 = vmatprep.subr.mxu0 0.0
    %2002 = vmatpush1.msra.mxu0 %v129
    %2003 = vmatprep.subr.mxu0 0.0
    %2004 = vmatpush1.msra.mxu0 %v130
    %2005 = vmatprep.subr.mxu0 0.0
    %2006 = vmatpush1.msra.mxu0 %v131
    %2007 = vmatprep.subr.mxu0 0.0
    %2008 = vmatpush1.msra.mxu0 %v132
    %2009 = vmatprep.subr.mxu0 0.0
    %2010 = vmatpush1.msra.mxu0 %v133
    %2011 = vmatprep.subr.mxu0 0.0
    %2012 = vmatpush1.msra.mxu0 %v134
    %2013 = vmatprep.subr.mxu0 0.0
    %2014 = vmatpush1.msra.mxu0 %v135
    %2015 = vmatprep.subr.mxu0 0.0
    %2016 = vmatpush1.msra.mxu0 %v136
    %2017 = vmatprep.subr.mxu0 0.0
    %2018 = vmatpush1.msra.mxu0 %v137
    %2019 = vmatprep.subr.mxu0 0.0
    %2020 = vmatpush1.msra.mxu0 %v138
    %2021 = vmatprep.subr.mxu0 0.0
    %2022 = vmatpush1.msra.mxu0 %v139
    %2023 = vmatprep.subr.mxu0 0.0
    %2024 = vmatpush1.msra.mxu0 %v140
    %2025 = vmatprep.subr.mxu0 0.0
    %2026 = vmatpush1.msra.mxu0 %v141
    %2027 = vmatprep.subr.mxu0 0.0
    %2028 = vmatpush1.msra.mxu0 %v142
    %2029 = vmatprep.subr.mxu0 0.0
    %2030 = vmatpush1.msra.mxu0 0.0
    %2031 = vmatprep.subr.mxu0 0.0
    %2032 = vmatpush1.msra.mxu0 0.0
    %2033 = vmatprep.subr.mxu0 0.0
    %2034 = vmatpush1.msra.mxu0 0.0
    %2035 = vmatprep.subr.mxu0 0.0
    %2036 = vmatpush1.msra.mxu0 0.0
    %2037 = vmatprep.subr.mxu0 0.0
    %2038 = vmatpush1.msra.mxu0 0.0
    %2039 = vmatprep.subr.mxu0 0.0
    %2040 = vmatpush1.msra.mxu0 0.0
    %2041 = vmatprep.subr.mxu0 0.0
    %2042 = vmatpush1.msra.mxu0 0.0
    %2043 = vmatprep.subr.mxu0 0.0
    %2044 = vmatpush1.msra.mxu0 0.0
    %2045 = vmatprep.subr.mxu0 0.0
    %2046 = vmatpush1.msra.mxu0 0.0
    %2047 = vmatprep.subr.mxu0 0.0
    %2048 = vmatpush1.msra.mxu0 0.0
    %2049 = vmatprep.subr.mxu0 0.0
    %2050 = vmatpush1.msra.mxu0 0.0
    %2051 = vmatprep.subr.mxu0 0.0
    %2052 = vmatpush1.msra.mxu0 0.0
    %2053 = vmatprep.subr.mxu0 0.0
    %2054 = vmatpush1.msra.mxu0 0.0
    %2055 = vmatprep.subr.mxu0 0.0
    %2056 = vmatpush1.msra.mxu0 0.0
    %2057 = vmatprep.subr.mxu0 0.0
    %2058 = vmatpush1.msra.mxu0 0.0
    %2059 = vmatprep.subr.mxu0 0.0
    %2060 = vmatpush1.msra.mxu0 0.0
    %2061 = vmatprep.mubr.f32.mxu0 0.0
    %2062 = vmatmul.mubr.f32.gmra.mrb[0].mxu0 %v1763
    %v2063 = vpop.f32.mrb[0].mxu0
    %v2064 = vadd.f32 0.0, %v2063
    %v2065 = vpop.f32.mrb[0].mxu0
    %2066 = vdwg.mxu0
    %v2067 = vadd.f32 %v1994, %v2064
    %v2068 = vxor.u32 %v2067, 2147483648
    %v2069 = vmul.f32 %v2068, 1.442695
    %v2070 = vpow.pop %v2069
    %v2071 = vadd.f32 %v2070, 1.0
    %v2072 = vrcp.pop %v2071
    %v2073 = vmul.f32 1.0, %v2072
    %v2074 = vmul.f32 %v90, %v2073
    %v2075 = vadd.f32 %v2074, %v91
    %2076 = vrot.lane.b32.xlu0 %v2075, 64
    %v2077 = vpop.permute.xlu0 %2076
    %v2078 = vmul.f32 %v2075, %v2077
    %v2079 = vmul.f32 %v2075, %v1761
    %2080 = vrot.lane.b32.xlu0 %v2078, 32
    %v2081 = vpop.permute.xlu0 %2080
    %v2082 = vadd.f32 %v2079, %v2081
    %v2083 = vtanh.pop %v2082
    %v2084 = vmul.f32 %v2077, %v2083
    %v2085 = vrot.slane %v92, 6
    %v2086 = vrot.slane %v93, 5
    %v2087 = vsel %vm154, %v2086, %v2085
    %v2088 = vsel %vm156, %v2087, 0
    %2090 = vmatprep.subr.mxu0 0.0
    %2091 = vmatpush1.msra.mxu0 %v94
    %2092 = vmatprep.subr.mxu0 0.0
    %2093 = vmatpush1.msra.mxu0 0.0
    %2094 = vmatprep.subr.mxu0 0.0
    %2095 = vmatpush1.msra.mxu0 0.0
    %2096 = vmatprep.subr.mxu0 0.0
    %2097 = vmatpush1.msra.mxu0 0.0
    %2098 = vmatprep.subr.mxu0 0.0
    %2099 = vmatpush1.msra.mxu0 0.0
    %2100 = vmatprep.subr.mxu0 0.0
    %2101 = vmatpush1.msra.mxu0 0.0
    %2102 = vmatprep.subr.mxu0 0.0
    %2103 = vmatpush1.msra.mxu0 0.0
    %2104 = vmatprep.subr.mxu0 0.0
    %2105 = vmatpush1.msra.mxu0 0.0
    %2106 = vmatprep.subr.mxu0 0.0
    %2107 = vmatpush1.msra.mxu0 0.0
    %2108 = vmatprep.subr.mxu0 0.0
    %2109 = vmatpush1.msra.mxu0 0.0
    %2110 = vmatprep.subr.mxu0 0.0
    %2111 = vmatpush1.msra.mxu0 0.0
    %2112 = vmatprep.subr.mxu0 0.0
    %2113 = vmatpush1.msra.mxu0 0.0
    %2114 = vmatprep.subr.mxu0 0.0
    %2115 = vmatpush1.msra.mxu0 0.0
    %2116 = vmatprep.subr.mxu0 0.0
    %2117 = vmatpush1.msra.mxu0 0.0
    %2118 = vmatprep.subr.mxu0 0.0
    %2119 = vmatpush1.msra.mxu0 0.0
    %2120 = vmatprep.subr.mxu0 0.0
    %2121 = vmatpush1.msra.mxu0 0.0
    %2122 = vmatprep.subr.mxu0 0.0
    %2123 = vmatpush1.msra.mxu0 0.0
    %2124 = vmatprep.subr.mxu0 0.0
    %2125 = vmatpush1.msra.mxu0 0.0
    %2126 = vmatprep.subr.mxu0 0.0
    %2127 = vmatpush1.msra.mxu0 0.0
    %2128 = vmatprep.subr.mxu0 0.0
    %2129 = vmatpush1.msra.mxu0 0.0
    %2130 = vmatprep.subr.mxu0 0.0
    %2131 = vmatpush1.msra.mxu0 0.0
    %2132 = vmatprep.subr.mxu0 0.0
    %2133 = vmatpush1.msra.mxu0 0.0
    %2134 = vmatprep.subr.mxu0 0.0
    %2135 = vmatpush1.msra.mxu0 0.0
    %2136 = vmatprep.subr.mxu0 0.0
    %2137 = vmatpush1.msra.mxu0 0.0
    %2138 = vmatprep.subr.mxu0 0.0
    %2139 = vmatpush1.msra.mxu0 0.0
    %2140 = vmatprep.subr.mxu0 0.0
    %2141 = vmatpush1.msra.mxu0 0.0
    %2142 = vmatprep.subr.mxu0 0.0
    %2143 = vmatpush1.msra.mxu0 0.0
    %2144 = vmatprep.subr.mxu0 0.0
    %2145 = vmatpush1.msra.mxu0 0.0
    %2146 = vmatprep.subr.mxu0 0.0
    %2147 = vmatpush1.msra.mxu0 0.0
    %2148 = vmatprep.subr.mxu0 0.0
    %2149 = vmatpush1.msra.mxu0 0.0
    %2150 = vmatprep.subr.mxu0 0.0
    %2151 = vmatpush1.msra.mxu0 0.0
    %2152 = vmatprep.subr.mxu0 0.0
    %2153 = vmatpush1.msra.mxu0 0.0
    %2154 = vmatprep.mubr.f32.mxu0 0.0
    %2155 = vmatmul.mubr.f32.gmra.mrb[0].mxu0 %v2088
    %v2156 = vpop.f32.mrb[0].mxu0
    %v2157 = vadd.f32 %v149, %v2156
    %v2158 = vpop.f32.mrb[0].mxu0
    %2159 = vdwg.mxu0
    %2160 = vmatprep.subr.mxu0 0.0
    %2161 = vmatpush1.msra.mxu0 %v111
    %2162 = vmatprep.subr.mxu0 0.0
    %2163 = vmatpush1.msra.mxu0 %v112
    %2164 = vmatprep.subr.mxu0 0.0
    %2165 = vmatpush1.msra.mxu0 %v113
    %2166 = vmatprep.subr.mxu0 0.0
    %2167 = vmatpush1.msra.mxu0 %v114
    %2168 = vmatprep.subr.mxu0 0.0
    %2169 = vmatpush1.msra.mxu0 %v115
    %2170 = vmatprep.subr.mxu0 0.0
    %2171 = vmatpush1.msra.mxu0 %v116
    %2172 = vmatprep.subr.mxu0 0.0
    %2173 = vmatpush1.msra.mxu0 %v117
    %2174 = vmatprep.subr.mxu0 0.0
    %2175 = vmatpush1.msra.mxu0 %v118
    %2176 = vmatprep.subr.mxu0 0.0
    %2177 = vmatpush1.msra.mxu0 %v119
    %2178 = vmatprep.subr.mxu0 0.0
    %2179 = vmatpush1.msra.mxu0 %v120
    %2180 = vmatprep.subr.mxu0 0.0
    %2181 = vmatpush1.msra.mxu0 %v121
    %2182 = vmatprep.subr.mxu0 0.0
    %2183 = vmatpush1.msra.mxu0 %v122
    %2184 = vmatprep.subr.mxu0 0.0
    %2185 = vmatpush1.msra.mxu0 %v123
    %2186 = vmatprep.subr.mxu0 0.0
    %2187 = vmatpush1.msra.mxu0 %v124
    %2188 = vmatprep.subr.mxu0 0.0
    %2189 = vmatpush1.msra.mxu0 %v125
    %2190 = vmatprep.subr.mxu0 0.0
    %2191 = vmatpush1.msra.mxu0 %v126
    %2192 = vmatprep.subr.mxu0 0.0
    %2193 = vmatpush1.msra.mxu0 0.0
    %2194 = vmatprep.subr.mxu0 0.0
    %2195 = vmatpush1.msra.mxu0 0.0
    %2196 = vmatprep.subr.mxu0 0.0
    %2197 = vmatpush1.msra.mxu0 0.0
    %2198 = vmatprep.subr.mxu0 0.0
    %2199 = vmatpush1.msra.mxu0 0.0
    %2200 = vmatprep.subr.mxu0 0.0
    %2201 = vmatpush1.msra.mxu0 0.0
    %2202 = vmatprep.subr.mxu0 0.0
    %2203 = vmatpush1.msra.mxu0 0.0
    %2204 = vmatprep.subr.mxu0 0.0
    %2205 = vmatpush1.msra.mxu0 0.0
    %2206 = vmatprep.subr.mxu0 0.0
    %2207 = vmatpush1.msra.mxu0 0.0
    %2208 = vmatprep.subr.mxu0 0.0
    %2209 = vmatpush1.msra.mxu0 0.0
    %2210 = vmatprep.subr.mxu0 0.0
    %2211 = vmatpush1.msra.mxu0 0.0
    %2212 = vmatprep.subr.mxu0 0.0
    %2213 = vmatpush1.msra.mxu0 0.0
    %2214 = vmatprep.subr.mxu0 0.0
    %2215 = vmatpush1.msra.mxu0 0.0
    %2216 = vmatprep.subr.mxu0 0.0
    %2217 = vmatpush1.msra.mxu0 0.0
    %2218 = vmatprep.subr.mxu0 0.0
    %2219 = vmatpush1.msra.mxu0 0.0
    %2220 = vmatprep.subr.mxu0 0.0
    %2221 = vmatpush1.msra.mxu0 0.0
    %2222 = vmatprep.subr.mxu0 0.0
    %2223 = vmatpush1.msra.mxu0 0.0
    %2224 = vmatprep.mubr.f32.mxu0 0.0
    %2225 = vmatmul.mubr.f32.gmra.mrb[0].mxu0 %v1926
    %v2226 = vpop.f32.mrb[0].mxu0
    %v2227 = vadd.f32 0.0, %v2226
    %v2228 = vpop.f32.mrb[0].mxu0
    %2229 = vdwg.mxu0
    %v2230 = vadd.f32 %v2157, %v2227
    %v2231 = vxor.u32 %v2230, 2147483648
    %v2232 = vmul.f32 %v2231, 1.442695
    %v2233 = vpow.pop %v2232
    %v2234 = vadd.f32 %v2233, 1.0
    %v2235 = vrcp.pop %v2234
    %v2236 = vmul.f32 1.0, %v2235
    %v2237 = vmul.f32 %v90, %v2236
    %v2238 = vadd.f32 %v2237, %v91
    %2239 = vrot.lane.b32.xlu0 %v2238, 64
    %v2240 = vpop.permute.xlu0 %2239
    %v2241 = vmul.f32 %v2238, %v2240
    %v2242 = vmul.f32 %v2238, %v1924
    %2243 = vrot.lane.b32.xlu0 %v2241, 32
    %v2244 = vpop.permute.xlu0 %2243
    %v2245 = vadd.f32 %v2242, %v2244
    %v2246 = vtanh.pop %v2245
    %v2247 = vmul.f32 %v2240, %v2246
    %2248 = vmatprep.subr.mxu0 0.0
    %2249 = vmatpush1.msra.mxu0 %v95
    %2250 = vmatprep.subr.mxu0 0.0
    %2251 = vmatpush1.msra.mxu0 %v96
    %2252 = vmatprep.subr.mxu0 0.0
    %2253 = vmatpush1.msra.mxu0 %v97
    %2254 = vmatprep.subr.mxu0 0.0
    %2255 = vmatpush1.msra.mxu0 %v98
    %2256 = vmatprep.subr.mxu0 0.0
    %2257 = vmatpush1.msra.mxu0 %v99
    %2258 = vmatprep.subr.mxu0 0.0
    %2259 = vmatpush1.msra.mxu0 %v100
    %2260 = vmatprep.subr.mxu0 0.0
    %2261 = vmatpush1.msra.mxu0 %v101
    %2262 = vmatprep.subr.mxu0 0.0
    %2263 = vmatpush1.msra.mxu0 %v102
    %2264 = vmatprep.subr.mxu0 0.0
    %2265 = vmatpush1.msra.mxu0 %v103
    %2266 = vmatprep.subr.mxu0 0.0
    %2267 = vmatpush1.msra.mxu0 %v104
    %2268 = vmatprep.subr.mxu0 0.0
    %2269 = vmatpush1.msra.mxu0 %v105
    %2270 = vmatprep.subr.mxu0 0.0
    %2271 = vmatpush1.msra.mxu0 %v106
    %2272 = vmatprep.subr.mxu0 0.0
    %2273 = vmatpush1.msra.mxu0 %v107
    %2274 = vmatprep.subr.mxu0 0.0
    %2275 = vmatpush1.msra.mxu0 %v108
    %2276 = vmatprep.subr.mxu0 0.0
    %2277 = vmatpush1.msra.mxu0 %v109
    %2278 = vmatprep.subr.mxu0 0.0
    %2279 = vmatpush1.msra.mxu0 %v110
    %2280 = vmatprep.subr.mxu0 0.0
    %2281 = vmatpush1.msra.mxu0 0.0
    %2282 = vmatprep.subr.mxu0 0.0
    %2283 = vmatpush1.msra.mxu0 0.0
    %2284 = vmatprep.subr.mxu0 0.0
    %2285 = vmatpush1.msra.mxu0 0.0
    %2286 = vmatprep.subr.mxu0 0.0
    %2287 = vmatpush1.msra.mxu0 0.0
    %2288 = vmatprep.subr.mxu0 0.0
    %2289 = vmatpush1.msra.mxu0 0.0
    %2290 = vmatprep.subr.mxu0 0.0
    %2291 = vmatpush1.msra.mxu0 0.0
    %2292 = vmatprep.subr.mxu0 0.0
    %2293 = vmatpush1.msra.mxu0 0.0
    %2294 = vmatprep.subr.mxu0 0.0
    %2295 = vmatpush1.msra.mxu0 0.0
    %2296 = vmatprep.subr.mxu0 0.0
    %2297 = vmatpush1.msra.mxu0 0.0
    %2298 = vmatprep.subr.mxu0 0.0
    %2299 = vmatpush1.msra.mxu0 0.0
    %2300 = vmatprep.subr.mxu0 0.0
    %2301 = vmatpush1.msra.mxu0 0.0
    %2302 = vmatprep.subr.mxu0 0.0
    %2303 = vmatpush1.msra.mxu0 0.0
    %2304 = vmatprep.subr.mxu0 0.0
    %2305 = vmatpush1.msra.mxu0 0.0
    %2306 = vmatprep.subr.mxu0 0.0
    %2307 = vmatpush1.msra.mxu0 0.0
    %2308 = vmatprep.subr.mxu0 0.0
    %2309 = vmatpush1.msra.mxu0 0.0
    %2310 = vmatprep.subr.mxu0 0.0
    %2311 = vmatpush1.msra.mxu0 0.0
    %2312 = vmatprep.mubr.f32.mxu0 0.0
    %2313 = vmatmul.mubr.f32.gmra.mrb[0].mxu0 %v2247
    %v2314 = vpop.f32.mrb[0].mxu0
    %v2315 = vadd.f32 %v321, %v2314
    %v2316 = vpop.f32.mrb[0].mxu0
    %2317 = vdwg.mxu0
    %2318 = vmatprep.subr.mxu0 0.0
    %2319 = vmatpush1.msra.mxu0 %v127
    %2320 = vmatprep.subr.mxu0 0.0
    %2321 = vmatpush1.msra.mxu0 %v128
    %2322 = vmatprep.subr.mxu0 0.0
    %2323 = vmatpush1.msra.mxu0 %v129
    %2324 = vmatprep.subr.mxu0 0.0
    %2325 = vmatpush1.msra.mxu0 %v130
    %2326 = vmatprep.subr.mxu0 0.0
    %2327 = vmatpush1.msra.mxu0 %v131
    %2328 = vmatprep.subr.mxu0 0.0
    %2329 = vmatpush1.msra.mxu0 %v132
    %2330 = vmatprep.subr.mxu0 0.0
    %2331 = vmatpush1.msra.mxu0 %v133
    %2332 = vmatprep.subr.mxu0 0.0
    %2333 = vmatpush1.msra.mxu0 %v134
    %2334 = vmatprep.subr.mxu0 0.0
    %2335 = vmatpush1.msra.mxu0 %v135
    %2336 = vmatprep.subr.mxu0 0.0
    %2337 = vmatpush1.msra.mxu0 %v136
    %2338 = vmatprep.subr.mxu0 0.0
    %2339 = vmatpush1.msra.mxu0 %v137
    %2340 = vmatprep.subr.mxu0 0.0
    %2341 = vmatpush1.msra.mxu0 %v138
    %2342 = vmatprep.subr.mxu0 0.0
    %2343 = vmatpush1.msra.mxu0 %v139
    %2344 = vmatprep.subr.mxu0 0.0
    %2345 = vmatpush1.msra.mxu0 %v140
    %2346 = vmatprep.subr.mxu0 0.0
    %2347 = vmatpush1.msra.mxu0 %v141
    %2348 = vmatprep.subr.mxu0 0.0
    %2349 = vmatpush1.msra.mxu0 %v142
    %2350 = vmatprep.subr.mxu0 0.0
    %2351 = vmatpush1.msra.mxu0 0.0
    %2352 = vmatprep.subr.mxu0 0.0
    %2353 = vmatpush1.msra.mxu0 0.0
    %2354 = vmatprep.subr.mxu0 0.0
    %2355 = vmatpush1.msra.mxu0 0.0
    %2356 = vmatprep.subr.mxu0 0.0
    %2357 = vmatpush1.msra.mxu0 0.0
    %2358 = vmatprep.subr.mxu0 0.0
    %2359 = vmatpush1.msra.mxu0 0.0
    %2360 = vmatprep.subr.mxu0 0.0
    %2361 = vmatpush1.msra.mxu0 0.0
    %2362 = vmatprep.subr.mxu0 0.0
    %2363 = vmatpush1.msra.mxu0 0.0
    %2364 = vmatprep.subr.mxu0 0.0
    %2365 = vmatpush1.msra.mxu0 0.0
    %2366 = vmatprep.subr.mxu0 0.0
    %2367 = vmatpush1.msra.mxu0 0.0
    %2368 = vmatprep.subr.mxu0 0.0
    %2369 = vmatpush1.msra.mxu0 0.0
    %2370 = vmatprep.subr.mxu0 0.0
    %2371 = vmatpush1.msra.mxu0 0.0
    %2372 = vmatprep.subr.mxu0 0.0
    %2373 = vmatpush1.msra.mxu0 0.0
    %2374 = vmatprep.subr.mxu0 0.0
    %2375 = vmatpush1.msra.mxu0 0.0
    %2376 = vmatprep.subr.mxu0 0.0
    %2377 = vmatpush1.msra.mxu0 0.0
    %2378 = vmatprep.subr.mxu0 0.0
    %2379 = vmatpush1.msra.mxu0 0.0
    %2380 = vmatprep.subr.mxu0 0.0
    %2381 = vmatpush1.msra.mxu0 0.0
    %2382 = vmatprep.mubr.f32.mxu0 0.0
    %2383 = vmatmul.mubr.f32.gmra.mrb[0].mxu0 %v2084
    %v2384 = vpop.f32.mrb[0].mxu0
    %v2385 = vadd.f32 0.0, %v2384
    %v2386 = vpop.f32.mrb[0].mxu0
    %2387 = vdwg.mxu0
    %v2388 = vadd.f32 %v2315, %v2385
    %v2389 = vxor.u32 %v2388, 2147483648
    %v2390 = vmul.f32 %v2389, 1.442695
    %v2391 = vpow.pop %v2390
    %v2392 = vadd.f32 %v2391, 1.0
    %v2393 = vrcp.pop %v2392
    %v2394 = vmul.f32 1.0, %v2393
    %v2395 = vmul.f32 %v90, %v2394
    %v2396 = vadd.f32 %v2395, %v91
    %2397 = vrot.lane.b32.xlu0 %v2396, 64
    %v2398 = vpop.permute.xlu0 %2397
    %v2399 = vmul.f32 %v2396, %v2398
    %v2400 = vmul.f32 %v2396, %v2082
    %2401 = vrot.lane.b32.xlu0 %v2399, 32
    %v2402 = vpop.permute.xlu0 %2401
    %v2403 = vadd.f32 %v2400, %v2402
    %v2404 = vtanh.pop %v2403
    %v2405 = vmul.f32 %v2398, %v2404
    %v2406 = vrot.slane %v92, 7
    %v2407 = vrot.slane %v93, 6
    %v2408 = vsel %vm154, %v2407, %v2406
    %v2409 = vsel %vm156, %v2408, 0
    %2411 = vmatprep.subr.mxu0 0.0
    %2412 = vmatpush1.msra.mxu0 %v94
    %2413 = vmatprep.subr.mxu0 0.0
    %2414 = vmatpush1.msra.mxu0 0.0
    %2415 = vmatprep.subr.mxu0 0.0
    %2416 = vmatpush1.msra.mxu0 0.0
    %2417 = vmatprep.subr.mxu0 0.0
    %2418 = vmatpush1.msra.mxu0 0.0
    %2419 = vmatprep.subr.mxu0 0.0
    %2420 = vmatpush1.msra.mxu0 0.0
    %2421 = vmatprep.subr.mxu0 0.0
    %2422 = vmatpush1.msra.mxu0 0.0
    %2423 = vmatprep.subr.mxu0 0.0
    %2424 = vmatpush1.msra.mxu0 0.0
    %2425 = vmatprep.subr.mxu0 0.0
    %2426 = vmatpush1.msra.mxu0 0.0
    %2427 = vmatprep.subr.mxu0 0.0
    %2428 = vmatpush1.msra.mxu0 0.0
    %2429 = vmatprep.subr.mxu0 0.0
    %2430 = vmatpush1.msra.mxu0 0.0
    %2431 = vmatprep.subr.mxu0 0.0
    %2432 = vmatpush1.msra.mxu0 0.0
    %2433 = vmatprep.subr.mxu0 0.0
    %2434 = vmatpush1.msra.mxu0 0.0
    %2435 = vmatprep.subr.mxu0 0.0
    %2436 = vmatpush1.msra.mxu0 0.0
    %2437 = vmatprep.subr.mxu0 0.0
    %2438 = vmatpush1.msra.mxu0 0.0
    %2439 = vmatprep.subr.mxu0 0.0
    %2440 = vmatpush1.msra.mxu0 0.0
    %2441 = vmatprep.subr.mxu0 0.0
    %2442 = vmatpush1.msra.mxu0 0.0
    %2443 = vmatprep.subr.mxu0 0.0
    %2444 = vmatpush1.msra.mxu0 0.0
    %2445 = vmatprep.subr.mxu0 0.0
    %2446 = vmatpush1.msra.mxu0 0.0
    %2447 = vmatprep.subr.mxu0 0.0
    %2448 = vmatpush1.msra.mxu0 0.0
    %2449 = vmatprep.subr.mxu0 0.0
    %2450 = vmatpush1.msra.mxu0 0.0
    %2451 = vmatprep.subr.mxu0 0.0
    %2452 = vmatpush1.msra.mxu0 0.0
    %2453 = vmatprep.subr.mxu0 0.0
    %2454 = vmatpush1.msra.mxu0 0.0
    %2455 = vmatprep.subr.mxu0 0.0
    %2456 = vmatpush1.msra.mxu0 0.0
    %2457 = vmatprep.subr.mxu0 0.0
    %2458 = vmatpush1.msra.mxu0 0.0
    %2459 = vmatprep.subr.mxu0 0.0
    %2460 = vmatpush1.msra.mxu0 0.0
    %2461 = vmatprep.subr.mxu0 0.0
    %2462 = vmatpush1.msra.mxu0 0.0
    %2463 = vmatprep.subr.mxu0 0.0
    %2464 = vmatpush1.msra.mxu0 0.0
    %2465 = vmatprep.subr.mxu0 0.0
    %2466 = vmatpush1.msra.mxu0 0.0
    %2467 = vmatprep.subr.mxu0 0.0
    %2468 = vmatpush1.msra.mxu0 0.0
    %2469 = vmatprep.subr.mxu0 0.0
    %2470 = vmatpush1.msra.mxu0 0.0
    %2471 = vmatprep.subr.mxu0 0.0
    %2472 = vmatpush1.msra.mxu0 0.0
    %2473 = vmatprep.subr.mxu0 0.0
    %2474 = vmatpush1.msra.mxu0 0.0
    %2475 = vmatprep.mubr.f32.mxu0 0.0
    %2476 = vmatmul.mubr.f32.gmra.mrb[0].mxu0 %v2409
    %v2477 = vpop.f32.mrb[0].mxu0
    %v2478 = vadd.f32 %v149, %v2477
    %v2479 = vpop.f32.mrb[0].mxu0
    %2480 = vdwg.mxu0
    %2481 = vmatprep.subr.mxu0 0.0
    %2482 = vmatpush1.msra.mxu0 %v111
    %2483 = vmatprep.subr.mxu0 0.0
    %2484 = vmatpush1.msra.mxu0 %v112
    %2485 = vmatprep.subr.mxu0 0.0
    %2486 = vmatpush1.msra.mxu0 %v113
    %2487 = vmatprep.subr.mxu0 0.0
    %2488 = vmatpush1.msra.mxu0 %v114
    %2489 = vmatprep.subr.mxu0 0.0
    %2490 = vmatpush1.msra.mxu0 %v115
    %2491 = vmatprep.subr.mxu0 0.0
    %2492 = vmatpush1.msra.mxu0 %v116
    %2493 = vmatprep.subr.mxu0 0.0
    %2494 = vmatpush1.msra.mxu0 %v117
    %2495 = vmatprep.subr.mxu0 0.0
    %2496 = vmatpush1.msra.mxu0 %v118
    %2497 = vmatprep.subr.mxu0 0.0
    %2498 = vmatpush1.msra.mxu0 %v119
    %2499 = vmatprep.subr.mxu0 0.0
    %2500 = vmatpush1.msra.mxu0 %v120
    %2501 = vmatprep.subr.mxu0 0.0
    %2502 = vmatpush1.msra.mxu0 %v121
    %2503 = vmatprep.subr.mxu0 0.0
    %2504 = vmatpush1.msra.mxu0 %v122
    %2505 = vmatprep.subr.mxu0 0.0
    %2506 = vmatpush1.msra.mxu0 %v123
    %2507 = vmatprep.subr.mxu0 0.0
    %2508 = vmatpush1.msra.mxu0 %v124
    %2509 = vmatprep.subr.mxu0 0.0
    %2510 = vmatpush1.msra.mxu0 %v125
    %2511 = vmatprep.subr.mxu0 0.0
    %2512 = vmatpush1.msra.mxu0 %v126
    %2513 = vmatprep.subr.mxu0 0.0
    %2514 = vmatpush1.msra.mxu0 0.0
    %2515 = vmatprep.subr.mxu0 0.0
    %2516 = vmatpush1.msra.mxu0 0.0
    %2517 = vmatprep.subr.mxu0 0.0
    %2518 = vmatpush1.msra.mxu0 0.0
    %2519 = vmatprep.subr.mxu0 0.0
    %2520 = vmatpush1.msra.mxu0 0.0
    %2521 = vmatprep.subr.mxu0 0.0
    %2522 = vmatpush1.msra.mxu0 0.0
    %2523 = vmatprep.subr.mxu0 0.0
    %2524 = vmatpush1.msra.mxu0 0.0
    %2525 = vmatprep.subr.mxu0 0.0
    %2526 = vmatpush1.msra.mxu0 0.0
    %2527 = vmatprep.subr.mxu0 0.0
    %2528 = vmatpush1.msra.mxu0 0.0
    %2529 = vmatprep.subr.mxu0 0.0
    %2530 = vmatpush1.msra.mxu0 0.0
    %2531 = vmatprep.subr.mxu0 0.0
    %2532 = vmatpush1.msra.mxu0 0.0
    %2533 = vmatprep.subr.mxu0 0.0
    %2534 = vmatpush1.msra.mxu0 0.0
    %2535 = vmatprep.subr.mxu0 0.0
    %2536 = vmatpush1.msra.mxu0 0.0
    %2537 = vmatprep.subr.mxu0 0.0
    %2538 = vmatpush1.msra.mxu0 0.0
    %2539 = vmatprep.subr.mxu0 0.0
    %2540 = vmatpush1.msra.mxu0 0.0
    %2541 = vmatprep.subr.mxu0 0.0
    %2542 = vmatpush1.msra.mxu0 0.0
    %2543 = vmatprep.subr.mxu0 0.0
    %2544 = vmatpush1.msra.mxu0 0.0
    %2545 = vmatprep.mubr.f32.mxu0 0.0
    %2546 = vmatmul.mubr.f32.gmra.mrb[0].mxu0 %v2247
    %v2547 = vpop.f32.mrb[0].mxu0
    %v2548 = vadd.f32 0.0, %v2547
    %v2549 = vpop.f32.mrb[0].mxu0
    %2550 = vdwg.mxu0
    %v2551 = vadd.f32 %v2478, %v2548
    %v2552 = vxor.u32 %v2551, 2147483648
    %v2553 = vmul.f32 %v2552, 1.442695
    %v2554 = vpow.pop %v2553
    %v2555 = vadd.f32 %v2554, 1.0
    %v2556 = vrcp.pop %v2555
    %v2557 = vmul.f32 1.0, %v2556
    %v2558 = vmul.f32 %v90, %v2557
    %v2559 = vadd.f32 %v2558, %v91
    %2560 = vrot.lane.b32.xlu0 %v2559, 64
    %v2561 = vpop.permute.xlu0 %2560
    %v2562 = vmul.f32 %v2559, %v2561
    %v2563 = vmul.f32 %v2559, %v2245
    %2564 = vrot.lane.b32.xlu0 %v2562, 32
    %v2565 = vpop.permute.xlu0 %2564
    %v2566 = vadd.f32 %v2563, %v2565
    %v2567 = vtanh.pop %v2566
    %v2568 = vmul.f32 %v2561, %v2567
    %2569 = vmatprep.subr.mxu0 0.0
    %2570 = vmatpush1.msra.mxu0 %v95
    %2571 = vmatprep.subr.mxu0 0.0
    %2572 = vmatpush1.msra.mxu0 %v96
    %2573 = vmatprep.subr.mxu0 0.0
    %2574 = vmatpush1.msra.mxu0 %v97
    %2575 = vmatprep.subr.mxu0 0.0
    %2576 = vmatpush1.msra.mxu0 %v98
    %2577 = vmatprep.subr.mxu0 0.0
    %2578 = vmatpush1.msra.mxu0 %v99
    %2579 = vmatprep.subr.mxu0 0.0
    %2580 = vmatpush1.msra.mxu0 %v100
    %2581 = vmatprep.subr.mxu0 0.0
    %2582 = vmatpush1.msra.mxu0 %v101
    %2583 = vmatprep.subr.mxu0 0.0
    %2584 = vmatpush1.msra.mxu0 %v102
    %2585 = vmatprep.subr.mxu0 0.0
    %2586 = vmatpush1.msra.mxu0 %v103
    %2587 = vmatprep.subr.mxu0 0.0
    %2588 = vmatpush1.msra.mxu0 %v104
    %2589 = vmatprep.subr.mxu0 0.0
    %2590 = vmatpush1.msra.mxu0 %v105
    %2591 = vmatprep.subr.mxu0 0.0
    %2592 = vmatpush1.msra.mxu0 %v106
    %2593 = vmatprep.subr.mxu0 0.0
    %2594 = vmatpush1.msra.mxu0 %v107
    %2595 = vmatprep.subr.mxu0 0.0
    %2596 = vmatpush1.msra.mxu0 %v108
    %2597 = vmatprep.subr.mxu0 0.0
    %2598 = vmatpush1.msra.mxu0 %v109
    %2599 = vmatprep.subr.mxu0 0.0
    %2600 = vmatpush1.msra.mxu0 %v110
    %2601 = vmatprep.subr.mxu0 0.0
    %2602 = vmatpush1.msra.mxu0 0.0
    %2603 = vmatprep.subr.mxu0 0.0
    %2604 = vmatpush1.msra.mxu0 0.0
    %2605 = vmatprep.subr.mxu0 0.0
    %2606 = vmatpush1.msra.mxu0 0.0
    %2607 = vmatprep.subr.mxu0 0.0
    %2608 = vmatpush1.msra.mxu0 0.0
    %2609 = vmatprep.subr.mxu0 0.0
    %2610 = vmatpush1.msra.mxu0 0.0
    %2611 = vmatprep.subr.mxu0 0.0
    %2612 = vmatpush1.msra.mxu0 0.0
    %2613 = vmatprep.subr.mxu0 0.0
    %2614 = vmatpush1.msra.mxu0 0.0
    %2615 = vmatprep.subr.mxu0 0.0
    %2616 = vmatpush1.msra.mxu0 0.0
    %2617 = vmatprep.subr.mxu0 0.0
    %2618 = vmatpush1.msra.mxu0 0.0
    %2619 = vmatprep.subr.mxu0 0.0
    %2620 = vmatpush1.msra.mxu0 0.0
    %2621 = vmatprep.subr.mxu0 0.0
    %2622 = vmatpush1.msra.mxu0 0.0
    %2623 = vmatprep.subr.mxu0 0.0
    %2624 = vmatpush1.msra.mxu0 0.0
    %2625 = vmatprep.subr.mxu0 0.0
    %2626 = vmatpush1.msra.mxu0 0.0
    %2627 = vmatprep.subr.mxu0 0.0
    %2628 = vmatpush1.msra.mxu0 0.0
    %2629 = vmatprep.subr.mxu0 0.0
    %2630 = vmatpush1.msra.mxu0 0.0
    %2631 = vmatprep.subr.mxu0 0.0
    %2632 = vmatpush1.msra.mxu0 0.0
    %2633 = vmatprep.mubr.f32.mxu0 0.0
    %2634 = vmatmul.mubr.f32.gmra.mrb[0].mxu0 %v2568
    %v2635 = vpop.f32.mrb[0].mxu0
    %v2636 = vadd.f32 %v321, %v2635
    %v2637 = vpop.f32.mrb[0].mxu0
    %2638 = vdwg.mxu0
    %2639 = vmatprep.subr.mxu0 0.0
    %2640 = vmatpush1.msra.mxu0 %v127
    %2641 = vmatprep.subr.mxu0 0.0
    %2642 = vmatpush1.msra.mxu0 %v128
    %2643 = vmatprep.subr.mxu0 0.0
    %2644 = vmatpush1.msra.mxu0 %v129
    %2645 = vmatprep.subr.mxu0 0.0
    %2646 = vmatpush1.msra.mxu0 %v130
    %2647 = vmatprep.subr.mxu0 0.0
    %2648 = vmatpush1.msra.mxu0 %v131
    %2649 = vmatprep.subr.mxu0 0.0
    %2650 = vmatpush1.msra.mxu0 %v132
    %2651 = vmatprep.subr.mxu0 0.0
    %2652 = vmatpush1.msra.mxu0 %v133
    %2653 = vmatprep.subr.mxu0 0.0
    %2654 = vmatpush1.msra.mxu0 %v134
    %2655 = vmatprep.subr.mxu0 0.0
    %2656 = vmatpush1.msra.mxu0 %v135
    %2657 = vmatprep.subr.mxu0 0.0
    %2658 = vmatpush1.msra.mxu0 %v136
    %2659 = vmatprep.subr.mxu0 0.0
    %2660 = vmatpush1.msra.mxu0 %v137
    %2661 = vmatprep.subr.mxu0 0.0
    %2662 = vmatpush1.msra.mxu0 %v138
    %2663 = vmatprep.subr.mxu0 0.0
    %2664 = vmatpush1.msra.mxu0 %v139
    %2665 = vmatprep.subr.mxu0 0.0
    %2666 = vmatpush1.msra.mxu0 %v140
    %2667 = vmatprep.subr.mxu0 0.0
    %2668 = vmatpush1.msra.mxu0 %v141
    %2669 = vmatprep.subr.mxu0 0.0
    %2670 = vmatpush1.msra.mxu0 %v142
    %2671 = vmatprep.subr.mxu0 0.0
    %2672 = vmatpush1.msra.mxu0 0.0
    %2673 = vmatprep.subr.mxu0 0.0
    %2674 = vmatpush1.msra.mxu0 0.0
    %2675 = vmatprep.subr.mxu0 0.0
    %2676 = vmatpush1.msra.mxu0 0.0
    %2677 = vmatprep.subr.mxu0 0.0
    %2678 = vmatpush1.msra.mxu0 0.0
    %2679 = vmatprep.subr.mxu0 0.0
    %2680 = vmatpush1.msra.mxu0 0.0
    %2681 = vmatprep.subr.mxu0 0.0
    %2682 = vmatpush1.msra.mxu0 0.0
    %2683 = vmatprep.subr.mxu0 0.0
    %2684 = vmatpush1.msra.mxu0 0.0
    %2685 = vmatprep.subr.mxu0 0.0
    %2686 = vmatpush1.msra.mxu0 0.0
    %2687 = vmatprep.subr.mxu0 0.0
    %2688 = vmatpush1.msra.mxu0 0.0
    %2689 = vmatprep.subr.mxu0 0.0
    %2690 = vmatpush1.msra.mxu0 0.0
    %2691 = vmatprep.subr.mxu0 0.0
    %2692 = vmatpush1.msra.mxu0 0.0
    %2693 = vmatprep.subr.mxu0 0.0
    %2694 = vmatpush1.msra.mxu0 0.0
    %2695 = vmatprep.subr.mxu0 0.0
    %2696 = vmatpush1.msra.mxu0 0.0
    %2697 = vmatprep.subr.mxu0 0.0
    %2698 = vmatpush1.msra.mxu0 0.0
    %2699 = vmatprep.subr.mxu0 0.0
    %2700 = vmatpush1.msra.mxu0 0.0
    %2701 = vmatprep.subr.mxu0 0.0
    %2702 = vmatpush1.msra.mxu0 0.0
    %2703 = vmatprep.mubr.f32.mxu0 0.0
    %2704 = vmatmul.mubr.f32.gmra.mrb[0].mxu0 %v2405
    %v2705 = vpop.f32.mrb[0].mxu0
    %v2706 = vadd.f32 0.0, %v2705
    %v2707 = vpop.f32.mrb[0].mxu0
    %2708 = vdwg.mxu0
    %v2709 = vadd.f32 %v2636, %v2706
    %v2710 = vxor.u32 %v2709, 2147483648
    %v2711 = vmul.f32 %v2710, 1.442695
    %v2712 = vpow.pop %v2711
    %v2713 = vadd.f32 %v2712, 1.0
    %v2714 = vrcp.pop %v2713
    %v2715 = vmul.f32 1.0, %v2714
    %v2716 = vmul.f32 %v90, %v2715
    %v2717 = vadd.f32 %v2716, %v91
    %2718 = vrot.lane.b32.xlu0 %v2717, 64
    %v2719 = vpop.permute.xlu0 %2718
    %v2720 = vmul.f32 %v2717, %v2719
    %v2721 = vmul.f32 %v2717, %v2403
    %2722 = vrot.lane.b32.xlu0 %v2720, 32
    %v2723 = vpop.permute.xlu0 %2722
    %v2724 = vadd.f32 %v2721, %v2723
    %v2725 = vtanh.pop %v2724
    %v2726 = vmul.f32 %v2719, %v2725
    %v2727 = vld [vmem:[%s7] sm:$0xff]
    %v2728 = vld [vmem:[%s7 + $0x8] sm:$0xff]
    %v2729 = vld [vmem:[%s7 + $0x10] sm:$0xff]
    %v2730 = vld [vmem:[%s7 + $0x18] sm:$0xff]
    %v2731 = vld [vmem:[%s7 + $0x20] sm:$0xff]
    %v2732 = vld [vmem:[%s7 + $0x28] sm:$0xff]
    %v2733 = vld [vmem:[%s7 + $0x30] sm:$0xff]
    %v2734 = vld [vmem:[%s7 + $0x38] sm:$0xff]
    %v2735 = vld [vmem:[%s7 + $0x40] sm:$0xff]
    %v2736 = vld [vmem:[%s7 + $0x48] sm:$0xff]
    %v2737 = vld [vmem:[%s7 + $0x50] sm:$0xff]
    %v2738 = vld [vmem:[%s7 + $0x58] sm:$0xff]
    %v2739 = vld [vmem:[%s7 + $0x60] sm:$0xff]
    %v2740 = vld [vmem:[%s7 + $0x68] sm:$0xff]
    %v2741 = vld [vmem:[%s7 + $0x70] sm:$0xff]
    %v2742 = vld [vmem:[%s7 + $0x78] sm:$0xff]
    %v2743 = vld [vmem:[#allocation2] sm:$0x1]
    %v2745 = vlaneseq
    %v2746 = vshrl.u32 %v2745, 7
    %v2747 = vsub.s32 0, %v2746
    %v2748 = vrot.slane %v2743, %v2747
    %2750 = vmatprep.subr.mxu0 0.0
    %2751 = vmatpush1.msra.mxu0 %v2727
    %2752 = vmatprep.subr.mxu0 0.0
    %2753 = vmatpush1.msra.mxu0 %v2728
    %2754 = vmatprep.subr.mxu0 0.0
    %2755 = vmatpush1.msra.mxu0 %v2729
    %2756 = vmatprep.subr.mxu0 0.0
    %2757 = vmatpush1.msra.mxu0 %v2730
    %2758 = vmatprep.subr.mxu0 0.0
    %2759 = vmatpush1.msra.mxu0 %v2731
    %2760 = vmatprep.subr.mxu0 0.0
    %2761 = vmatpush1.msra.mxu0 %v2732
    %2762 = vmatprep.subr.mxu0 0.0
    %2763 = vmatpush1.msra.mxu0 %v2733
    %2764 = vmatprep.subr.mxu0 0.0
    %2765 = vmatpush1.msra.mxu0 %v2734
    %2766 = vmatprep.subr.mxu0 0.0
    %2767 = vmatpush1.msra.mxu0 %v2735
    %2768 = vmatprep.subr.mxu0 0.0
    %2769 = vmatpush1.msra.mxu0 %v2736
    %2770 = vmatprep.subr.mxu0 0.0
    %2771 = vmatpush1.msra.mxu0 %v2737
    %2772 = vmatprep.subr.mxu0 0.0
    %2773 = vmatpush1.msra.mxu0 %v2738
    %2774 = vmatprep.subr.mxu0 0.0
    %2775 = vmatpush1.msra.mxu0 %v2739
    %2776 = vmatprep.subr.mxu0 0.0
    %2777 = vmatpush1.msra.mxu0 %v2740
    %2778 = vmatprep.subr.mxu0 0.0
    %2779 = vmatpush1.msra.mxu0 %v2741
    %2780 = vmatprep.subr.mxu0 0.0
    %2781 = vmatpush1.msra.mxu0 %v2742
    %2782 = vmatprep.subr.mxu0 0.0
    %2783 = vmatpush1.msra.mxu0 0.0
    %2784 = vmatprep.subr.mxu0 0.0
    %2785 = vmatpush1.msra.mxu0 0.0
    %2786 = vmatprep.subr.mxu0 0.0
    %2787 = vmatpush1.msra.mxu0 0.0
    %2788 = vmatprep.subr.mxu0 0.0
    %2789 = vmatpush1.msra.mxu0 0.0
    %2790 = vmatprep.subr.mxu0 0.0
    %2791 = vmatpush1.msra.mxu0 0.0
    %2792 = vmatprep.subr.mxu0 0.0
    %2793 = vmatpush1.msra.mxu0 0.0
    %2794 = vmatprep.subr.mxu0 0.0
    %2795 = vmatpush1.msra.mxu0 0.0
    %2796 = vmatprep.subr.mxu0 0.0
    %2797 = vmatpush1.msra.mxu0 0.0
    %2798 = vmatprep.subr.mxu0 0.0
    %2799 = vmatpush1.msra.mxu0 0.0
    %2800 = vmatprep.subr.mxu0 0.0
    %2801 = vmatpush1.msra.mxu0 0.0
    %2802 = vmatprep.subr.mxu0 0.0
    %2803 = vmatpush1.msra.mxu0 0.0
    %2804 = vmatprep.subr.mxu0 0.0
    %2805 = vmatpush1.msra.mxu0 0.0
    %2806 = vmatprep.subr.mxu0 0.0
    %2807 = vmatpush1.msra.mxu0 0.0
    %2808 = vmatprep.subr.mxu0 0.0
    %2809 = vmatpush1.msra.mxu0 0.0
    %2810 = vmatprep.subr.mxu0 0.0
    %2811 = vmatpush1.msra.mxu0 0.0
    %2812 = vmatprep.subr.mxu0 0.0
    %2813 = vmatpush1.msra.mxu0 0.0
    %2814 = vmatprep.mubr.f32.mxu0 0.0
    %2815 = vmatmul.mubr.f32.gmra.mrb[0].mxu0 %v2726
    %v2816 = vpop.f32.mrb[0].mxu0
    %v2817 = vadd.f32 %v2748, %v2816
    %v2818 = vpop.f32.mrb[0].mxu0
    %2819 = vdwg.mxu0
    %vm2820 = vcmask 1024
    %2821 = vst.msk [vmem:[%s9] sm:$0x3] %vm2820, %v2817
    // Predicated region
    $region54: #{lstm_model_forward.1} parent=1 // pred_check
      _
    $region55: #{lstm_model_forward.1} parent=1 // pred_check_branch
      %2823 = sbr.rel (0) target = $region57
    $region56: #{lstm_model_forward.1} parent=1 // pred_region
      _
    $region57: #{lstm_model_forward.1} parent=1 // pred_fallthru
      _
    // Predicated region
    $region58: #{lstm_model_forward.1} parent=1 // pred_check
      _
    $region59: #{lstm_model_forward.1} parent=1 // pred_check_branch
      %2825 = sbr.rel (0) target = $region61
    $region60: #{lstm_model_forward.1} parent=1 // pred_region
      _
    $region61: #{lstm_model_forward.1} parent=1 // pred_fallthru
      _
    %2826 = vsyncpa [#allocation4], 1
    %2827 = vsyncpa [#allocation6], 1
    %2828 = vsyncpa [#allocation9], 1

</llo_original>
